<compile_context>
chip_gen: v5e
topology: v5e:2x2
jax: 0.10.0
libtpu: 0.0.40
codegen_flags: <defaults>
</compile_context>

<pallas_src>
import functools

import jax
import jax.numpy as jnp
from jax.experimental import pallas as pl
from jax.experimental.pallas import tpu as pltpu


# --------------------- fused (2-layer LSTM + FC) kernel -----------------------
def fused_lstm_fc_kernel(x_ref, wih0_ref, whh0_ref, b0_ref,
                         w1_ref, b1_ref, wfc_ref, bfc_ref,
                         out_ref,
                         xh_scr, c0_scr, c1_scr, g0_scr,
                         *, hidden_dim, batch, chunk_len):
    """One grid step = one time chunk of `chunk_len` steps.

    x_ref    : (chunk*B, E) bf16   time-major embeddings for this chunk
    wih0_ref : (E, 4H)      bf16   layer0 input->gates  (transposed)
    whh0_ref : (H, 4H)      bf16   layer0 hidden->gates (transposed)
    b0_ref   : (1, 4H)      f32    layer0 bias_ih + bias_hh
    w1_ref   : (2H, 4H)     bf16   layer1 [W_ih1; W_hh1] stacked (K=2H fused)
    b1_ref   : (1, 4H)      f32    layer1 bias_ih + bias_hh
    wfc_ref  : (H, C)       bf16   FC weight (transposed)
    bfc_ref  : (1, C)       f32    FC bias
    out_ref  : (B, C)       f32    logits (written at the last chunk)
    xh_scr   : (B, 2H)      bf16   persistent [h0 ; h1] state (matmul operand)
    c0_scr   : (B, H)       f32    persistent layer0 cell state
    c1_scr   : (B, H)       f32    persistent layer1 cell state
    g0_scr   : (chunk*B,4H) f32    per-chunk layer0 pre-gates
    """
    H, B, TC = hidden_dim, batch, chunk_len

    # ---- init persistent recurrent state at the first time chunk ------------
    @pl.when(pl.program_id(0) == 0)
    def _():
        xh_scr[...] = jnp.zeros_like(xh_scr)
        c0_scr[...] = jnp.zeros_like(c0_scr)
        c1_scr[...] = jnp.zeros_like(c1_scr)

    # ---- hoisted layer-0 input projection for this chunk (bf16 MXU, f32 acc)
    g0_scr[...] = (jnp.dot(x_ref[...], wih0_ref[...],
                           preferred_element_type=jnp.float32)
                   + b0_ref[...])

    # Loop-invariant weight loads hoisted out of the recurrence.
    w_hh0 = whh0_ref[...]          # (H, 4H)  bf16
    w1 = w1_ref[...]               # (2H, 4H) bf16
    b1 = b1_ref[...]               # (1, 4H)  f32

    def gates_to_hc(gates, c_prev):
        # PyTorch gate order (i, f, g, o). Elementwise/transcendentals in f32.
        i_g = jax.nn.sigmoid(gates[:, 0 * H:1 * H])
        f_g = jax.nn.sigmoid(gates[:, 1 * H:2 * H])
        g_g = jnp.tanh(gates[:, 2 * H:3 * H])
        o_g = jax.nn.sigmoid(gates[:, 3 * H:4 * H])
        c_new = f_g * c_prev + i_g * g_g
        h_new = o_g * jnp.tanh(c_new)
        return h_new, c_new

    def step(t, carry):
        # ---- layer 0: only the recurrent matmul is on the serial path -------
        off = pl.multiple_of(t * B, B)              # sublane-aligned slice
        gates0 = (g0_scr[pl.ds(off, B), :]
                  + jnp.dot(xh_scr[:, 0:H], w_hh0,
                            preferred_element_type=jnp.float32))
        h0_new, c0_new = gates_to_hc(gates0, c0_scr[...])
        c0_scr[...] = c0_new
        xh_scr[:, 0:H] = h0_new.astype(xh_scr.dtype)   # in place, no concat
        # ---- layer 1: single fused K=2H matmul on [h0_t ; h1_{t-1}] ---------
        gates1 = (jnp.dot(xh_scr[...], w1,
                          preferred_element_type=jnp.float32) + b1)
        h1_new, c1_new = gates_to_hc(gates1, c1_scr[...])
        c1_scr[...] = c1_new
        xh_scr[:, H:2 * H] = h1_new.astype(xh_scr.dtype)
        return carry

    # Partial unroll: enough cross-step visibility for the scheduler to overlap
    # layer-0(t+1)'s MXU push with layer-1(t)'s EUP/VPU gate math.
    # TODO(synk): explicitly carry gates0_{t+1} to pipeline the layers further.
    jax.lax.fori_loop(0, TC, step, 0, unroll=min(4, TC))

    # ---- FC head folded in (dropout = identity in eval mode) ----------------
    @pl.when(pl.program_id(0) == pl.num_programs(0) - 1)
    def _():
        out_ref[...] = (jnp.dot(xh_scr[:, H:2 * H], wfc_ref[...],
                                preferred_element_type=jnp.float32)
                        + bfc_ref[...])


# ----------------------- VMEM budget & chunk selection ------------------------
def _vmem_budget_bytes():
    cap = 64 * 1024 * 1024                       # conservative fallback (v7x)
    try:
        info = pltpu.get_tpu_info()
        cap = int(getattr(info, "vmem_capacity_bytes", cap))
    except Exception:
        pass
    return (cap * 3) // 4                        # leave headroom for the compiler


def _choose_time_chunk(T, B, E, H, C, budget_bytes, max_time_chunk=None):
    bf16, f32 = 2, 4
    weights = ((E * 4 * H + H * 4 * H + 2 * H * 4 * H + H * C) * bf16
               + (2 * 4 * H + C) * f32)
    states = B * 2 * H * bf16 + 2 * B * H * f32
    # per-time-step cost: double-buffered bf16 x block + f32 pre-gate scratch
    per_t = 2 * B * E * bf16 + B * 4 * H * f32
    avail = max(budget_bytes - weights - states, per_t)
    cand = max(1, min(T, avail // per_t))
    if max_time_chunk is not None:
        cand = min(cand, max_time_chunk)
    for c in range(int(cand), 0, -1):            # largest divisor of T <= cand
        if T % c == 0:
            return c
    return 1


# ------------------------------ Model forward --------------------------------
def lstm_model_forward(tokens, params, hidden_dim, *, max_time_chunk=None):
    """tokens: int32 [B, T] -> logits [B, num_classes]."""
    # Embedding lookup + time-major layout: glue in plain JAX for now.
    emb = jnp.take(params["embedding"], tokens, axis=0)        # (B, T, E)
    x = jnp.transpose(emb, (1, 0, 2))                          # (T, B, E)
    T, B, E = x.shape
    H = hidden_dim
    C = params["w_fc"].shape[1]

    # bf16 matmul operands (f32 accumulation + f32 gate math inside the kernel)
    x_flat = x.reshape(T * B, E).astype(jnp.bfloat16)
    wih0 = params["w_ih_0"].astype(jnp.bfloat16)
    whh0 = params["w_hh_0"].astype(jnp.bfloat16)
    w1 = jnp.concatenate([params["w_ih_1"], params["w_hh_1"]],
                         axis=0).astype(jnp.bfloat16)          # (2H, 4H)
    wfc = params["w_fc"].astype(jnp.bfloat16)
    b0 = params["b_0"].astype(jnp.float32)
    b1 = params["b_1"].astype(jnp.float32)
    bfc = params["b_fc"].reshape(1, C).astype(jnp.float32)

    vmem_budget = _vmem_budget_bytes()
    t_chunk = _choose_time_chunk(T, B, E, H, C, (vmem_budget * 2) // 3,
                                 max_time_chunk)
    n_chunks = T // t_chunk

    kernel = functools.partial(fused_lstm_fc_kernel,
                               hidden_dim=H, batch=B, chunk_len=t_chunk)

    grid_spec = pltpu.PrefetchScalarGridSpec(
        num_scalar_prefetch=0,
        grid=(n_chunks,),
        in_specs=[
            pl.BlockSpec((t_chunk * B, E), lambda t: (t, 0)),   # x streams in
            pl.BlockSpec((E, 4 * H), lambda t: (0, 0)),         # weights stay
            pl.BlockSpec((H, 4 * H), lambda t: (0, 0)),         #   resident
            pl.BlockSpec((1, 4 * H), lambda t: (0, 0)),
            pl.BlockSpec((2 * H, 4 * H), lambda t: (0, 0)),
            pl.BlockSpec((1, 4 * H), lambda t: (0, 0)),
            pl.BlockSpec((H, C), lambda t: (0, 0)),
            pl.BlockSpec((1, C), lambda t: (0, 0)),
        ],
        out_specs=pl.BlockSpec((B, C), lambda t: (0, 0)),
        scratch_shapes=[
            pltpu.VMEM((B, 2 * H), jnp.bfloat16),                # [h0 ; h1]
            pltpu.VMEM((B, H), jnp.float32),                     # c0
            pltpu.VMEM((B, H), jnp.float32),                     # c1
            pltpu.VMEM((t_chunk * B, 4 * H), jnp.float32),       # pre-gates
        ],
    )

    return pl.pallas_call(
        kernel,
        out_shape=jax.ShapeDtypeStruct((B, C), jnp.float32),
        grid_spec=grid_spec,
        compiler_params=pltpu.CompilerParams(
            dimension_semantics=("arbitrary",),
            vmem_limit_bytes=int(vmem_budget),
        ),
    )(x_flat, wih0, whh0, b0, w1, b1, wfc, bfc)


# ------------------------- Pure-JAX reference (check) -------------------------
def lstm_layer_ref(x_tbe, w_ih_t, w_hh_t, bias, H):
    B = x_tbe.shape[1]

    def step(carry, x_t):
        h, c = carry
        gates = x_t @ w_ih_t + h @ w_hh_t + bias[0]
        i = jax.nn.sigmoid(gates[:, 0 * H:1 * H])
        f = jax.nn.sigmoid(gates[:, 1 * H:2 * H])
        g = jnp.tanh(gates[:, 2 * H:3 * H])
        o = jax.nn.sigmoid(gates[:, 3 * H:4 * H])
        c = f * c + i * g
        h = o * jnp.tanh(c)
        return (h, c), h

    init = (jnp.zeros((B, H), jnp.float32), jnp.zeros((B, H), jnp.float32))
    _, hs = jax.lax.scan(step, init, x_tbe)
    return hs


def reference_forward(tokens, params, H):
    emb = jnp.take(params["embedding"], tokens, axis=0)
    x = jnp.transpose(emb, (1, 0, 2)).astype(jnp.float32)
    h0 = lstm_layer_ref(x, params["w_ih_0"], params["w_hh_0"], params["b_0"], H)
    h1 = lstm_layer_ref(h0, params["w_ih_1"], params["w_hh_1"], params["b_1"], H)
    return h1[-1] @ params["w_fc"] + params["b_fc"]


# ----------------------------------- Main ------------------------------------
if __name__ == "__main__":
    # Small config consistent with the module (scaled down for a quick run).
    VOCAB = 1000
    E = 128          # embedding_dim
    H = 128          # hidden_dim
    C = 5            # num_classes
    B = 8            # batch
    T = 8            # seq len

    key = jax.random.PRNGKey(0)
    ks = jax.random.split(key, 12)
    scale = 0.05
    params = {
        "embedding": scale * jax.random.normal(ks[0], (VOCAB, E), jnp.float32),
        # Layer 0: input E -> hidden H. Weights stored transposed: (in, 4H).
        "w_ih_0": scale * jax.random.normal(ks[1], (E, 4 * H), jnp.float32),
        "w_hh_0": scale * jax.random.normal(ks[2], (H, 4 * H), jnp.float32),
        "b_0": (scale * jax.random.normal(ks[3], (4 * H,), jnp.float32)
                ).reshape(1, 4 * H),   # bias_ih + bias_hh combined
        # Layer 1: input H -> hidden H.
        "w_ih_1": scale * jax.random.normal(ks[4], (H, 4 * H), jnp.float32),
        "w_hh_1": scale * jax.random.normal(ks[5], (H, 4 * H), jnp.float32),
        "b_1": (scale * jax.random.normal(ks[6], (4 * H,), jnp.float32)
                ).reshape(1, 4 * H),
        # FC: (H, C) + (C,)
        "w_fc": scale * jax.random.normal(ks[7], (H, C), jnp.float32),
        "b_fc": scale * jax.random.normal(ks[8], (C,), jnp.float32),
    }

    tokens = jax.random.randint(ks[9], (B, T), 0, VOCAB, dtype=jnp.int32)

    # max_time_chunk=4 forces a multi-chunk grid even at this toy size so the
    # persistent-state / chunked path is exercised.
    logits = lstm_model_forward(tokens, params, H, max_time_chunk=4)
    logits = jax.block_until_ready(logits)
    assert logits.shape == (B, C), logits.shape

    ref = jax.block_until_ready(reference_forward(tokens, params, H))
    # bf16 matmul operands (f32 accumulation / gate math) -> loosened tolerance.
    assert jnp.allclose(logits, ref, atol=1e-2, rtol=1e-2), (
        "mismatch vs reference")

    print("KERNEL_OK")
</pallas_src>

<mosaic_0001>
module attributes {stable_mosaic.version = 11 : i64} {
  func.func @fused_lstm_fc_kernel(%arg0: i32, %arg1: memref<32x128xbf16, #tpu.memory_space<vmem>>, %arg2: memref<128x512xbf16, #tpu.memory_space<vmem>>, %arg3: memref<128x512xbf16, #tpu.memory_space<vmem>>, %arg4: memref<1x512xf32, #tpu.memory_space<vmem>>, %arg5: memref<256x512xbf16, #tpu.memory_space<vmem>>, %arg6: memref<1x512xf32, #tpu.memory_space<vmem>>, %arg7: memref<128x5xbf16, #tpu.memory_space<vmem>>, %arg8: memref<1x5xf32, #tpu.memory_space<vmem>>, %arg9: memref<8x5xf32, #tpu.memory_space<vmem>>, %arg10: memref<8x256xbf16, #tpu.memory_space<vmem>>, %arg11: memref<8x128xf32, #tpu.memory_space<vmem>>, %arg12: memref<8x128xf32, #tpu.memory_space<vmem>>, %arg13: memref<32x512xf32, #tpu.memory_space<vmem>>) attributes {dimension_semantics = [#tpu.dimension_semantics<arbitrary>], iteration_bounds = array<i64: 2>, scalar_prefetch = 0 : i64, scratch_operands = 4 : i64, tpu.core_type = #tpu.core_type<tc>, window_params = [{transform_indices = @transform_0, window_bounds = array<i64: 32, 128>}, {pipeline_mode = #tpu.pipeline_mode<synchronous>, transform_indices = @transform_1, window_bounds = array<i64: 128, 512>}, {pipeline_mode = #tpu.pipeline_mode<synchronous>, transform_indices = @transform_2, window_bounds = array<i64: 128, 512>}, {pipeline_mode = #tpu.pipeline_mode<synchronous>, transform_indices = @transform_3, window_bounds = array<i64: 1, 512>}, {pipeline_mode = #tpu.pipeline_mode<synchronous>, transform_indices = @transform_4, window_bounds = array<i64: 256, 512>}, {pipeline_mode = #tpu.pipeline_mode<synchronous>, transform_indices = @transform_5, window_bounds = array<i64: 1, 512>}, {pipeline_mode = #tpu.pipeline_mode<synchronous>, transform_indices = @transform_6, window_bounds = array<i64: 128, 5>}, {pipeline_mode = #tpu.pipeline_mode<synchronous>, transform_indices = @transform_7, window_bounds = array<i64: 1, 5>}, {pipeline_mode = #tpu.pipeline_mode<synchronous>, transform_indices = @transform_8, window_bounds = array<i64: 8, 5>}]} {
    %c0_i32 = arith.constant 0 : i32
    %0 = arith.cmpi eq, %arg0, %c0_i32 : i32
    %1 = arith.extui %0 : i1 to i32
    %c0_i32_0 = arith.constant 0 : i32
    %2 = arith.cmpi ne, %1, %c0_i32_0 : i32
    scf.if %2 {
      %cst_119 = arith.constant 0.000000e+00 : bf16
      %292 = vector.broadcast %cst_119 : bf16 to vector<8x256xbf16>
      %c0_120 = arith.constant 0 : index
      %c0_121 = arith.constant 0 : index
      %293 = vector.load %arg10[%c0_120, %c0_121] : memref<8x256xbf16, #tpu.memory_space<vmem>>, vector<8x256xbf16>
      tpu.vector_store %arg10[%c0_120, %c0_121], %292 {strides = array<i32>} : memref<8x256xbf16, #tpu.memory_space<vmem>>, vector<8x256xbf16>,
      %cst_122 = arith.constant 0.000000e+00 : f32
      %294 = vector.broadcast %cst_122 : f32 to vector<8x128xf32>
      %c0_123 = arith.constant 0 : index
      %c0_124 = arith.constant 0 : index
      %295 = vector.load %arg11[%c0_123, %c0_124] : memref<8x128xf32, #tpu.memory_space<vmem>>, vector<8x128xf32>
      tpu.vector_store %arg11[%c0_123, %c0_124], %294 {strides = array<i32>} : memref<8x128xf32, #tpu.memory_space<vmem>>, vector<8x128xf32>,
      %cst_125 = arith.constant 0.000000e+00 : f32
      %296 = vector.broadcast %cst_125 : f32 to vector<8x128xf32>
      %c0_126 = arith.constant 0 : index
      %c0_127 = arith.constant 0 : index
      %297 = vector.load %arg12[%c0_126, %c0_127] : memref<8x128xf32, #tpu.memory_space<vmem>>, vector<8x128xf32>
      tpu.vector_store %arg12[%c0_126, %c0_127], %296 {strides = array<i32>} : memref<8x128xf32, #tpu.memory_space<vmem>>, vector<8x128xf32>,
    } else {
    }
    %c0 = arith.constant 0 : index
    %c0_1 = arith.constant 0 : index
    %3 = vector.load %arg1[%c0, %c0_1] : memref<32x128xbf16, #tpu.memory_space<vmem>>, vector<32x128xbf16>
    %c0_2 = arith.constant 0 : index
    %c0_3 = arith.constant 0 : index
    %4 = vector.load %arg2[%c0_2, %c0_3] : memref<128x512xbf16, #tpu.memory_space<vmem>>, vector<128x512xbf16>
    %cst = arith.constant dense<0.000000e+00> : vector<32x512xf32>
    %5 = tpu.matmul %3, %4, %cst {dimension_numbers = #tpu.dot_dimension_numbers<[1], [0], [0], [1], [0, 0, 1, 1], [], []>} : vector<32x128xbf16>, vector<128x512xbf16>, vector<32x512xf32> -> vector<32x512xf32>
    %c0_4 = arith.constant 0 : index
    %c0_5 = arith.constant 0 : index
    %6 = vector.load %arg4[%c0_4, %c0_5] : memref<1x512xf32, #tpu.memory_space<vmem>>, vector<1x512xf32>
    %7 = vector.broadcast %6 : vector<1x512xf32> to vector<32x512xf32>
    %8 = arith.addf %5, %7 : vector<32x512xf32>
    %c0_6 = arith.constant 0 : index
    %c0_7 = arith.constant 0 : index
    %9 = vector.load %arg13[%c0_6, %c0_7] : memref<32x512xf32, #tpu.memory_space<vmem>>, vector<32x512xf32>
    tpu.vector_store %arg13[%c0_6, %c0_7], %8 {strides = array<i32>} : memref<32x512xf32, #tpu.memory_space<vmem>>, vector<32x512xf32>,
    %c0_8 = arith.constant 0 : index
    %c0_9 = arith.constant 0 : index
    %10 = vector.load %arg3[%c0_8, %c0_9] : memref<128x512xbf16, #tpu.memory_space<vmem>>, vector<128x512xbf16>
    %c0_10 = arith.constant 0 : index
    %c0_11 = arith.constant 0 : index
    %11 = vector.load %arg5[%c0_10, %c0_11] : memref<256x512xbf16, #tpu.memory_space<vmem>>, vector<256x512xbf16>
    %c0_12 = arith.constant 0 : index
    %c0_13 = arith.constant 0 : index
    %12 = vector.load %arg6[%c0_12, %c0_13] : memref<1x512xf32, #tpu.memory_space<vmem>>, vector<1x512xf32>
    %c0_i32_14 = arith.constant 0 : i32
    %c8_i32 = arith.constant 8 : i32
    %13 = arith.muli %c0_i32_14, %c8_i32 : i32
    %14 = tpu.assume_multiple %13, 8 : i32
    %15 = arith.index_cast %14 : i32 to index
    %c0_15 = arith.constant 0 : index
    %16 = vector.load %arg13[%15, %c0_15] : memref<32x512xf32, #tpu.memory_space<vmem>>, vector<8x512xf32>
    %c0_16 = arith.constant 0 : index
    %c0_17 = arith.constant 0 : index
    %17 = vector.load %arg10[%c0_16, %c0_17] : memref<8x256xbf16, #tpu.memory_space<vmem>>, vector<8x128xbf16>
    %cst_18 = arith.constant dense<0.000000e+00> : vector<8x512xf32>
    %18 = tpu.matmul %17, %10, %cst_18 {dimension_numbers = #tpu.dot_dimension_numbers<[1], [0], [0], [1], [0, 0, 1, 1], [], []>} : vector<8x128xbf16>, vector<128x512xbf16>, vector<8x512xf32> -> vector<8x512xf32>
    %19 = arith.addf %16, %18 : vector<8x512xf32>
    %c0_19 = arith.constant 0 : index
    %c0_20 = arith.constant 0 : index
    %20 = vector.load %arg11[%c0_19, %c0_20] : memref<8x128xf32, #tpu.memory_space<vmem>>, vector<8x128xf32>
    %21 = vector.extract_strided_slice %19 {offsets = [0, 0], sizes = [8, 128], strides = [1, 1]} : vector<8x512xf32> to vector<8x128xf32>
    %22 = arith.negf %21 : vector<8x128xf32>
    %23 = math.exp %22 : vector<8x128xf32>
    %cst_21 = arith.constant 1.000000e+00 : f32
    %24 = vector.broadcast %cst_21 : f32 to vector<8x128xf32>
    %25 = arith.addf %24, %23 : vector<8x128xf32>
    %26 = arith.divf %24, %25 : vector<8x128xf32>
    %27 = vector.extract_strided_slice %19 {offsets = [0, 128], sizes = [8, 128], strides = [1, 1]} : vector<8x512xf32> to vector<8x128xf32>
    %28 = arith.negf %27 : vector<8x128xf32>
    %29 = math.exp %28 : vector<8x128xf32>
    %cst_22 = arith.constant 1.000000e+00 : f32
    %30 = vector.broadcast %cst_22 : f32 to vector<8x128xf32>
    %31 = arith.addf %30, %29 : vector<8x128xf32>
    %32 = arith.divf %30, %31 : vector<8x128xf32>
    %33 = vector.extract_strided_slice %19 {offsets = [0, 256], sizes = [8, 128], strides = [1, 1]} : vector<8x512xf32> to vector<8x128xf32>
    %34 = math.tanh %33 : vector<8x128xf32>
    %35 = vector.extract_strided_slice %19 {offsets = [0, 384], sizes = [8, 128], strides = [1, 1]} : vector<8x512xf32> to vector<8x128xf32>
    %36 = arith.negf %35 : vector<8x128xf32>
    %37 = math.exp %36 : vector<8x128xf32>
    %cst_23 = arith.constant 1.000000e+00 : f32
    %38 = vector.broadcast %cst_23 : f32 to vector<8x128xf32>
    %39 = arith.addf %38, %37 : vector<8x128xf32>
    %40 = arith.divf %38, %39 : vector<8x128xf32>
    %41 = arith.mulf %32, %20 : vector<8x128xf32>
    %42 = arith.mulf %26, %34 : vector<8x128xf32>
    %43 = arith.addf %41, %42 : vector<8x128xf32>
    %44 = math.tanh %43 : vector<8x128xf32>
    %45 = arith.mulf %40, %44 : vector<8x128xf32>
    %c0_24 = arith.constant 0 : index
    %c0_25 = arith.constant 0 : index
    %46 = vector.load %arg11[%c0_24, %c0_25] : memref<8x128xf32, #tpu.memory_space<vmem>>, vector<8x128xf32>
    tpu.vector_store %arg11[%c0_24, %c0_25], %43 {strides = array<i32>} : memref<8x128xf32, #tpu.memory_space<vmem>>, vector<8x128xf32>,
    %47 = arith.truncf %45 : vector<8x128xf32> to vector<8x128xbf16>
    %c0_26 = arith.constant 0 : index
    %c0_27 = arith.constant 0 : index
    %48 = vector.load %arg10[%c0_26, %c0_27] : memref<8x256xbf16, #tpu.memory_space<vmem>>, vector<8x128xbf16>
    tpu.vector_store %arg10[%c0_26, %c0_27], %47 {strides = array<i32>} : memref<8x256xbf16, #tpu.memory_space<vmem>>, vector<8x128xbf16>,
    %c0_28 = arith.constant 0 : index
    %c0_29 = arith.constant 0 : index
    %49 = vector.load %arg10[%c0_28, %c0_29] : memref<8x256xbf16, #tpu.memory_space<vmem>>, vector<8x256xbf16>
    %cst_30 = arith.constant dense<0.000000e+00> : vector<8x512xf32>
    %50 = tpu.matmul %49, %11, %cst_30 {dimension_numbers = #tpu.dot_dimension_numbers<[1], [0], [0], [1], [0, 0, 1, 1], [], []>} : vector<8x256xbf16>, vector<256x512xbf16>, vector<8x512xf32> -> vector<8x512xf32>
    %51 = vector.broadcast %12 : vector<1x512xf32> to vector<8x512xf32>
    %52 = arith.addf %50, %51 : vector<8x512xf32>
    %c0_31 = arith.constant 0 : index
    %c0_32 = arith.constant 0 : index
    %53 = vector.load %arg12[%c0_31, %c0_32] : memref<8x128xf32, #tpu.memory_space<vmem>>, vector<8x128xf32>
    %54 = vector.extract_strided_slice %52 {offsets = [0, 0], sizes = [8, 128], strides = [1, 1]} : vector<8x512xf32> to vector<8x128xf32>
    %55 = arith.negf %54 : vector<8x128xf32>
    %56 = math.exp %55 : vector<8x128xf32>
    %cst_33 = arith.constant 1.000000e+00 : f32
    %57 = vector.broadcast %cst_33 : f32 to vector<8x128xf32>
    %58 = arith.addf %57, %56 : vector<8x128xf32>
    %59 = arith.divf %57, %58 : vector<8x128xf32>
    %60 = vector.extract_strided_slice %52 {offsets = [0, 128], sizes = [8, 128], strides = [1, 1]} : vector<8x512xf32> to vector<8x128xf32>
    %61 = arith.negf %60 : vector<8x128xf32>
    %62 = math.exp %61 : vector<8x128xf32>
    %cst_34 = arith.constant 1.000000e+00 : f32
    %63 = vector.broadcast %cst_34 : f32 to vector<8x128xf32>
    %64 = arith.addf %63, %62 : vector<8x128xf32>
    %65 = arith.divf %63, %64 : vector<8x128xf32>
    %66 = vector.extract_strided_slice %52 {offsets = [0, 256], sizes = [8, 128], strides = [1, 1]} : vector<8x512xf32> to vector<8x128xf32>
    %67 = math.tanh %66 : vector<8x128xf32>
    %68 = vector.extract_strided_slice %52 {offsets = [0, 384], sizes = [8, 128], strides = [1, 1]} : vector<8x512xf32> to vector<8x128xf32>
    %69 = arith.negf %68 : vector<8x128xf32>
    %70 = math.exp %69 : vector<8x128xf32>
    %cst_35 = arith.constant 1.000000e+00 : f32
    %71 = vector.broadcast %cst_35 : f32 to vector<8x128xf32>
    %72 = arith.addf %71, %70 : vector<8x128xf32>
    %73 = arith.divf %71, %72 : vector<8x128xf32>
    %74 = arith.mulf %65, %53 : vector<8x128xf32>
    %75 = arith.mulf %59, %67 : vector<8x128xf32>
    %76 = arith.addf %74, %75 : vector<8x128xf32>
    %77 = math.tanh %76 : vector<8x128xf32>
    %78 = arith.mulf %73, %77 : vector<8x128xf32>
    %c0_36 = arith.constant 0 : index
    %c0_37 = arith.constant 0 : index
    %79 = vector.load %arg12[%c0_36, %c0_37] : memref<8x128xf32, #tpu.memory_space<vmem>>, vector<8x128xf32>
    tpu.vector_store %arg12[%c0_36, %c0_37], %76 {strides = array<i32>} : memref<8x128xf32, #tpu.memory_space<vmem>>, vector<8x128xf32>,
    %80 = arith.truncf %78 : vector<8x128xf32> to vector<8x128xbf16>
    %c0_38 = arith.constant 0 : index
    %c128 = arith.constant 128 : index
    %81 = vector.load %arg10[%c0_38, %c128] : memref<8x256xbf16, #tpu.memory_space<vmem>>, vector<8x128xbf16>
    tpu.vector_store %arg10[%c0_38, %c128], %80 {strides = array<i32>} : memref<8x256xbf16, #tpu.memory_space<vmem>>, vector<8x128xbf16>,
    %c1_i32 = arith.constant 1 : i32
    %c8_i32_39 = arith.constant 8 : i32
    %82 = arith.muli %c1_i32, %c8_i32_39 : i32
    %83 = tpu.assume_multiple %82, 8 : i32
    %84 = arith.index_cast %83 : i32 to index
    %c0_40 = arith.constant 0 : index
    %85 = vector.load %arg13[%84, %c0_40] : memref<32x512xf32, #tpu.memory_space<vmem>>, vector<8x512xf32>
    %c0_41 = arith.constant 0 : index
    %c0_42 = arith.constant 0 : index
    %86 = vector.load %arg10[%c0_41, %c0_42] : memref<8x256xbf16, #tpu.memory_space<vmem>>, vector<8x128xbf16>
    %cst_43 = arith.constant dense<0.000000e+00> : vector<8x512xf32>
    %87 = tpu.matmul %86, %10, %cst_43 {dimension_numbers = #tpu.dot_dimension_numbers<[1], [0], [0], [1], [0, 0, 1, 1], [], []>} : vector<8x128xbf16>, vector<128x512xbf16>, vector<8x512xf32> -> vector<8x512xf32>
    %88 = arith.addf %85, %87 : vector<8x512xf32>
    %c0_44 = arith.constant 0 : index
    %c0_45 = arith.constant 0 : index
    %89 = vector.load %arg11[%c0_44, %c0_45] : memref<8x128xf32, #tpu.memory_space<vmem>>, vector<8x128xf32>
    %90 = vector.extract_strided_slice %88 {offsets = [0, 0], sizes = [8, 128], strides = [1, 1]} : vector<8x512xf32> to vector<8x128xf32>
    %91 = arith.negf %90 : vector<8x128xf32>
    %92 = math.exp %91 : vector<8x128xf32>
    %cst_46 = arith.constant 1.000000e+00 : f32
    %93 = vector.broadcast %cst_46 : f32 to vector<8x128xf32>
    %94 = arith.addf %93, %92 : vector<8x128xf32>
    %95 = arith.divf %93, %94 : vector<8x128xf32>
    %96 = vector.extract_strided_slice %88 {offsets = [0, 128], sizes = [8, 128], strides = [1, 1]} : vector<8x512xf32> to vector<8x128xf32>
    %97 = arith.negf %96 : vector<8x128xf32>
    %98 = math.exp %97 : vector<8x128xf32>
    %cst_47 = arith.constant 1.000000e+00 : f32
    %99 = vector.broadcast %cst_47 : f32 to vector<8x128xf32>
    %100 = arith.addf %99, %98 : vector<8x128xf32>
    %101 = arith.divf %99, %100 : vector<8x128xf32>
    %102 = vector.extract_strided_slice %88 {offsets = [0, 256], sizes = [8, 128], strides = [1, 1]} : vector<8x512xf32> to vector<8x128xf32>
    %103 = math.tanh %102 : vector<8x128xf32>
    %104 = vector.extract_strided_slice %88 {offsets = [0, 384], sizes = [8, 128], strides = [1, 1]} : vector<8x512xf32> to vector<8x128xf32>
    %105 = arith.negf %104 : vector<8x128xf32>
    %106 = math.exp %105 : vector<8x128xf32>
    %cst_48 = arith.constant 1.000000e+00 : f32
    %107 = vector.broadcast %cst_48 : f32 to vector<8x128xf32>
    %108 = arith.addf %107, %106 : vector<8x128xf32>
    %109 = arith.divf %107, %108 : vector<8x128xf32>
    %110 = arith.mulf %101, %89 : vector<8x128xf32>
    %111 = arith.mulf %95, %103 : vector<8x128xf32>
    %112 = arith.addf %110, %111 : vector<8x128xf32>
    %113 = math.tanh %112 : vector<8x128xf32>
    %114 = arith.mulf %109, %113 : vector<8x128xf32>
    %c0_49 = arith.constant 0 : index
    %c0_50 = arith.constant 0 : index
    %115 = vector.load %arg11[%c0_49, %c0_50] : memref<8x128xf32, #tpu.memory_space<vmem>>, vector<8x128xf32>
    tpu.vector_store %arg11[%c0_49, %c0_50], %112 {strides = array<i32>} : memref<8x128xf32, #tpu.memory_space<vmem>>, vector<8x128xf32>,
    %116 = arith.truncf %114 : vector<8x128xf32> to vector<8x128xbf16>
    %c0_51 = arith.constant 0 : index
    %c0_52 = arith.constant 0 : index
    %117 = vector.load %arg10[%c0_51, %c0_52] : memref<8x256xbf16, #tpu.memory_space<vmem>>, vector<8x128xbf16>
    tpu.vector_store %arg10[%c0_51, %c0_52], %116 {strides = array<i32>} : memref<8x256xbf16, #tpu.memory_space<vmem>>, vector<8x128xbf16>,
    %c0_53 = arith.constant 0 : index
    %c0_54 = arith.constant 0 : index
    %118 = vector.load %arg10[%c0_53, %c0_54] : memref<8x256xbf16, #tpu.memory_space<vmem>>, vector<8x256xbf16>
    %cst_55 = arith.constant dense<0.000000e+00> : vector<8x512xf32>
    %119 = tpu.matmul %118, %11, %cst_55 {dimension_numbers = #tpu.dot_dimension_numbers<[1], [0], [0], [1], [0, 0, 1, 1], [], []>} : vector<8x256xbf16>, vector<256x512xbf16>, vector<8x512xf32> -> vector<8x512xf32>
    %120 = vector.broadcast %12 : vector<1x512xf32> to vector<8x512xf32>
    %121 = arith.addf %119, %120 : vector<8x512xf32>
    %c0_56 = arith.constant 0 : index
    %c0_57 = arith.constant 0 : index
    %122 = vector.load %arg12[%c0_56, %c0_57] : memref<8x128xf32, #tpu.memory_space<vmem>>, vector<8x128xf32>
    %123 = vector.extract_strided_slice %121 {offsets = [0, 0], sizes = [8, 128], strides = [1, 1]} : vector<8x512xf32> to vector<8x128xf32>
    %124 = arith.negf %123 : vector<8x128xf32>
    %125 = math.exp %124 : vector<8x128xf32>
    %cst_58 = arith.constant 1.000000e+00 : f32
    %126 = vector.broadcast %cst_58 : f32 to vector<8x128xf32>
    %127 = arith.addf %126, %125 : vector<8x128xf32>
    %128 = arith.divf %126, %127 : vector<8x128xf32>
    %129 = vector.extract_strided_slice %121 {offsets = [0, 128], sizes = [8, 128], strides = [1, 1]} : vector<8x512xf32> to vector<8x128xf32>
    %130 = arith.negf %129 : vector<8x128xf32>
    %131 = math.exp %130 : vector<8x128xf32>
    %cst_59 = arith.constant 1.000000e+00 : f32
    %132 = vector.broadcast %cst_59 : f32 to vector<8x128xf32>
    %133 = arith.addf %132, %131 : vector<8x128xf32>
    %134 = arith.divf %132, %133 : vector<8x128xf32>
    %135 = vector.extract_strided_slice %121 {offsets = [0, 256], sizes = [8, 128], strides = [1, 1]} : vector<8x512xf32> to vector<8x128xf32>
    %136 = math.tanh %135 : vector<8x128xf32>
    %137 = vector.extract_strided_slice %121 {offsets = [0, 384], sizes = [8, 128], strides = [1, 1]} : vector<8x512xf32> to vector<8x128xf32>
    %138 = arith.negf %137 : vector<8x128xf32>
    %139 = math.exp %138 : vector<8x128xf32>
    %cst_60 = arith.constant 1.000000e+00 : f32
    %140 = vector.broadcast %cst_60 : f32 to vector<8x128xf32>
    %141 = arith.addf %140, %139 : vector<8x128xf32>
    %142 = arith.divf %140, %141 : vector<8x128xf32>
    %143 = arith.mulf %134, %122 : vector<8x128xf32>
    %144 = arith.mulf %128, %136 : vector<8x128xf32>
    %145 = arith.addf %143, %144 : vector<8x128xf32>
    %146 = math.tanh %145 : vector<8x128xf32>
    %147 = arith.mulf %142, %146 : vector<8x128xf32>
    %c0_61 = arith.constant 0 : index
    %c0_62 = arith.constant 0 : index
    %148 = vector.load %arg12[%c0_61, %c0_62] : memref<8x128xf32, #tpu.memory_space<vmem>>, vector<8x128xf32>
    tpu.vector_store %arg12[%c0_61, %c0_62], %145 {strides = array<i32>} : memref<8x128xf32, #tpu.memory_space<vmem>>, vector<8x128xf32>,
    %149 = arith.truncf %147 : vector<8x128xf32> to vector<8x128xbf16>
    %c0_63 = arith.constant 0 : index
    %c128_64 = arith.constant 128 : index
    %150 = vector.load %arg10[%c0_63, %c128_64] : memref<8x256xbf16, #tpu.memory_space<vmem>>, vector<8x128xbf16>
    tpu.vector_store %arg10[%c0_63, %c128_64], %149 {strides = array<i32>} : memref<8x256xbf16, #tpu.memory_space<vmem>>, vector<8x128xbf16>,
    %c2_i32 = arith.constant 2 : i32
    %c8_i32_65 = arith.constant 8 : i32
    %151 = arith.muli %c2_i32, %c8_i32_65 : i32
    %152 = tpu.assume_multiple %151, 8 : i32
    %153 = arith.index_cast %152 : i32 to index
    %c0_66 = arith.constant 0 : index
    %154 = vector.load %arg13[%153, %c0_66] : memref<32x512xf32, #tpu.memory_space<vmem>>, vector<8x512xf32>
    %c0_67 = arith.constant 0 : index
    %c0_68 = arith.constant 0 : index
    %155 = vector.load %arg10[%c0_67, %c0_68] : memref<8x256xbf16, #tpu.memory_space<vmem>>, vector<8x128xbf16>
    %cst_69 = arith.constant dense<0.000000e+00> : vector<8x512xf32>
    %156 = tpu.matmul %155, %10, %cst_69 {dimension_numbers = #tpu.dot_dimension_numbers<[1], [0], [0], [1], [0, 0, 1, 1], [], []>} : vector<8x128xbf16>, vector<128x512xbf16>, vector<8x512xf32> -> vector<8x512xf32>
    %157 = arith.addf %154, %156 : vector<8x512xf32>
    %c0_70 = arith.constant 0 : index
    %c0_71 = arith.constant 0 : index
    %158 = vector.load %arg11[%c0_70, %c0_71] : memref<8x128xf32, #tpu.memory_space<vmem>>, vector<8x128xf32>
    %159 = vector.extract_strided_slice %157 {offsets = [0, 0], sizes = [8, 128], strides = [1, 1]} : vector<8x512xf32> to vector<8x128xf32>
    %160 = arith.negf %159 : vector<8x128xf32>
    %161 = math.exp %160 : vector<8x128xf32>
    %cst_72 = arith.constant 1.000000e+00 : f32
    %162 = vector.broadcast %cst_72 : f32 to vector<8x128xf32>
    %163 = arith.addf %162, %161 : vector<8x128xf32>
    %164 = arith.divf %162, %163 : vector<8x128xf32>
    %165 = vector.extract_strided_slice %157 {offsets = [0, 128], sizes = [8, 128], strides = [1, 1]} : vector<8x512xf32> to vector<8x128xf32>
    %166 = arith.negf %165 : vector<8x128xf32>
    %167 = math.exp %166 : vector<8x128xf32>
    %cst_73 = arith.constant 1.000000e+00 : f32
    %168 = vector.broadcast %cst_73 : f32 to vector<8x128xf32>
    %169 = arith.addf %168, %167 : vector<8x128xf32>
    %170 = arith.divf %168, %169 : vector<8x128xf32>
    %171 = vector.extract_strided_slice %157 {offsets = [0, 256], sizes = [8, 128], strides = [1, 1]} : vector<8x512xf32> to vector<8x128xf32>
    %172 = math.tanh %171 : vector<8x128xf32>
    %173 = vector.extract_strided_slice %157 {offsets = [0, 384], sizes = [8, 128], strides = [1, 1]} : vector<8x512xf32> to vector<8x128xf32>
    %174 = arith.negf %173 : vector<8x128xf32>
    %175 = math.exp %174 : vector<8x128xf32>
    %cst_74 = arith.constant 1.000000e+00 : f32
    %176 = vector.broadcast %cst_74 : f32 to vector<8x128xf32>
    %177 = arith.addf %176, %175 : vector<8x128xf32>
    %178 = arith.divf %176, %177 : vector<8x128xf32>
    %179 = arith.mulf %170, %158 : vector<8x128xf32>
    %180 = arith.mulf %164, %172 : vector<8x128xf32>
    %181 = arith.addf %179, %180 : vector<8x128xf32>
    %182 = math.tanh %181 : vector<8x128xf32>
    %183 = arith.mulf %178, %182 : vector<8x128xf32>
    %c0_75 = arith.constant 0 : index
    %c0_76 = arith.constant 0 : index
    %184 = vector.load %arg11[%c0_75, %c0_76] : memref<8x128xf32, #tpu.memory_space<vmem>>, vector<8x128xf32>
    tpu.vector_store %arg11[%c0_75, %c0_76], %181 {strides = array<i32>} : memref<8x128xf32, #tpu.memory_space<vmem>>, vector<8x128xf32>,
    %185 = arith.truncf %183 : vector<8x128xf32> to vector<8x128xbf16>
    %c0_77 = arith.constant 0 : index
    %c0_78 = arith.constant 0 : index
    %186 = vector.load %arg10[%c0_77, %c0_78] : memref<8x256xbf16, #tpu.memory_space<vmem>>, vector<8x128xbf16>
    tpu.vector_store %arg10[%c0_77, %c0_78], %185 {strides = array<i32>} : memref<8x256xbf16, #tpu.memory_space<vmem>>, vector<8x128xbf16>,
    %c0_79 = arith.constant 0 : index
    %c0_80 = arith.constant 0 : index
    %187 = vector.load %arg10[%c0_79, %c0_80] : memref<8x256xbf16, #tpu.memory_space<vmem>>, vector<8x256xbf16>
    %cst_81 = arith.constant dense<0.000000e+00> : vector<8x512xf32>
    %188 = tpu.matmul %187, %11, %cst_81 {dimension_numbers = #tpu.dot_dimension_numbers<[1], [0], [0], [1], [0, 0, 1, 1], [], []>} : vector<8x256xbf16>, vector<256x512xbf16>, vector<8x512xf32> -> vector<8x512xf32>
    %189 = vector.broadcast %12 : vector<1x512xf32> to vector<8x512xf32>
    %190 = arith.addf %188, %189 : vector<8x512xf32>
    %c0_82 = arith.constant 0 : index
    %c0_83 = arith.constant 0 : index
    %191 = vector.load %arg12[%c0_82, %c0_83] : memref<8x128xf32, #tpu.memory_space<vmem>>, vector<8x128xf32>
    %192 = vector.extract_strided_slice %190 {offsets = [0, 0], sizes = [8, 128], strides = [1, 1]} : vector<8x512xf32> to vector<8x128xf32>
    %193 = arith.negf %192 : vector<8x128xf32>
    %194 = math.exp %193 : vector<8x128xf32>
    %cst_84 = arith.constant 1.000000e+00 : f32
    %195 = vector.broadcast %cst_84 : f32 to vector<8x128xf32>
    %196 = arith.addf %195, %194 : vector<8x128xf32>
    %197 = arith.divf %195, %196 : vector<8x128xf32>
    %198 = vector.extract_strided_slice %190 {offsets = [0, 128], sizes = [8, 128], strides = [1, 1]} : vector<8x512xf32> to vector<8x128xf32>
    %199 = arith.negf %198 : vector<8x128xf32>
    %200 = math.exp %199 : vector<8x128xf32>
    %cst_85 = arith.constant 1.000000e+00 : f32
    %201 = vector.broadcast %cst_85 : f32 to vector<8x128xf32>
    %202 = arith.addf %201, %200 : vector<8x128xf32>
    %203 = arith.divf %201, %202 : vector<8x128xf32>
    %204 = vector.extract_strided_slice %190 {offsets = [0, 256], sizes = [8, 128], strides = [1, 1]} : vector<8x512xf32> to vector<8x128xf32>
    %205 = math.tanh %204 : vector<8x128xf32>
    %206 = vector.extract_strided_slice %190 {offsets = [0, 384], sizes = [8, 128], strides = [1, 1]} : vector<8x512xf32> to vector<8x128xf32>
    %207 = arith.negf %206 : vector<8x128xf32>
    %208 = math.exp %207 : vector<8x128xf32>
    %cst_86 = arith.constant 1.000000e+00 : f32
    %209 = vector.broadcast %cst_86 : f32 to vector<8x128xf32>
    %210 = arith.addf %209, %208 : vector<8x128xf32>
    %211 = arith.divf %209, %210 : vector<8x128xf32>
    %212 = arith.mulf %203, %191 : vector<8x128xf32>
    %213 = arith.mulf %197, %205 : vector<8x128xf32>
    %214 = arith.addf %212, %213 : vector<8x128xf32>
    %215 = math.tanh %214 : vector<8x128xf32>
    %216 = arith.mulf %211, %215 : vector<8x128xf32>
    %c0_87 = arith.constant 0 : index
    %c0_88 = arith.constant 0 : index
    %217 = vector.load %arg12[%c0_87, %c0_88] : memref<8x128xf32, #tpu.memory_space<vmem>>, vector<8x128xf32>
    tpu.vector_store %arg12[%c0_87, %c0_88], %214 {strides = array<i32>} : memref<8x128xf32, #tpu.memory_space<vmem>>, vector<8x128xf32>,
    %218 = arith.truncf %216 : vector<8x128xf32> to vector<8x128xbf16>
    %c0_89 = arith.constant 0 : index
    %c128_90 = arith.constant 128 : index
    %219 = vector.load %arg10[%c0_89, %c128_90] : memref<8x256xbf16, #tpu.memory_space<vmem>>, vector<8x128xbf16>
    tpu.vector_store %arg10[%c0_89, %c128_90], %218 {strides = array<i32>} : memref<8x256xbf16, #tpu.memory_space<vmem>>, vector<8x128xbf16>,
    %c3_i32 = arith.constant 3 : i32
    %c8_i32_91 = arith.constant 8 : i32
    %220 = arith.muli %c3_i32, %c8_i32_91 : i32
    %221 = tpu.assume_multiple %220, 8 : i32
    %222 = arith.index_cast %221 : i32 to index
    %c0_92 = arith.constant 0 : index
    %223 = vector.load %arg13[%222, %c0_92] : memref<32x512xf32, #tpu.memory_space<vmem>>, vector<8x512xf32>
    %c0_93 = arith.constant 0 : index
    %c0_94 = arith.constant 0 : index
    %224 = vector.load %arg10[%c0_93, %c0_94] : memref<8x256xbf16, #tpu.memory_space<vmem>>, vector<8x128xbf16>
    %cst_95 = arith.constant dense<0.000000e+00> : vector<8x512xf32>
    %225 = tpu.matmul %224, %10, %cst_95 {dimension_numbers = #tpu.dot_dimension_numbers<[1], [0], [0], [1], [0, 0, 1, 1], [], []>} : vector<8x128xbf16>, vector<128x512xbf16>, vector<8x512xf32> -> vector<8x512xf32>
    %226 = arith.addf %223, %225 : vector<8x512xf32>
    %c0_96 = arith.constant 0 : index
    %c0_97 = arith.constant 0 : index
    %227 = vector.load %arg11[%c0_96, %c0_97] : memref<8x128xf32, #tpu.memory_space<vmem>>, vector<8x128xf32>
    %228 = vector.extract_strided_slice %226 {offsets = [0, 0], sizes = [8, 128], strides = [1, 1]} : vector<8x512xf32> to vector<8x128xf32>
    %229 = arith.negf %228 : vector<8x128xf32>
    %230 = math.exp %229 : vector<8x128xf32>
    %cst_98 = arith.constant 1.000000e+00 : f32
    %231 = vector.broadcast %cst_98 : f32 to vector<8x128xf32>
    %232 = arith.addf %231, %230 : vector<8x128xf32>
    %233 = arith.divf %231, %232 : vector<8x128xf32>
    %234 = vector.extract_strided_slice %226 {offsets = [0, 128], sizes = [8, 128], strides = [1, 1]} : vector<8x512xf32> to vector<8x128xf32>
    %235 = arith.negf %234 : vector<8x128xf32>
    %236 = math.exp %235 : vector<8x128xf32>
    %cst_99 = arith.constant 1.000000e+00 : f32
    %237 = vector.broadcast %cst_99 : f32 to vector<8x128xf32>
    %238 = arith.addf %237, %236 : vector<8x128xf32>
    %239 = arith.divf %237, %238 : vector<8x128xf32>
    %240 = vector.extract_strided_slice %226 {offsets = [0, 256], sizes = [8, 128], strides = [1, 1]} : vector<8x512xf32> to vector<8x128xf32>
    %241 = math.tanh %240 : vector<8x128xf32>
    %242 = vector.extract_strided_slice %226 {offsets = [0, 384], sizes = [8, 128], strides = [1, 1]} : vector<8x512xf32> to vector<8x128xf32>
    %243 = arith.negf %242 : vector<8x128xf32>
    %244 = math.exp %243 : vector<8x128xf32>
    %cst_100 = arith.constant 1.000000e+00 : f32
    %245 = vector.broadcast %cst_100 : f32 to vector<8x128xf32>
    %246 = arith.addf %245, %244 : vector<8x128xf32>
    %247 = arith.divf %245, %246 : vector<8x128xf32>
    %248 = arith.mulf %239, %227 : vector<8x128xf32>
    %249 = arith.mulf %233, %241 : vector<8x128xf32>
    %250 = arith.addf %248, %249 : vector<8x128xf32>
    %251 = math.tanh %250 : vector<8x128xf32>
    %252 = arith.mulf %247, %251 : vector<8x128xf32>
    %c0_101 = arith.constant 0 : index
    %c0_102 = arith.constant 0 : index
    %253 = vector.load %arg11[%c0_101, %c0_102] : memref<8x128xf32, #tpu.memory_space<vmem>>, vector<8x128xf32>
    tpu.vector_store %arg11[%c0_101, %c0_102], %250 {strides = array<i32>} : memref<8x128xf32, #tpu.memory_space<vmem>>, vector<8x128xf32>,
    %254 = arith.truncf %252 : vector<8x128xf32> to vector<8x128xbf16>
    %c0_103 = arith.constant 0 : index
    %c0_104 = arith.constant 0 : index
    %255 = vector.load %arg10[%c0_103, %c0_104] : memref<8x256xbf16, #tpu.memory_space<vmem>>, vector<8x128xbf16>
    tpu.vector_store %arg10[%c0_103, %c0_104], %254 {strides = array<i32>} : memref<8x256xbf16, #tpu.memory_space<vmem>>, vector<8x128xbf16>,
    %c0_105 = arith.constant 0 : index
    %c0_106 = arith.constant 0 : index
    %256 = vector.load %arg10[%c0_105, %c0_106] : memref<8x256xbf16, #tpu.memory_space<vmem>>, vector<8x256xbf16>
    %cst_107 = arith.constant dense<0.000000e+00> : vector<8x512xf32>
    %257 = tpu.matmul %256, %11, %cst_107 {dimension_numbers = #tpu.dot_dimension_numbers<[1], [0], [0], [1], [0, 0, 1, 1], [], []>} : vector<8x256xbf16>, vector<256x512xbf16>, vector<8x512xf32> -> vector<8x512xf32>
    %258 = vector.broadcast %12 : vector<1x512xf32> to vector<8x512xf32>
    %259 = arith.addf %257, %258 : vector<8x512xf32>
    %c0_108 = arith.constant 0 : index
    %c0_109 = arith.constant 0 : index
    %260 = vector.load %arg12[%c0_108, %c0_109] : memref<8x128xf32, #tpu.memory_space<vmem>>, vector<8x128xf32>
    %261 = vector.extract_strided_slice %259 {offsets = [0, 0], sizes = [8, 128], strides = [1, 1]} : vector<8x512xf32> to vector<8x128xf32>
    %262 = arith.negf %261 : vector<8x128xf32>
    %263 = math.exp %262 : vector<8x128xf32>
    %cst_110 = arith.constant 1.000000e+00 : f32
    %264 = vector.broadcast %cst_110 : f32 to vector<8x128xf32>
    %265 = arith.addf %264, %263 : vector<8x128xf32>
    %266 = arith.divf %264, %265 : vector<8x128xf32>
    %267 = vector.extract_strided_slice %259 {offsets = [0, 128], sizes = [8, 128], strides = [1, 1]} : vector<8x512xf32> to vector<8x128xf32>
    %268 = arith.negf %267 : vector<8x128xf32>
    %269 = math.exp %268 : vector<8x128xf32>
    %cst_111 = arith.constant 1.000000e+00 : f32
    %270 = vector.broadcast %cst_111 : f32 to vector<8x128xf32>
    %271 = arith.addf %270, %269 : vector<8x128xf32>
    %272 = arith.divf %270, %271 : vector<8x128xf32>
    %273 = vector.extract_strided_slice %259 {offsets = [0, 256], sizes = [8, 128], strides = [1, 1]} : vector<8x512xf32> to vector<8x128xf32>
    %274 = math.tanh %273 : vector<8x128xf32>
    %275 = vector.extract_strided_slice %259 {offsets = [0, 384], sizes = [8, 128], strides = [1, 1]} : vector<8x512xf32> to vector<8x128xf32>
    %276 = arith.negf %275 : vector<8x128xf32>
    %277 = math.exp %276 : vector<8x128xf32>
    %cst_112 = arith.constant 1.000000e+00 : f32
    %278 = vector.broadcast %cst_112 : f32 to vector<8x128xf32>
    %279 = arith.addf %278, %277 : vector<8x128xf32>
    %280 = arith.divf %278, %279 : vector<8x128xf32>
    %281 = arith.mulf %272, %260 : vector<8x128xf32>
    %282 = arith.mulf %266, %274 : vector<8x128xf32>
    %283 = arith.addf %281, %282 : vector<8x128xf32>
    %284 = math.tanh %283 : vector<8x128xf32>
    %285 = arith.mulf %280, %284 : vector<8x128xf32>
    %c0_113 = arith.constant 0 : index
    %c0_114 = arith.constant 0 : index
    %286 = vector.load %arg12[%c0_113, %c0_114] : memref<8x128xf32, #tpu.memory_space<vmem>>, vector<8x128xf32>
    tpu.vector_store %arg12[%c0_113, %c0_114], %283 {strides = array<i32>} : memref<8x128xf32, #tpu.memory_space<vmem>>, vector<8x128xf32>,
    %287 = arith.truncf %285 : vector<8x128xf32> to vector<8x128xbf16>
    %c0_115 = arith.constant 0 : index
    %c128_116 = arith.constant 128 : index
    %288 = vector.load %arg10[%c0_115, %c128_116] : memref<8x256xbf16, #tpu.memory_space<vmem>>, vector<8x128xbf16>
    tpu.vector_store %arg10[%c0_115, %c128_116], %287 {strides = array<i32>} : memref<8x256xbf16, #tpu.memory_space<vmem>>, vector<8x128xbf16>,
    %c4_i32 = arith.constant 4 : i32
    %c1_i32_117 = arith.constant 1 : i32
    %289 = arith.cmpi eq, %arg0, %c1_i32_117 : i32
    %290 = arith.extui %289 : i1 to i32
    %c0_i32_118 = arith.constant 0 : i32
    %291 = arith.cmpi ne, %290, %c0_i32_118 : i32
    scf.if %291 {
      %c0_119 = arith.constant 0 : index
      %c128_120 = arith.constant 128 : index
      %292 = vector.load %arg10[%c0_119, %c128_120] : memref<8x256xbf16, #tpu.memory_space<vmem>>, vector<8x128xbf16>
      %c0_121 = arith.constant 0 : index
      %c0_122 = arith.constant 0 : index
      %293 = vector.load %arg7[%c0_121, %c0_122] : memref<128x5xbf16, #tpu.memory_space<vmem>>, vector<128x5xbf16>
      %cst_123 = arith.constant dense<0.000000e+00> : vector<8x5xf32>
      %294 = tpu.matmul %292, %293, %cst_123 {dimension_numbers = #tpu.dot_dimension_numbers<[1], [0], [0], [1], [0, 0, 1, 1], [], []>} : vector<8x128xbf16>, vector<128x5xbf16>, vector<8x5xf32> -> vector<8x5xf32>
      %c0_124 = arith.constant 0 : index
      %c0_125 = arith.constant 0 : index
      %295 = vector.load %arg8[%c0_124, %c0_125] : memref<1x5xf32, #tpu.memory_space<vmem>>, vector<1x5xf32>
      %296 = vector.broadcast %295 : vector<1x5xf32> to vector<8x5xf32>
      %297 = arith.addf %294, %296 : vector<8x5xf32>
      %c0_126 = arith.constant 0 : index
      %c0_127 = arith.constant 0 : index
      %298 = vector.load %arg9[%c0_126, %c0_127] : memref<8x5xf32, #tpu.memory_space<vmem>>, vector<8x5xf32>
      tpu.vector_store %arg9[%c0_126, %c0_127], %297 {strides = array<i32>} : memref<8x5xf32, #tpu.memory_space<vmem>>, vector<8x5xf32>,
    } else {
    }
    return
  }
  func.func @transform_0(%arg0: i32) -> (i32, i32) {
    %c0_i32 = arith.constant 0 : i32
    %c0_i32_0 = arith.constant 0 : i32
    return %arg0, %c0_i32 : i32, i32
  }
  func.func @transform_1(%arg0: i32) -> (i32, i32) {
    %c0_i32 = arith.constant 0 : i32
    %c0_i32_0 = arith.constant 0 : i32
    %c0_i32_1 = arith.constant 0 : i32
    return %c0_i32, %c0_i32_0 : i32, i32
  }
  func.func @transform_2(%arg0: i32) -> (i32, i32) {
    %c0_i32 = arith.constant 0 : i32
    %c0_i32_0 = arith.constant 0 : i32
    %c0_i32_1 = arith.constant 0 : i32
    return %c0_i32, %c0_i32_0 : i32, i32
  }
  func.func @transform_3(%arg0: i32) -> (i32, i32) {
    %c0_i32 = arith.constant 0 : i32
    %c0_i32_0 = arith.constant 0 : i32
    %c0_i32_1 = arith.constant 0 : i32
    return %c0_i32, %c0_i32_0 : i32, i32
  }
  func.func @transform_4(%arg0: i32) -> (i32, i32) {
    %c0_i32 = arith.constant 0 : i32
    %c0_i32_0 = arith.constant 0 : i32
    %c0_i32_1 = arith.constant 0 : i32
    return %c0_i32, %c0_i32_0 : i32, i32
  }
  func.func @transform_5(%arg0: i32) -> (i32, i32) {
    %c0_i32 = arith.constant 0 : i32
    %c0_i32_0 = arith.constant 0 : i32
    %c0_i32_1 = arith.constant 0 : i32
    return %c0_i32, %c0_i32_0 : i32, i32
  }
  func.func @transform_6(%arg0: i32) -> (i32, i32) {
    %c0_i32 = arith.constant 0 : i32
    %c0_i32_0 = arith.constant 0 : i32
    %c0_i32_1 = arith.constant 0 : i32
    return %c0_i32, %c0_i32_0 : i32, i32
  }
  func.func @transform_7(%arg0: i32) -> (i32, i32) {
    %c0_i32 = arith.constant 0 : i32
    %c0_i32_0 = arith.constant 0 : i32
    %c0_i32_1 = arith.constant 0 : i32
    return %c0_i32, %c0_i32_0 : i32, i32
  }
  func.func @transform_8(%arg0: i32) -> (i32, i32) {
    %c0_i32 = arith.constant 0 : i32
    %c0_i32_0 = arith.constant 0 : i32
    %c0_i32_1 = arith.constant 0 : i32
    return %c0_i32, %c0_i32_0 : i32, i32
  }
}

</mosaic_0001>

<llo_original>
// kernel: tpu_custom_call.1
$region0: #{tpu_custom_call.1}
  #allocation0 [shape = 'u32[]', space=smem, size = 0x4, offset = 0x4, fixed_abs, tag = 'smem constant byte address 0x4 - core index']
  #allocation1 [shape = 'u32[72,128]{1,0:T(1,128)}', space=vmem, size = 0x9000, scoped, tag = 'internal scratch']
  #allocation2 [shape = 'bf16[8,256]{1,0:T(8,128)(2,1)}', space=vmem, size = 0x1000, scoped, tag = 'scratch operand']
  #allocation3 [shape = 'f32[8,128]{1,0:T(8,128)}', space=vmem, size = 0x1000, scoped, tag = 'scratch operand']
  #allocation4 [shape = 'f32[8,128]{1,0:T(8,128)}', space=vmem, size = 0x1000, scoped, tag = 'scratch operand']
  #allocation5 [shape = 'f32[32,512]{1,0:T(8,128)}', space=vmem, size = 0x10000, scoped, tag = 'scratch operand']
  %s0 = inlined_call_operand.vmem [shape: bf16[64,128], index: 0, kind: input, shape index: {}]
  %s1 = inlined_call_operand.hbm [shape: bf16[128,512], index: 1, kind: input, shape index: {}]
  %s2 = inlined_call_operand.hbm [shape: bf16[128,512], index: 2, kind: input, shape index: {}]
  %s3 = inlined_call_operand.vmem [shape: f32[1,512], index: 3, kind: input, shape index: {}]
  %s4 = inlined_call_operand.hbm [shape: bf16[256,512], index: 4, kind: input, shape index: {}]
  %s5 = inlined_call_operand.vmem [shape: f32[1,512], index: 5, kind: input, shape index: {}]
  %s6 = inlined_call_operand.vmem [shape: bf16[128,5], index: 6, kind: input, shape index: {}]
  %s7 = inlined_call_operand.vmem [shape: f32[1,5], index: 7, kind: input, shape index: {}]
  %s8 = inlined_call_operand.hbm [shape: f32[8,5], index: 8, kind: output, shape index: {}]
  %s9 = sld [smem:[#allocation0]]
  $region85: #{tpu_custom_call.1} parent=0
    _
  %s11 = ssub.s32 1, %s9
  %s12 = scalar_select 0, %s11, %s9
  $region1: #{tpu_custom_call.1} parent=0
    #allocation6 [shape = 'u8[131072]{0}', space=vmem, size = 0x20000, scoped, tag = 'input window, operand 1, single buffered']
    #allocation7 [shape = 's32[2]{0}', space=sflag, size = 0x8, scoped, tag = 'scoped memory for tpu_custom_call.1']
    #allocation8 [shape = 's32[2]{0}', space=sflag, size = 0x8, scoped, tag = 'scoped memory for tpu_custom_call.1']
    #allocation9 [shape = 'u8[131072]{0}', space=vmem, size = 0x20000, scoped, tag = 'input window, operand 2, single buffered']
    #allocation10 [shape = 's32[1]{0}', space=sflag, size = 0x4, scoped, tag = 'scoped memory for tpu_custom_call.1']
    #allocation11 [shape = 'u8[262144]{0}', space=vmem, size = 0x40000, scoped, tag = 'input window, operand 4, single buffered']
    #allocation12 [shape = 'u8[4096]{0}', space=vmem, size = 0x1000, scoped, tag = 'output window, operand 0, single buffered']
    %13 = vsyncpa [#allocation7], 0
    %14 = vsyncpa [#allocation10], 0
    %15 = vsyncpa [#allocation8], 0
    loop: start=0, step=1, limit=4
    $region2: #{tpu_custom_call.1} parent=1 // loop_pre_header
      _
    $region3: #{tpu_custom_call.1} parent=1 // loop_header
      %s17 = sphi 0, %s21
      %p18 = scmp.ge.s32.totalorder %s17, 4
      %s27 = sphi 0, %s29
      %s30 = sphi 0, %s27
      %s31 = sphi 0, %s30
      %s47 = sphi 0, %s31
      %s51 = sphi 0, %s51
      %s53 = sphi 0, %s51
      %s54 = sphi 0, %s53
      %s68 = sphi 0, %s54
      %s72 = sphi 0, %s72
      %s74 = sphi 0, %s72
      %s75 = sphi 0, %s74
      %s89 = sphi 0, %s75
      %s93 = sphi 0, %s93
      %s95 = sphi 0, %s93
      %s96 = sphi 0, %s95
      %s110 = sphi 0, %s96
      %s114 = sphi 0, %s114
      %s116 = sphi 0, %s114
      %s117 = sphi 0, %s116
      %s131 = sphi 0, %s117
      %s135 = sphi 0, %s135
      %s137 = sphi 0, %s135
      %s138 = sphi 0, %s137
      %s152 = sphi 0, %s138
      %s156 = sphi 0, %s156
      %s158 = sphi 0, %s156
      %s159 = sphi 0, %s158
      %s173 = sphi 0, %s159
      %s177 = sphi 0, %s177
      %s179 = sphi 0, %s177
      %s180 = sphi 0, %s179
      %s194 = sphi 0, %s180
      %s198 = sphi 0, %s198
      %s200 = sphi 0, %s198
      %s201 = sphi 0, %s200
      %s215 = sphi 0, %s201
    $region4: #{tpu_custom_call.1} parent=1 // loop_header_branch
      %20 = sbr.rel (%p18) target = $region8
    $region5: #{tpu_custom_call.1} parent=1 // loop_body
      %s22 = ssub.s32 %s17, 1
      %s23 = ssub.s32 %s17, 2
      %s24 = sadd.s32 %s17, 1
      %s25 = ssub.s32 %s17, %s24
      %p26 = scmp.eq.s32.totalorder %s25, 0
      %s28 = sadd.s32 %s27, 1
      %s29 = scalar_select %p26, %s27, %s28
      %p32 = pneg %p26
      %p33 = scmp.eq.s32.totalorder %s17, 1
      %p34 = por %p32, %p33
      %p35 = scmp.ne.s32.totalorder %s27, %s30
      %p36 = scmp.eq.s32.totalorder %s17, 0
      %p37 = por %p35, %p36
      %p38 = scmp.ne.s32.totalorder %s27, %s30
      %p39 = scmp.eq.s32.totalorder %s22, 1
      %p40 = por %p38, %p39
      %p41 = scmp.ne.s32.totalorder %s30, %s31
      %p42 = scmp.eq.s32.totalorder %s22, 0
      %p43 = por %p41, %p42
      %p44 = scmp.ne.s32.totalorder %s30, %s31
      %p45 = scmp.eq.s32.totalorder %s23, 1
      %p46 = por %p44, %p45
      %p48 = scmp.ne.s32.totalorder %s31, %s47
      %p49 = scmp.eq.s32.totalorder %s23, 0
      %p50 = por %p48, %p49
      %s52 = sadd.s32 %s51, 1
      %p55 = scmp.eq.s32.totalorder %s17, 1
      %p56 = scmp.ne.s32.totalorder %s51, %s53
      %p57 = scmp.eq.s32.totalorder %s17, 0
      %p58 = por %p56, %p57
      %p59 = scmp.ne.s32.totalorder %s51, %s53
      %p60 = scmp.eq.s32.totalorder %s22, 1
      %p61 = por %p59, %p60
      %p62 = scmp.ne.s32.totalorder %s53, %s54
      %p63 = scmp.eq.s32.totalorder %s22, 0
      %p64 = por %p62, %p63
      %p65 = scmp.ne.s32.totalorder %s53, %s54
      %p66 = scmp.eq.s32.totalorder %s23, 1
      %p67 = por %p65, %p66
      %p69 = scmp.ne.s32.totalorder %s54, %s68
      %p70 = scmp.eq.s32.totalorder %s23, 0
      %p71 = por %p69, %p70
      %s73 = sadd.s32 %s72, 1
      %p76 = scmp.eq.s32.totalorder %s17, 1
      %p77 = scmp.ne.s32.totalorder %s72, %s74
      %p78 = scmp.eq.s32.totalorder %s17, 0
      %p79 = por %p77, %p78
      %p80 = scmp.ne.s32.totalorder %s72, %s74
      %p81 = scmp.eq.s32.totalorder %s22, 1
      %p82 = por %p80, %p81
      %p83 = scmp.ne.s32.totalorder %s74, %s75
      %p84 = scmp.eq.s32.totalorder %s22, 0
      %p85 = por %p83, %p84
      %p86 = scmp.ne.s32.totalorder %s74, %s75
      %p87 = scmp.eq.s32.totalorder %s23, 1
      %p88 = por %p86, %p87
      %p90 = scmp.ne.s32.totalorder %s75, %s89
      %p91 = scmp.eq.s32.totalorder %s23, 0
      %p92 = por %p90, %p91
      %s94 = sadd.s32 %s93, 1
      %p97 = scmp.eq.s32.totalorder %s17, 1
      %p98 = scmp.ne.s32.totalorder %s93, %s95
      %p99 = scmp.eq.s32.totalorder %s17, 0
      %p100 = por %p98, %p99
      %p101 = scmp.ne.s32.totalorder %s93, %s95
      %p102 = scmp.eq.s32.totalorder %s22, 1
      %p103 = por %p101, %p102
      %p104 = scmp.ne.s32.totalorder %s95, %s96
      %p105 = scmp.eq.s32.totalorder %s22, 0
      %p106 = por %p104, %p105
      %p107 = scmp.ne.s32.totalorder %s95, %s96
      %p108 = scmp.eq.s32.totalorder %s23, 1
      %p109 = por %p107, %p108
      %p111 = scmp.ne.s32.totalorder %s96, %s110
      %p112 = scmp.eq.s32.totalorder %s23, 0
      %p113 = por %p111, %p112
      %s115 = sadd.s32 %s114, 1
      %p118 = scmp.eq.s32.totalorder %s17, 1
      %p119 = scmp.ne.s32.totalorder %s114, %s116
      %p120 = scmp.eq.s32.totalorder %s17, 0
      %p121 = por %p119, %p120
      %p122 = scmp.ne.s32.totalorder %s114, %s116
      %p123 = scmp.eq.s32.totalorder %s22, 1
      %p124 = por %p122, %p123
      %p125 = scmp.ne.s32.totalorder %s116, %s117
      %p126 = scmp.eq.s32.totalorder %s22, 0
      %p127 = por %p125, %p126
      %p128 = scmp.ne.s32.totalorder %s116, %s117
      %p129 = scmp.eq.s32.totalorder %s23, 1
      %p130 = por %p128, %p129
      %p132 = scmp.ne.s32.totalorder %s117, %s131
      %p133 = scmp.eq.s32.totalorder %s23, 0
      %p134 = por %p132, %p133
      %s136 = sadd.s32 %s135, 1
      %p139 = scmp.eq.s32.totalorder %s17, 1
      %p140 = scmp.ne.s32.totalorder %s135, %s137
      %p141 = scmp.eq.s32.totalorder %s17, 0
      %p142 = por %p140, %p141
      %p143 = scmp.ne.s32.totalorder %s135, %s137
      %p144 = scmp.eq.s32.totalorder %s22, 1
      %p145 = por %p143, %p144
      %p146 = scmp.ne.s32.totalorder %s137, %s138
      %p147 = scmp.eq.s32.totalorder %s22, 0
      %p148 = por %p146, %p147
      %p149 = scmp.ne.s32.totalorder %s137, %s138
      %p150 = scmp.eq.s32.totalorder %s23, 1
      %p151 = por %p149, %p150
      %p153 = scmp.ne.s32.totalorder %s138, %s152
      %p154 = scmp.eq.s32.totalorder %s23, 0
      %p155 = por %p153, %p154
      %s157 = sadd.s32 %s156, 1
      %p160 = scmp.eq.s32.totalorder %s17, 1
      %p161 = scmp.ne.s32.totalorder %s156, %s158
      %p162 = scmp.eq.s32.totalorder %s17, 0
      %p163 = por %p161, %p162
      %p164 = scmp.ne.s32.totalorder %s156, %s158
      %p165 = scmp.eq.s32.totalorder %s22, 1
      %p166 = por %p164, %p165
      %p167 = scmp.ne.s32.totalorder %s158, %s159
      %p168 = scmp.eq.s32.totalorder %s22, 0
      %p169 = por %p167, %p168
      %p170 = scmp.ne.s32.totalorder %s158, %s159
      %p171 = scmp.eq.s32.totalorder %s23, 1
      %p172 = por %p170, %p171
      %p174 = scmp.ne.s32.totalorder %s159, %s173
      %p175 = scmp.eq.s32.totalorder %s23, 0
      %p176 = por %p174, %p175
      %s178 = sadd.s32 %s177, 1
      %p181 = scmp.eq.s32.totalorder %s17, 1
      %p182 = scmp.ne.s32.totalorder %s177, %s179
      %p183 = scmp.eq.s32.totalorder %s17, 0
      %p184 = por %p182, %p183
      %p185 = scmp.ne.s32.totalorder %s177, %s179
      %p186 = scmp.eq.s32.totalorder %s22, 1
      %p187 = por %p185, %p186
      %p188 = scmp.ne.s32.totalorder %s179, %s180
      %p189 = scmp.eq.s32.totalorder %s22, 0
      %p190 = por %p188, %p189
      %p191 = scmp.ne.s32.totalorder %s179, %s180
      %p192 = scmp.eq.s32.totalorder %s23, 1
      %p193 = por %p191, %p192
      %p195 = scmp.ne.s32.totalorder %s180, %s194
      %p196 = scmp.eq.s32.totalorder %s23, 0
      %p197 = por %p195, %p196
      %s199 = sadd.s32 %s198, 1
      %p202 = scmp.eq.s32.totalorder %s17, 1
      %p203 = scmp.ne.s32.totalorder %s198, %s200
      %p204 = scmp.eq.s32.totalorder %s17, 0
      %p205 = por %p203, %p204
      %p206 = scmp.ne.s32.totalorder %s198, %s200
      %p207 = scmp.eq.s32.totalorder %s22, 1
      %p208 = por %p206, %p207
      %p209 = scmp.ne.s32.totalorder %s200, %s201
      %p210 = scmp.eq.s32.totalorder %s22, 0
      %p211 = por %p209, %p210
      %p212 = scmp.ne.s32.totalorder %s200, %s201
      %p213 = scmp.eq.s32.totalorder %s23, 1
      %p214 = por %p212, %p213
      %p216 = scmp.ne.s32.totalorder %s201, %s215
      %p217 = scmp.eq.s32.totalorder %s23, 0
      %p218 = por %p216, %p217
      %p219 = scmp.le.s32.totalorder 1, %s17
      %p220 = scmp.lt.s32.totalorder %s17, 3
      %p221 = pnand %p219, %p220
      %p222 = pneg %p221
      // Predicated region
      $region9: #{tpu_custom_call.1} parent=5 // pred_check
        _
      $region10: #{tpu_custom_call.1} parent=5 // pred_check_branch
        %224 = sbr.rel (%p221) target = $region12
      $region11: #{tpu_custom_call.1} parent=5 // pred_region
        %s225 = ssub.s32 %s17, 1
        // Predicated region
        $region13: #{tpu_custom_call.1} parent=11 // pred_check
          %p226 = pneg %p64
        $region14: #{tpu_custom_call.1} parent=11 // pred_check_branch
          %228 = sbr.rel (%p226) target = $region16
        $region15: #{tpu_custom_call.1} parent=11 // pred_region
          %230 = vsyncadd [#allocation7], 0
          %s231 = sshll.u32 %s1, 4
          %s232 = int_to_ptr.hbm [resolvable:$true] %s231
          %s233 = sshll.u32 [#allocation6], 4
          %s234 = int_to_ptr.vmem [resolvable:$true] %s233
          %239 = dma.hbm_to_vmem [thread:$0]  %s232, 4096, %s234, [#allocation7], 256, 256, 16
        $region16: #{tpu_custom_call.1} parent=11 // pred_fallthru
          _
        // Predicated region
        $region17: #{tpu_custom_call.1} parent=11 // pred_check
          %p240 = pneg %p85
        $region18: #{tpu_custom_call.1} parent=11 // pred_check_branch
          %242 = sbr.rel (%p240) target = $region20
        $region19: #{tpu_custom_call.1} parent=11 // pred_region
          %244 = vsyncadd [#allocation10], 0
          %s245 = sshll.u32 %s2, 4
          %s246 = int_to_ptr.hbm [resolvable:$true] %s245
          %s247 = sshll.u32 [#allocation9], 4
          %s248 = int_to_ptr.vmem [resolvable:$true] %s247
          %253 = dma.hbm_to_vmem [thread:$0]  %s246, 4096, %s248, [#allocation10], 256, 256, 16
        $region20: #{tpu_custom_call.1} parent=11 // pred_fallthru
          _
        // Predicated region
        $region21: #{tpu_custom_call.1} parent=11 // pred_check
          %p254 = pneg %p106
        $region22: #{tpu_custom_call.1} parent=11 // pred_check_branch
          %256 = sbr.rel (%p254) target = $region24
        $region23: #{tpu_custom_call.1} parent=11 // pred_region
          _
        $region24: #{tpu_custom_call.1} parent=11 // pred_fallthru
          _
        // Predicated region
        $region25: #{tpu_custom_call.1} parent=11 // pred_check
          %p257 = pneg %p127
        $region26: #{tpu_custom_call.1} parent=11 // pred_check_branch
          %259 = sbr.rel (%p257) target = $region28
        $region27: #{tpu_custom_call.1} parent=11 // pred_region
          %261 = vsyncadd [#allocation10], 0
          %s262 = sshll.u32 %s4, 4
          %s263 = int_to_ptr.hbm [resolvable:$true] %s262
          %s264 = sshll.u32 [#allocation11], 4
          %s265 = int_to_ptr.vmem [resolvable:$true] %s264
          %270 = dma.hbm_to_vmem [thread:$0]  %s263, 8192, %s265, [#allocation10], 256, 256, 16
        $region28: #{tpu_custom_call.1} parent=11 // pred_fallthru
          _
        // Predicated region
        $region29: #{tpu_custom_call.1} parent=11 // pred_check
          %p271 = pneg %p148
        $region30: #{tpu_custom_call.1} parent=11 // pred_check_branch
          %273 = sbr.rel (%p271) target = $region32
        $region31: #{tpu_custom_call.1} parent=11 // pred_region
          _
        $region32: #{tpu_custom_call.1} parent=11 // pred_fallthru
          _
        // Predicated region
        $region33: #{tpu_custom_call.1} parent=11 // pred_check
          %p274 = pneg %p169
        $region34: #{tpu_custom_call.1} parent=11 // pred_check_branch
          %276 = sbr.rel (%p274) target = $region36
        $region35: #{tpu_custom_call.1} parent=11 // pred_region
          _
        $region36: #{tpu_custom_call.1} parent=11 // pred_fallthru
          _
        // Predicated region
        $region37: #{tpu_custom_call.1} parent=11 // pred_check
          %p277 = pneg %p190
        $region38: #{tpu_custom_call.1} parent=11 // pred_check_branch
          %279 = sbr.rel (%p277) target = $region40
        $region39: #{tpu_custom_call.1} parent=11 // pred_region
          _
        $region40: #{tpu_custom_call.1} parent=11 // pred_fallthru
          _
      $region12: #{tpu_custom_call.1} parent=5 // pred_fallthru
        _
      %p280 = scmp.lt.s32.totalorder %s17, 2
      // Predicated region
      $region41: #{tpu_custom_call.1} parent=5 // pred_check
        %p281 = pneg %p280
      $region42: #{tpu_custom_call.1} parent=5 // pred_check_branch
        %283 = sbr.rel (%p281) target = $region44
      $region43: #{tpu_custom_call.1} parent=5 // pred_region
        // Predicated region
        $region45: #{tpu_custom_call.1} parent=43 // pred_check
          %p284 = pneg %p37
        $region46: #{tpu_custom_call.1} parent=43 // pred_check_branch
          %286 = sbr.rel (%p284) target = $region48
        $region47: #{tpu_custom_call.1} parent=43 // pred_region
          %s287 = smul.u32 4, %s17
          %p288 = scmp.lt.s32.totalorder %s287, 7
          %s289 = scalar_select %p288, %s287, 7
          %s290 = smul.addr %s289, 4
          %s291 = scalar_lea.vmem %s0, %s290
          %s292 = smul.u32 4, %s17
        $region48: #{tpu_custom_call.1} parent=43 // pred_fallthru
          _
      $region44: #{tpu_custom_call.1} parent=5 // pred_fallthru
        _
      %p293 = scmp.le.s32.totalorder 1, %s17
      %p294 = scmp.lt.s32.totalorder %s17, 3
      %p295 = pnand %p293, %p294
      %p296 = pneg %p295
      // Predicated region
      $region49: #{tpu_custom_call.1} parent=5 // pred_check
        _
      $region50: #{tpu_custom_call.1} parent=5 // pred_check_branch
        %298 = sbr.rel (%p295) target = $region52
      $region51: #{tpu_custom_call.1} parent=5 // pred_region
        %s299 = ssub.s32 %s17, 1
        // Predicated region
        $region53: #{tpu_custom_call.1} parent=51 // pred_check
          %p300 = pneg %p64
        $region54: #{tpu_custom_call.1} parent=51 // pred_check_branch
          %302 = sbr.rel (%p300) target = $region56
        $region55: #{tpu_custom_call.1} parent=51 // pred_region
          %304 = dma.done [#allocation7], 4096
        $region56: #{tpu_custom_call.1} parent=51 // pred_fallthru
          _
        // Predicated region
        $region57: #{tpu_custom_call.1} parent=51 // pred_check
          %p305 = pneg %p85
        $region58: #{tpu_custom_call.1} parent=51 // pred_check_branch
          %307 = sbr.rel (%p305) target = $region60
        $region59: #{tpu_custom_call.1} parent=51 // pred_region
          %309 = dma.done [#allocation10], 4096
        $region60: #{tpu_custom_call.1} parent=51 // pred_fallthru
          _
        // Predicated region
        $region61: #{tpu_custom_call.1} parent=51 // pred_check
          %p310 = pneg %p127
        $region62: #{tpu_custom_call.1} parent=51 // pred_check_branch
          %312 = sbr.rel (%p310) target = $region64
        $region63: #{tpu_custom_call.1} parent=51 // pred_region
          %314 = dma.done [#allocation10], 8192
        $region64: #{tpu_custom_call.1} parent=51 // pred_fallthru
          _
        %s315 = smul.u32 4, %s22
        %p316 = scmp.lt.s32.totalorder %s315, 7
        %s317 = scalar_select %p316, %s315, 7
        %s318 = smul.addr %s317, 4
        %s319 = scalar_lea.vmem %s0, %s318
        %p320 = pneg %p43
        %p321 = pneg %p40
        %p322 = pneg %p64
        %p323 = pneg %p61
        %p324 = pneg %p85
        %p325 = pneg %p82
        %p326 = pneg %p106
        %p327 = pneg %p103
        %p328 = pneg %p127
        %p329 = pneg %p124
        %p330 = pneg %p148
        %p331 = pneg %p145
        %p332 = pneg %p169
        %p333 = pneg %p166
        %p334 = pneg %p190
        %p335 = pneg %p187
        %p336 = pneg %p211
        %p337 = pneg %p208
        %s338 = smul.u32 4, %s22
        %p339 = scmp.lt.s32.totalorder %s338, 7
        %s340 = scalar_select %p339, %s338, 7
        %s341 = smul.addr %s340, 4
        %s342 = scalar_lea.vmem %s0, %s341
        %s343 = smul.u32 4, %s22
        %p345 = scmp.eq.s32.totalorder %s22, 0
        // Predicated region
        $region65: #{tpu_custom_call.1} parent=51 // pred_check
          %p346 = pneg %p345
        $region66: #{tpu_custom_call.1} parent=51 // pred_check_branch
          %348 = sbr.rel (%p346) target = $region68
        $region67: #{tpu_custom_call.1} parent=51 // pred_region
          %349 = vst [vmem:[#allocation2] sm:$0xff] 0
          %350 = vst [vmem:[#allocation3] sm:$0xff] 0.0
          %351 = vst [vmem:[#allocation4] sm:$0xff] 0.0
        $region68: #{tpu_custom_call.1} parent=51 // pred_fallthru
          _
        %v352 = vld [vmem:[%s342] sm:$0xf]
        %v353 = vld [vmem:[%s342 + $0x4] sm:$0xf]
        %v354 = vld [vmem:[%s342 + $0x8] sm:$0xf]
        %v355 = vld [vmem:[%s342 + $0xc] sm:$0xf]
        %v356 = vld [vmem:[#allocation6] sm:$0xff]
        %v357 = vld [vmem:[#allocation6 + $0x8] sm:$0xff]
        %v358 = vld [vmem:[#allocation6 + $0x10] sm:$0xff]
        %v359 = vld [vmem:[#allocation6 + $0x18] sm:$0xff]
        %v360 = vld [vmem:[#allocation6 + $0x20] sm:$0xff]
        %v361 = vld [vmem:[#allocation6 + $0x28] sm:$0xff]
        %v362 = vld [vmem:[#allocation6 + $0x30] sm:$0xff]
        %v363 = vld [vmem:[#allocation6 + $0x38] sm:$0xff]
        %v364 = vld [vmem:[#allocation6 + $0x40] sm:$0xff]
        %v365 = vld [vmem:[#allocation6 + $0x48] sm:$0xff]
        %v366 = vld [vmem:[#allocation6 + $0x50] sm:$0xff]
        %v367 = vld [vmem:[#allocation6 + $0x58] sm:$0xff]
        %v368 = vld [vmem:[#allocation6 + $0x60] sm:$0xff]
        %v369 = vld [vmem:[#allocation6 + $0x68] sm:$0xff]
        %v370 = vld [vmem:[#allocation6 + $0x70] sm:$0xff]
        %v371 = vld [vmem:[#allocation6 + $0x78] sm:$0xff]
        %v372 = vld [vmem:[#allocation6 + $0x80] sm:$0xff]
        %v373 = vld [vmem:[#allocation6 + $0x88] sm:$0xff]
        %v374 = vld [vmem:[#allocation6 + $0x90] sm:$0xff]
        %v375 = vld [vmem:[#allocation6 + $0x98] sm:$0xff]
        %v376 = vld [vmem:[#allocation6 + $0xa0] sm:$0xff]
        %v377 = vld [vmem:[#allocation6 + $0xa8] sm:$0xff]
        %v378 = vld [vmem:[#allocation6 + $0xb0] sm:$0xff]
        %v379 = vld [vmem:[#allocation6 + $0xb8] sm:$0xff]
        %v380 = vld [vmem:[#allocation6 + $0xc0] sm:$0xff]
        %v381 = vld [vmem:[#allocation6 + $0xc8] sm:$0xff]
        %v382 = vld [vmem:[#allocation6 + $0xd0] sm:$0xff]
        %v383 = vld [vmem:[#allocation6 + $0xd8] sm:$0xff]
        %v384 = vld [vmem:[#allocation6 + $0xe0] sm:$0xff]
        %v385 = vld [vmem:[#allocation6 + $0xe8] sm:$0xff]
        %v386 = vld [vmem:[#allocation6 + $0xf0] sm:$0xff]
        %v387 = vld [vmem:[#allocation6 + $0xf8] sm:$0xff]
        %v388 = vld [vmem:[%s3] sm:$0xf]
        %v390 = vperm.slane %v388, 0
        %v391 = vperm.slane %v388, 1
        %v392 = vperm.slane %v388, 2
        %v393 = vperm.slane %v388, 3
        %v402 = vunpack.c.l.b16 %v352
        %v403 = vunpack.c.l.b16 %v353
        %v404 = vunpack.c.l.b16 %v354
        %v405 = vunpack.c.l.b16 %v355
        %v406 = vpack.c.b16 %v403, %v402
        %v407 = vpack.c.b16 %v405, %v404
        %v442 = vunpack.c.l.b16 %v356
        %v443 = vunpack.c.h.b16 %v356
        %v444 = vunpack.c.l.b16 %v357
        %v445 = vunpack.c.h.b16 %v357
        %v446 = vunpack.c.l.b16 %v358
        %v447 = vunpack.c.h.b16 %v358
        %v448 = vunpack.c.l.b16 %v359
        %v449 = vunpack.c.h.b16 %v359
        %v450 = vunpack.c.l.b16 %v360
        %v451 = vunpack.c.h.b16 %v360
        %v452 = vunpack.c.l.b16 %v361
        %v453 = vunpack.c.h.b16 %v361
        %v454 = vunpack.c.l.b16 %v362
        %v455 = vunpack.c.h.b16 %v362
        %v456 = vunpack.c.l.b16 %v363
        %v457 = vunpack.c.h.b16 %v363
        %v458 = vunpack.c.l.b16 %v364
        %v459 = vunpack.c.h.b16 %v364
        %v460 = vunpack.c.l.b16 %v365
        %v461 = vunpack.c.h.b16 %v365
        %v462 = vunpack.c.l.b16 %v366
        %v463 = vunpack.c.h.b16 %v366
        %v464 = vunpack.c.l.b16 %v367
        %v465 = vunpack.c.h.b16 %v367
        %v466 = vunpack.c.l.b16 %v368
        %v467 = vunpack.c.h.b16 %v368
        %v468 = vunpack.c.l.b16 %v369
        %v469 = vunpack.c.h.b16 %v369
        %v470 = vunpack.c.l.b16 %v370
        %v471 = vunpack.c.h.b16 %v370
        %v472 = vunpack.c.l.b16 %v371
        %v473 = vunpack.c.h.b16 %v371
        %v474 = vunpack.c.l.b16 %v372
        %v475 = vunpack.c.h.b16 %v372
        %v476 = vunpack.c.l.b16 %v373
        %v477 = vunpack.c.h.b16 %v373
        %v478 = vunpack.c.l.b16 %v374
        %v479 = vunpack.c.h.b16 %v374
        %v480 = vunpack.c.l.b16 %v375
        %v481 = vunpack.c.h.b16 %v375
        %v482 = vunpack.c.l.b16 %v376
        %v483 = vunpack.c.h.b16 %v376
        %v484 = vunpack.c.l.b16 %v377
        %v485 = vunpack.c.h.b16 %v377
        %v486 = vunpack.c.l.b16 %v378
        %v487 = vunpack.c.h.b16 %v378
        %v488 = vunpack.c.l.b16 %v379
        %v489 = vunpack.c.h.b16 %v379
        %v490 = vunpack.c.l.b16 %v380
        %v491 = vunpack.c.h.b16 %v380
        %v492 = vunpack.c.l.b16 %v381
        %v493 = vunpack.c.h.b16 %v381
        %v494 = vunpack.c.l.b16 %v382
        %v495 = vunpack.c.h.b16 %v382
        %v496 = vunpack.c.l.b16 %v383
        %v497 = vunpack.c.h.b16 %v383
        %v498 = vunpack.c.l.b16 %v384
        %v499 = vunpack.c.h.b16 %v384
        %v500 = vunpack.c.l.b16 %v385
        %v501 = vunpack.c.h.b16 %v385
        %v502 = vunpack.c.l.b16 %v386
        %v503 = vunpack.c.h.b16 %v386
        %v504 = vunpack.c.l.b16 %v387
        %v505 = vunpack.c.h.b16 %v387
        %v506 = vpack.c.b16 %v446, %v442
        %v507 = vpack.c.b16 %v447, %v443
        %v508 = vpack.c.b16 %v448, %v444
        %v509 = vpack.c.b16 %v449, %v445
        %v510 = vpack.c.b16 %v454, %v450
        %v511 = vpack.c.b16 %v455, %v451
        %v512 = vpack.c.b16 %v456, %v452
        %v513 = vpack.c.b16 %v457, %v453
        %v514 = vpack.c.b16 %v462, %v458
        %v515 = vpack.c.b16 %v463, %v459
        %v516 = vpack.c.b16 %v464, %v460
        %v517 = vpack.c.b16 %v465, %v461
        %v518 = vpack.c.b16 %v470, %v466
        %v519 = vpack.c.b16 %v471, %v467
        %v520 = vpack.c.b16 %v472, %v468
        %v521 = vpack.c.b16 %v473, %v469
        %v522 = vpack.c.b16 %v478, %v474
        %v523 = vpack.c.b16 %v479, %v475
        %v524 = vpack.c.b16 %v480, %v476
        %v525 = vpack.c.b16 %v481, %v477
        %v526 = vpack.c.b16 %v486, %v482
        %v527 = vpack.c.b16 %v487, %v483
        %v528 = vpack.c.b16 %v488, %v484
        %v529 = vpack.c.b16 %v489, %v485
        %v530 = vpack.c.b16 %v494, %v490
        %v531 = vpack.c.b16 %v495, %v491
        %v532 = vpack.c.b16 %v496, %v492
        %v533 = vpack.c.b16 %v497, %v493
        %v534 = vpack.c.b16 %v502, %v498
        %v535 = vpack.c.b16 %v503, %v499
        %v536 = vpack.c.b16 %v504, %v500
        %v537 = vpack.c.b16 %v505, %v501
        %570 = vmatpush.bf16.msra.mxu0 %v534
        %571 = vmatpush.bf16.msra.mxu0 %v530
        %572 = vmatpush.bf16.msra.mxu0 %v526
        %573 = vmatpush.bf16.msra.mxu0 %v522
        %574 = vmatpush.bf16.msra.mxu0 %v518
        %575 = vmatpush.bf16.msra.mxu0 %v514
        %576 = vmatpush.bf16.msra.mxu0 %v510
        %577 = vmatpush.bf16.msra.mxu0 %v506
        %578 = vmatmul.bf16.gmra.mxu0 %v406
        %v579 = vpop.f32.mrf.mxu0
        %v580 = vadd.f32 %v390, %v579
        %v581 = vpop.f32.mrf.mxu0
        %v582 = vadd.f32 %v390, %v581
        %583 = vmatmul.bf16.gmra.mxu0 %v407
        %v584 = vpop.f32.mrf.mxu0
        %v585 = vadd.f32 %v390, %v584
        %v586 = vpop.f32.mrf.mxu0
        %v587 = vadd.f32 %v390, %v586
        %588 = vdwg.mxu0
        %589 = vmatpush.bf16.msra.mxu0 %v535
        %590 = vmatpush.bf16.msra.mxu0 %v531
        %591 = vmatpush.bf16.msra.mxu0 %v527
        %592 = vmatpush.bf16.msra.mxu0 %v523
        %593 = vmatpush.bf16.msra.mxu0 %v519
        %594 = vmatpush.bf16.msra.mxu0 %v515
        %595 = vmatpush.bf16.msra.mxu0 %v511
        %596 = vmatpush.bf16.msra.mxu0 %v507
        %597 = vmatmul.bf16.gmra.mxu0 %v406
        %v598 = vpop.f32.mrf.mxu0
        %v599 = vadd.f32 %v391, %v598
        %v600 = vpop.f32.mrf.mxu0
        %v601 = vadd.f32 %v391, %v600
        %602 = vmatmul.bf16.gmra.mxu0 %v407
        %v603 = vpop.f32.mrf.mxu0
        %v604 = vadd.f32 %v391, %v603
        %v605 = vpop.f32.mrf.mxu0
        %v606 = vadd.f32 %v391, %v605
        %607 = vdwg.mxu0
        %608 = vmatpush.bf16.msra.mxu0 %v536
        %609 = vmatpush.bf16.msra.mxu0 %v532
        %610 = vmatpush.bf16.msra.mxu0 %v528
        %611 = vmatpush.bf16.msra.mxu0 %v524
        %612 = vmatpush.bf16.msra.mxu0 %v520
        %613 = vmatpush.bf16.msra.mxu0 %v516
        %614 = vmatpush.bf16.msra.mxu0 %v512
        %615 = vmatpush.bf16.msra.mxu0 %v508
        %616 = vmatmul.bf16.gmra.mxu0 %v406
        %v617 = vpop.f32.mrf.mxu0
        %v618 = vadd.f32 %v392, %v617
        %v619 = vpop.f32.mrf.mxu0
        %v620 = vadd.f32 %v392, %v619
        %621 = vmatmul.bf16.gmra.mxu0 %v407
        %v622 = vpop.f32.mrf.mxu0
        %v623 = vadd.f32 %v392, %v622
        %v624 = vpop.f32.mrf.mxu0
        %v625 = vadd.f32 %v392, %v624
        %626 = vdwg.mxu0
        %627 = vmatpush.bf16.msra.mxu0 %v537
        %628 = vmatpush.bf16.msra.mxu0 %v533
        %629 = vmatpush.bf16.msra.mxu0 %v529
        %630 = vmatpush.bf16.msra.mxu0 %v525
        %631 = vmatpush.bf16.msra.mxu0 %v521
        %632 = vmatpush.bf16.msra.mxu0 %v517
        %633 = vmatpush.bf16.msra.mxu0 %v513
        %634 = vmatpush.bf16.msra.mxu0 %v509
        %635 = vmatmul.bf16.gmra.mxu0 %v406
        %v636 = vpop.f32.mrf.mxu0
        %v637 = vadd.f32 %v393, %v636
        %v638 = vpop.f32.mrf.mxu0
        %v639 = vadd.f32 %v393, %v638
        %640 = vmatmul.bf16.gmra.mxu0 %v407
        %v641 = vpop.f32.mrf.mxu0
        %v642 = vadd.f32 %v393, %v641
        %v643 = vpop.f32.mrf.mxu0
        %v644 = vadd.f32 %v393, %v643
        %645 = vdwg.mxu0
        %646 = vst [vmem:[#allocation5] sm:$0xff] %v580
        %647 = vst [vmem:[#allocation5 + $0x8] sm:$0xff] %v599
        %648 = vst [vmem:[#allocation5 + $0x10] sm:$0xff] %v618
        %649 = vst [vmem:[#allocation5 + $0x18] sm:$0xff] %v637
        %650 = vst [vmem:[#allocation5 + $0x20] sm:$0xff] %v582
        %651 = vst [vmem:[#allocation5 + $0x28] sm:$0xff] %v601
        %652 = vst [vmem:[#allocation5 + $0x30] sm:$0xff] %v620
        %653 = vst [vmem:[#allocation5 + $0x38] sm:$0xff] %v639
        %654 = vst [vmem:[#allocation5 + $0x40] sm:$0xff] %v585
        %655 = vst [vmem:[#allocation5 + $0x48] sm:$0xff] %v604
        %656 = vst [vmem:[#allocation5 + $0x50] sm:$0xff] %v623
        %657 = vst [vmem:[#allocation5 + $0x58] sm:$0xff] %v642
        %658 = vst [vmem:[#allocation5 + $0x60] sm:$0xff] %v587
        %659 = vst [vmem:[#allocation5 + $0x68] sm:$0xff] %v606
        %660 = vst [vmem:[#allocation5 + $0x70] sm:$0xff] %v625
        %661 = vst [vmem:[#allocation5 + $0x78] sm:$0xff] %v644
        %v662 = vld [vmem:[#allocation9] sm:$0xff]
        %v663 = vld [vmem:[#allocation9 + $0x8] sm:$0xff]
        %v664 = vld [vmem:[#allocation9 + $0x10] sm:$0xff]
        %v665 = vld [vmem:[#allocation9 + $0x18] sm:$0xff]
        %v666 = vld [vmem:[#allocation9 + $0x20] sm:$0xff]
        %v667 = vld [vmem:[#allocation9 + $0x28] sm:$0xff]
        %v668 = vld [vmem:[#allocation9 + $0x30] sm:$0xff]
        %v669 = vld [vmem:[#allocation9 + $0x38] sm:$0xff]
        %v670 = vld [vmem:[#allocation9 + $0x40] sm:$0xff]
        %v671 = vld [vmem:[#allocation9 + $0x48] sm:$0xff]
        %v672 = vld [vmem:[#allocation9 + $0x50] sm:$0xff]
        %v673 = vld [vmem:[#allocation9 + $0x58] sm:$0xff]
        %v674 = vld [vmem:[#allocation9 + $0x60] sm:$0xff]
        %v675 = vld [vmem:[#allocation9 + $0x68] sm:$0xff]
        %v676 = vld [vmem:[#allocation9 + $0x70] sm:$0xff]
        %v677 = vld [vmem:[#allocation9 + $0x78] sm:$0xff]
        %v678 = vld [vmem:[#allocation9 + $0x80] sm:$0xff]
        %v679 = vld [vmem:[#allocation9 + $0x88] sm:$0xff]
        %v680 = vld [vmem:[#allocation9 + $0x90] sm:$0xff]
        %v681 = vld [vmem:[#allocation9 + $0x98] sm:$0xff]
        %v682 = vld [vmem:[#allocation9 + $0xa0] sm:$0xff]
        %v683 = vld [vmem:[#allocation9 + $0xa8] sm:$0xff]
        %v684 = vld [vmem:[#allocation9 + $0xb0] sm:$0xff]
        %v685 = vld [vmem:[#allocation9 + $0xb8] sm:$0xff]
        %v686 = vld [vmem:[#allocation9 + $0xc0] sm:$0xff]
        %v687 = vld [vmem:[#allocation9 + $0xc8] sm:$0xff]
        %v688 = vld [vmem:[#allocation9 + $0xd0] sm:$0xff]
        %v689 = vld [vmem:[#allocation9 + $0xd8] sm:$0xff]
        %v690 = vld [vmem:[#allocation9 + $0xe0] sm:$0xff]
        %v691 = vld [vmem:[#allocation9 + $0xe8] sm:$0xff]
        %v692 = vld [vmem:[#allocation9 + $0xf0] sm:$0xff]
        %v693 = vld [vmem:[#allocation9 + $0xf8] sm:$0xff]
        %v694 = vld [vmem:[#allocation11] sm:$0xff]
        %v695 = vld [vmem:[#allocation11 + $0x8] sm:$0xff]
        %v696 = vld [vmem:[#allocation11 + $0x10] sm:$0xff]
        %v697 = vld [vmem:[#allocation11 + $0x18] sm:$0xff]
        %v698 = vld [vmem:[#allocation11 + $0x20] sm:$0xff]
        %v699 = vld [vmem:[#allocation11 + $0x28] sm:$0xff]
        %v700 = vld [vmem:[#allocation11 + $0x30] sm:$0xff]
        %v701 = vld [vmem:[#allocation11 + $0x38] sm:$0xff]
        %v702 = vld [vmem:[#allocation11 + $0x40] sm:$0xff]
        %v703 = vld [vmem:[#allocation11 + $0x48] sm:$0xff]
        %v704 = vld [vmem:[#allocation11 + $0x50] sm:$0xff]
        %v705 = vld [vmem:[#allocation11 + $0x58] sm:$0xff]
        %v706 = vld [vmem:[#allocation11 + $0x60] sm:$0xff]
        %v707 = vld [vmem:[#allocation11 + $0x68] sm:$0xff]
        %v708 = vld [vmem:[#allocation11 + $0x70] sm:$0xff]
        %v709 = vld [vmem:[#allocation11 + $0x78] sm:$0xff]
        %v710 = vld [vmem:[#allocation11 + $0x80] sm:$0xff]
        %v711 = vld [vmem:[#allocation11 + $0x88] sm:$0xff]
        %v712 = vld [vmem:[#allocation11 + $0x90] sm:$0xff]
        %v713 = vld [vmem:[#allocation11 + $0x98] sm:$0xff]
        %v714 = vld [vmem:[#allocation11 + $0xa0] sm:$0xff]
        %v715 = vld [vmem:[#allocation11 + $0xa8] sm:$0xff]
        %v716 = vld [vmem:[#allocation11 + $0xb0] sm:$0xff]
        %v717 = vld [vmem:[#allocation11 + $0xb8] sm:$0xff]
        %v718 = vld [vmem:[#allocation11 + $0xc0] sm:$0xff]
        %v719 = vld [vmem:[#allocation11 + $0xc8] sm:$0xff]
        %v720 = vld [vmem:[#allocation11 + $0xd0] sm:$0xff]
        %v721 = vld [vmem:[#allocation11 + $0xd8] sm:$0xff]
        %v722 = vld [vmem:[#allocation11 + $0xe0] sm:$0xff]
        %v723 = vld [vmem:[#allocation11 + $0xe8] sm:$0xff]
        %v724 = vld [vmem:[#allocation11 + $0xf0] sm:$0xff]
        %v725 = vld [vmem:[#allocation11 + $0xf8] sm:$0xff]
        %v726 = vld [vmem:[#allocation11 + $0x100] sm:$0xff]
        %v727 = vld [vmem:[#allocation11 + $0x108] sm:$0xff]
        %v728 = vld [vmem:[#allocation11 + $0x110] sm:$0xff]
        %v729 = vld [vmem:[#allocation11 + $0x118] sm:$0xff]
        %v730 = vld [vmem:[#allocation11 + $0x120] sm:$0xff]
        %v731 = vld [vmem:[#allocation11 + $0x128] sm:$0xff]
        %v732 = vld [vmem:[#allocation11 + $0x130] sm:$0xff]
        %v733 = vld [vmem:[#allocation11 + $0x138] sm:$0xff]
        %v734 = vld [vmem:[#allocation11 + $0x140] sm:$0xff]
        %v735 = vld [vmem:[#allocation11 + $0x148] sm:$0xff]
        %v736 = vld [vmem:[#allocation11 + $0x150] sm:$0xff]
        %v737 = vld [vmem:[#allocation11 + $0x158] sm:$0xff]
        %v738 = vld [vmem:[#allocation11 + $0x160] sm:$0xff]
        %v739 = vld [vmem:[#allocation11 + $0x168] sm:$0xff]
        %v740 = vld [vmem:[#allocation11 + $0x170] sm:$0xff]
        %v741 = vld [vmem:[#allocation11 + $0x178] sm:$0xff]
        %v742 = vld [vmem:[#allocation11 + $0x180] sm:$0xff]
        %v743 = vld [vmem:[#allocation11 + $0x188] sm:$0xff]
        %v744 = vld [vmem:[#allocation11 + $0x190] sm:$0xff]
        %v745 = vld [vmem:[#allocation11 + $0x198] sm:$0xff]
        %v746 = vld [vmem:[#allocation11 + $0x1a0] sm:$0xff]
        %v747 = vld [vmem:[#allocation11 + $0x1a8] sm:$0xff]
        %v748 = vld [vmem:[#allocation11 + $0x1b0] sm:$0xff]
        %v749 = vld [vmem:[#allocation11 + $0x1b8] sm:$0xff]
        %v750 = vld [vmem:[#allocation11 + $0x1c0] sm:$0xff]
        %v751 = vld [vmem:[#allocation11 + $0x1c8] sm:$0xff]
        %v752 = vld [vmem:[#allocation11 + $0x1d0] sm:$0xff]
        %v753 = vld [vmem:[#allocation11 + $0x1d8] sm:$0xff]
        %v754 = vld [vmem:[#allocation11 + $0x1e0] sm:$0xff]
        %v755 = vld [vmem:[#allocation11 + $0x1e8] sm:$0xff]
        %v756 = vld [vmem:[#allocation11 + $0x1f0] sm:$0xff]
        %v757 = vld [vmem:[#allocation11 + $0x1f8] sm:$0xff]
        %v758 = vld [vmem:[%s5] sm:$0xf]
        %s759 = smul.u32 0, 4
        %s760 = smul.addr %s759, 8
        %s761 = scalar_lea.vmem [#allocation5], %s760
        %v762 = vld [vmem:[%s761] sm:$0xff]
        %v763 = vld [vmem:[%s761 + $0x8] sm:$0xff]
        %v764 = vld [vmem:[%s761 + $0x10] sm:$0xff]
        %v765 = vld [vmem:[%s761 + $0x18] sm:$0xff]
        %v766 = vld [vmem:[#allocation2] sm:$0xf]
        %v799 = vunpack.c.l.b16 %v662
        %v800 = vunpack.c.h.b16 %v662
        %v801 = vunpack.c.l.b16 %v663
        %v802 = vunpack.c.h.b16 %v663
        %v803 = vunpack.c.l.b16 %v664
        %v804 = vunpack.c.h.b16 %v664
        %v805 = vunpack.c.l.b16 %v665
        %v806 = vunpack.c.h.b16 %v665
        %v807 = vunpack.c.l.b16 %v666
        %v808 = vunpack.c.h.b16 %v666
        %v809 = vunpack.c.l.b16 %v667
        %v810 = vunpack.c.h.b16 %v667
        %v811 = vunpack.c.l.b16 %v668
        %v812 = vunpack.c.h.b16 %v668
        %v813 = vunpack.c.l.b16 %v669
        %v814 = vunpack.c.h.b16 %v669
        %v815 = vunpack.c.l.b16 %v670
        %v816 = vunpack.c.h.b16 %v670
        %v817 = vunpack.c.l.b16 %v671
        %v818 = vunpack.c.h.b16 %v671
        %v819 = vunpack.c.l.b16 %v672
        %v820 = vunpack.c.h.b16 %v672
        %v821 = vunpack.c.l.b16 %v673
        %v822 = vunpack.c.h.b16 %v673
        %v823 = vunpack.c.l.b16 %v674
        %v824 = vunpack.c.h.b16 %v674
        %v825 = vunpack.c.l.b16 %v675
        %v826 = vunpack.c.h.b16 %v675
        %v827 = vunpack.c.l.b16 %v676
        %v828 = vunpack.c.h.b16 %v676
        %v829 = vunpack.c.l.b16 %v677
        %v830 = vunpack.c.h.b16 %v677
        %v831 = vunpack.c.l.b16 %v678
        %v832 = vunpack.c.h.b16 %v678
        %v833 = vunpack.c.l.b16 %v679
        %v834 = vunpack.c.h.b16 %v679
        %v835 = vunpack.c.l.b16 %v680
        %v836 = vunpack.c.h.b16 %v680
        %v837 = vunpack.c.l.b16 %v681
        %v838 = vunpack.c.h.b16 %v681
        %v839 = vunpack.c.l.b16 %v682
        %v840 = vunpack.c.h.b16 %v682
        %v841 = vunpack.c.l.b16 %v683
        %v842 = vunpack.c.h.b16 %v683
        %v843 = vunpack.c.l.b16 %v684
        %v844 = vunpack.c.h.b16 %v684
        %v845 = vunpack.c.l.b16 %v685
        %v846 = vunpack.c.h.b16 %v685
        %v847 = vunpack.c.l.b16 %v686
        %v848 = vunpack.c.h.b16 %v686
        %v849 = vunpack.c.l.b16 %v687
        %v850 = vunpack.c.h.b16 %v687
        %v851 = vunpack.c.l.b16 %v688
        %v852 = vunpack.c.h.b16 %v688
        %v853 = vunpack.c.l.b16 %v689
        %v854 = vunpack.c.h.b16 %v689
        %v855 = vunpack.c.l.b16 %v690
        %v856 = vunpack.c.h.b16 %v690
        %v857 = vunpack.c.l.b16 %v691
        %v858 = vunpack.c.h.b16 %v691
        %v859 = vunpack.c.l.b16 %v692
        %v860 = vunpack.c.h.b16 %v692
        %v861 = vunpack.c.l.b16 %v693
        %v862 = vunpack.c.h.b16 %v693
        %v863 = vpack.c.b16 %v803, %v799
        %v864 = vpack.c.b16 %v804, %v800
        %v865 = vpack.c.b16 %v805, %v801
        %v866 = vpack.c.b16 %v806, %v802
        %v867 = vpack.c.b16 %v811, %v807
        %v868 = vpack.c.b16 %v812, %v808
        %v869 = vpack.c.b16 %v813, %v809
        %v870 = vpack.c.b16 %v814, %v810
        %v871 = vpack.c.b16 %v819, %v815
        %v872 = vpack.c.b16 %v820, %v816
        %v873 = vpack.c.b16 %v821, %v817
        %v874 = vpack.c.b16 %v822, %v818
        %v875 = vpack.c.b16 %v827, %v823
        %v876 = vpack.c.b16 %v828, %v824
        %v877 = vpack.c.b16 %v829, %v825
        %v878 = vpack.c.b16 %v830, %v826
        %v879 = vpack.c.b16 %v835, %v831
        %v880 = vpack.c.b16 %v836, %v832
        %v881 = vpack.c.b16 %v837, %v833
        %v882 = vpack.c.b16 %v838, %v834
        %v883 = vpack.c.b16 %v843, %v839
        %v884 = vpack.c.b16 %v844, %v840
        %v885 = vpack.c.b16 %v845, %v841
        %v886 = vpack.c.b16 %v846, %v842
        %v887 = vpack.c.b16 %v851, %v847
        %v888 = vpack.c.b16 %v852, %v848
        %v889 = vpack.c.b16 %v853, %v849
        %v890 = vpack.c.b16 %v854, %v850
        %v891 = vpack.c.b16 %v859, %v855
        %v892 = vpack.c.b16 %v860, %v856
        %v893 = vpack.c.b16 %v861, %v857
        %v894 = vpack.c.b16 %v862, %v858
        %927 = vmatpush.bf16.msra.mxu0 %v891
        %928 = vmatpush.bf16.msra.mxu0 %v887
        %929 = vmatpush.bf16.msra.mxu0 %v883
        %930 = vmatpush.bf16.msra.mxu0 %v879
        %931 = vmatpush.bf16.msra.mxu0 %v875
        %932 = vmatpush.bf16.msra.mxu0 %v871
        %933 = vmatpush.bf16.msra.mxu0 %v867
        %934 = vmatpush.bf16.msra.mxu0 %v863
        %935 = vmatmul.bf16.gmra.mxu0 %v766
        %v936 = vpop.f32.mrf.mxu0
        %v937 = vadd.f32 0.0, %v936
        %v938 = vpop.f32.mrf.mxu0
        %939 = vdwg.mxu0
        %940 = vmatpush.bf16.msra.mxu0 %v892
        %941 = vmatpush.bf16.msra.mxu0 %v888
        %942 = vmatpush.bf16.msra.mxu0 %v884
        %943 = vmatpush.bf16.msra.mxu0 %v880
        %944 = vmatpush.bf16.msra.mxu0 %v876
        %945 = vmatpush.bf16.msra.mxu0 %v872
        %946 = vmatpush.bf16.msra.mxu0 %v868
        %947 = vmatpush.bf16.msra.mxu0 %v864
        %948 = vmatmul.bf16.gmra.mxu0 %v766
        %v949 = vpop.f32.mrf.mxu0
        %v950 = vadd.f32 0.0, %v949
        %v951 = vpop.f32.mrf.mxu0
        %952 = vdwg.mxu0
        %953 = vmatpush.bf16.msra.mxu0 %v893
        %954 = vmatpush.bf16.msra.mxu0 %v889
        %955 = vmatpush.bf16.msra.mxu0 %v885
        %956 = vmatpush.bf16.msra.mxu0 %v881
        %957 = vmatpush.bf16.msra.mxu0 %v877
        %958 = vmatpush.bf16.msra.mxu0 %v873
        %959 = vmatpush.bf16.msra.mxu0 %v869
        %960 = vmatpush.bf16.msra.mxu0 %v865
        %961 = vmatmul.bf16.gmra.mxu0 %v766
        %v962 = vpop.f32.mrf.mxu0
        %v963 = vadd.f32 0.0, %v962
        %v964 = vpop.f32.mrf.mxu0
        %965 = vdwg.mxu0
        %966 = vmatpush.bf16.msra.mxu0 %v894
        %967 = vmatpush.bf16.msra.mxu0 %v890
        %968 = vmatpush.bf16.msra.mxu0 %v886
        %969 = vmatpush.bf16.msra.mxu0 %v882
        %970 = vmatpush.bf16.msra.mxu0 %v878
        %971 = vmatpush.bf16.msra.mxu0 %v874
        %972 = vmatpush.bf16.msra.mxu0 %v870
        %973 = vmatpush.bf16.msra.mxu0 %v866
        %974 = vmatmul.bf16.gmra.mxu0 %v766
        %v975 = vpop.f32.mrf.mxu0
        %v976 = vadd.f32 0.0, %v975
        %v977 = vpop.f32.mrf.mxu0
        %978 = vdwg.mxu0
        %v979 = vadd.f32 %v762, %v937
        %v980 = vadd.f32 %v763, %v950
        %v981 = vadd.f32 %v764, %v963
        %v982 = vadd.f32 %v765, %v976
        %v983 = vld [vmem:[#allocation3] sm:$0xff]
        %v984 = vxor.u32 %v979, 2147483648
        %v985 = vmul.f32 %v984, 1.442695
        %v986 = vpow.pop %v985
        %v987 = vadd.f32 %v986, 1.0
        %v988 = vrcp.pop %v987
        %v989 = vmul.f32 %v987, %v988
        %v990 = vsub.f32 1.0, %v989
        %v991 = vmul.f32 %v988, %v990
        %v992 = vadd.f32 %v988, %v991
        %vm993 = vweird.f32 %v987
        %vm994 = vweird.f32 %v988
        %vm995 = vmor %vm993, %vm994
        %v996 = vsel %vm995, %v988, %v992
        %v997 = vand.u32 2147483647, %v987
        %vm998 = vcmp.eq.f32.partialorder %v997, 8.507059e+37
        %v999 = vand.u32 %v987, 2147483648
        %v1000 = vor.u32 1.1754944e-38, %v999
        %v1001 = vsel %vm998, %v1000, %v996
        %v1002 = vmul.f32 1.0, %v1001
        %v1003 = vxor.u32 %v980, 2147483648
        %v1004 = vmul.f32 %v1003, 1.442695
        %v1005 = vpow.pop %v1004
        %v1006 = vadd.f32 %v1005, 1.0
        %v1007 = vrcp.pop %v1006
        %v1008 = vmul.f32 %v1006, %v1007
        %v1009 = vsub.f32 1.0, %v1008
        %v1010 = vmul.f32 %v1007, %v1009
        %v1011 = vadd.f32 %v1007, %v1010
        %vm1012 = vweird.f32 %v1006
        %vm1013 = vweird.f32 %v1007
        %vm1014 = vmor %vm1012, %vm1013
        %v1015 = vsel %vm1014, %v1007, %v1011
        %v1016 = vand.u32 2147483647, %v1006
        %vm1017 = vcmp.eq.f32.partialorder %v1016, 8.507059e+37
        %v1018 = vand.u32 %v1006, 2147483648
        %v1019 = vor.u32 1.1754944e-38, %v1018
        %v1020 = vsel %vm1017, %v1019, %v1015
        %v1021 = vmul.f32 1.0, %v1020
        %v1022 = vtanh.pop %v981
        %v1023 = vxor.u32 %v982, 2147483648
        %v1024 = vmul.f32 %v1023, 1.442695
        %v1025 = vpow.pop %v1024
        %v1026 = vadd.f32 %v1025, 1.0
        %v1027 = vrcp.pop %v1026
        %v1028 = vmul.f32 %v1026, %v1027
        %v1029 = vsub.f32 1.0, %v1028
        %v1030 = vmul.f32 %v1027, %v1029
        %v1031 = vadd.f32 %v1027, %v1030
        %vm1032 = vweird.f32 %v1026
        %vm1033 = vweird.f32 %v1027
        %vm1034 = vmor %vm1032, %vm1033
        %v1035 = vsel %vm1034, %v1027, %v1031
        %v1036 = vand.u32 2147483647, %v1026
        %vm1037 = vcmp.eq.f32.partialorder %v1036, 8.507059e+37
        %v1038 = vand.u32 %v1026, 2147483648
        %v1039 = vor.u32 1.1754944e-38, %v1038
        %v1040 = vsel %vm1037, %v1039, %v1035
        %v1041 = vmul.f32 1.0, %v1040
        %v1042 = vmul.f32 %v1021, %v983
        %v1043 = vmul.f32 %v1002, %v1022
        %v1044 = vadd.f32 %v1042, %v1043
        %v1045 = vtanh.pop %v1044
        %v1046 = vmul.f32 %v1041, %v1045
        %1047 = vst [vmem:[#allocation3] sm:$0xff] %v1044
        %v1048 = vpack.c.bf16 %v1046, %v1046
        %1049 = vst [vmem:[#allocation2] sm:$0xf] %v1048
        %v1050 = vld [vmem:[#allocation2] sm:$0xff]
        %v1052 = vperm.slane %v758, 0
        %v1053 = vperm.slane %v758, 1
        %v1054 = vperm.slane %v758, 2
        %v1055 = vperm.slane %v758, 3
        %v1061 = vunpack.c.l.b16 %v1050
        %v1062 = vunpack.c.h.b16 %v1050
        %v1063 = vpack.c.b16 %v1061, %v1061
        %v1064 = vpack.c.b16 %v1062, %v1062
        %v1131 = vunpack.c.l.b16 %v694
        %v1132 = vunpack.c.h.b16 %v694
        %v1133 = vunpack.c.l.b16 %v695
        %v1134 = vunpack.c.h.b16 %v695
        %v1135 = vunpack.c.l.b16 %v696
        %v1136 = vunpack.c.h.b16 %v696
        %v1137 = vunpack.c.l.b16 %v697
        %v1138 = vunpack.c.h.b16 %v697
        %v1139 = vunpack.c.l.b16 %v698
        %v1140 = vunpack.c.h.b16 %v698
        %v1141 = vunpack.c.l.b16 %v699
        %v1142 = vunpack.c.h.b16 %v699
        %v1143 = vunpack.c.l.b16 %v700
        %v1144 = vunpack.c.h.b16 %v700
        %v1145 = vunpack.c.l.b16 %v701
        %v1146 = vunpack.c.h.b16 %v701
        %v1147 = vunpack.c.l.b16 %v702
        %v1148 = vunpack.c.h.b16 %v702
        %v1149 = vunpack.c.l.b16 %v703
        %v1150 = vunpack.c.h.b16 %v703
        %v1151 = vunpack.c.l.b16 %v704
        %v1152 = vunpack.c.h.b16 %v704
        %v1153 = vunpack.c.l.b16 %v705
        %v1154 = vunpack.c.h.b16 %v705
        %v1155 = vunpack.c.l.b16 %v706
        %v1156 = vunpack.c.h.b16 %v706
        %v1157 = vunpack.c.l.b16 %v707
        %v1158 = vunpack.c.h.b16 %v707
        %v1159 = vunpack.c.l.b16 %v708
        %v1160 = vunpack.c.h.b16 %v708
        %v1161 = vunpack.c.l.b16 %v709
        %v1162 = vunpack.c.h.b16 %v709
        %v1163 = vunpack.c.l.b16 %v710
        %v1164 = vunpack.c.h.b16 %v710
        %v1165 = vunpack.c.l.b16 %v711
        %v1166 = vunpack.c.h.b16 %v711
        %v1167 = vunpack.c.l.b16 %v712
        %v1168 = vunpack.c.h.b16 %v712
        %v1169 = vunpack.c.l.b16 %v713
        %v1170 = vunpack.c.h.b16 %v713
        %v1171 = vunpack.c.l.b16 %v714
        %v1172 = vunpack.c.h.b16 %v714
        %v1173 = vunpack.c.l.b16 %v715
        %v1174 = vunpack.c.h.b16 %v715
        %v1175 = vunpack.c.l.b16 %v716
        %v1176 = vunpack.c.h.b16 %v716
        %v1177 = vunpack.c.l.b16 %v717
        %v1178 = vunpack.c.h.b16 %v717
        %v1179 = vunpack.c.l.b16 %v718
        %v1180 = vunpack.c.h.b16 %v718
        %v1181 = vunpack.c.l.b16 %v719
        %v1182 = vunpack.c.h.b16 %v719
        %v1183 = vunpack.c.l.b16 %v720
        %v1184 = vunpack.c.h.b16 %v720
        %v1185 = vunpack.c.l.b16 %v721
        %v1186 = vunpack.c.h.b16 %v721
        %v1187 = vunpack.c.l.b16 %v722
        %v1188 = vunpack.c.h.b16 %v722
        %v1189 = vunpack.c.l.b16 %v723
        %v1190 = vunpack.c.h.b16 %v723
        %v1191 = vunpack.c.l.b16 %v724
        %v1192 = vunpack.c.h.b16 %v724
        %v1193 = vunpack.c.l.b16 %v725
        %v1194 = vunpack.c.h.b16 %v725
        %v1195 = vunpack.c.l.b16 %v726
        %v1196 = vunpack.c.h.b16 %v726
        %v1197 = vunpack.c.l.b16 %v727
        %v1198 = vunpack.c.h.b16 %v727
        %v1199 = vunpack.c.l.b16 %v728
        %v1200 = vunpack.c.h.b16 %v728
        %v1201 = vunpack.c.l.b16 %v729
        %v1202 = vunpack.c.h.b16 %v729
        %v1203 = vunpack.c.l.b16 %v730
        %v1204 = vunpack.c.h.b16 %v730
        %v1205 = vunpack.c.l.b16 %v731
        %v1206 = vunpack.c.h.b16 %v731
        %v1207 = vunpack.c.l.b16 %v732
        %v1208 = vunpack.c.h.b16 %v732
        %v1209 = vunpack.c.l.b16 %v733
        %v1210 = vunpack.c.h.b16 %v733
        %v1211 = vunpack.c.l.b16 %v734
        %v1212 = vunpack.c.h.b16 %v734
        %v1213 = vunpack.c.l.b16 %v735
        %v1214 = vunpack.c.h.b16 %v735
        %v1215 = vunpack.c.l.b16 %v736
        %v1216 = vunpack.c.h.b16 %v736
        %v1217 = vunpack.c.l.b16 %v737
        %v1218 = vunpack.c.h.b16 %v737
        %v1219 = vunpack.c.l.b16 %v738
        %v1220 = vunpack.c.h.b16 %v738
        %v1221 = vunpack.c.l.b16 %v739
        %v1222 = vunpack.c.h.b16 %v739
        %v1223 = vunpack.c.l.b16 %v740
        %v1224 = vunpack.c.h.b16 %v740
        %v1225 = vunpack.c.l.b16 %v741
        %v1226 = vunpack.c.h.b16 %v741
        %v1227 = vunpack.c.l.b16 %v742
        %v1228 = vunpack.c.h.b16 %v742
        %v1229 = vunpack.c.l.b16 %v743
        %v1230 = vunpack.c.h.b16 %v743
        %v1231 = vunpack.c.l.b16 %v744
        %v1232 = vunpack.c.h.b16 %v744
        %v1233 = vunpack.c.l.b16 %v745
        %v1234 = vunpack.c.h.b16 %v745
        %v1235 = vunpack.c.l.b16 %v746
        %v1236 = vunpack.c.h.b16 %v746
        %v1237 = vunpack.c.l.b16 %v747
        %v1238 = vunpack.c.h.b16 %v747
        %v1239 = vunpack.c.l.b16 %v748
        %v1240 = vunpack.c.h.b16 %v748
        %v1241 = vunpack.c.l.b16 %v749
        %v1242 = vunpack.c.h.b16 %v749
        %v1243 = vunpack.c.l.b16 %v750
        %v1244 = vunpack.c.h.b16 %v750
        %v1245 = vunpack.c.l.b16 %v751
        %v1246 = vunpack.c.h.b16 %v751
        %v1247 = vunpack.c.l.b16 %v752
        %v1248 = vunpack.c.h.b16 %v752
        %v1249 = vunpack.c.l.b16 %v753
        %v1250 = vunpack.c.h.b16 %v753
        %v1251 = vunpack.c.l.b16 %v754
        %v1252 = vunpack.c.h.b16 %v754
        %v1253 = vunpack.c.l.b16 %v755
        %v1254 = vunpack.c.h.b16 %v755
        %v1255 = vunpack.c.l.b16 %v756
        %v1256 = vunpack.c.h.b16 %v756
        %v1257 = vunpack.c.l.b16 %v757
        %v1258 = vunpack.c.h.b16 %v757
        %v1259 = vpack.c.b16 %v1135, %v1131
        %v1260 = vpack.c.b16 %v1136, %v1132
        %v1261 = vpack.c.b16 %v1137, %v1133
        %v1262 = vpack.c.b16 %v1138, %v1134
        %v1263 = vpack.c.b16 %v1143, %v1139
        %v1264 = vpack.c.b16 %v1144, %v1140
        %v1265 = vpack.c.b16 %v1145, %v1141
        %v1266 = vpack.c.b16 %v1146, %v1142
        %v1267 = vpack.c.b16 %v1151, %v1147
        %v1268 = vpack.c.b16 %v1152, %v1148
        %v1269 = vpack.c.b16 %v1153, %v1149
        %v1270 = vpack.c.b16 %v1154, %v1150
        %v1271 = vpack.c.b16 %v1159, %v1155
        %v1272 = vpack.c.b16 %v1160, %v1156
        %v1273 = vpack.c.b16 %v1161, %v1157
        %v1274 = vpack.c.b16 %v1162, %v1158
        %v1275 = vpack.c.b16 %v1167, %v1163
        %v1276 = vpack.c.b16 %v1168, %v1164
        %v1277 = vpack.c.b16 %v1169, %v1165
        %v1278 = vpack.c.b16 %v1170, %v1166
        %v1279 = vpack.c.b16 %v1175, %v1171
        %v1280 = vpack.c.b16 %v1176, %v1172
        %v1281 = vpack.c.b16 %v1177, %v1173
        %v1282 = vpack.c.b16 %v1178, %v1174
        %v1283 = vpack.c.b16 %v1183, %v1179
        %v1284 = vpack.c.b16 %v1184, %v1180
        %v1285 = vpack.c.b16 %v1185, %v1181
        %v1286 = vpack.c.b16 %v1186, %v1182
        %v1287 = vpack.c.b16 %v1191, %v1187
        %v1288 = vpack.c.b16 %v1192, %v1188
        %v1289 = vpack.c.b16 %v1193, %v1189
        %v1290 = vpack.c.b16 %v1194, %v1190
        %v1291 = vpack.c.b16 %v1199, %v1195
        %v1292 = vpack.c.b16 %v1200, %v1196
        %v1293 = vpack.c.b16 %v1201, %v1197
        %v1294 = vpack.c.b16 %v1202, %v1198
        %v1295 = vpack.c.b16 %v1207, %v1203
        %v1296 = vpack.c.b16 %v1208, %v1204
        %v1297 = vpack.c.b16 %v1209, %v1205
        %v1298 = vpack.c.b16 %v1210, %v1206
        %v1299 = vpack.c.b16 %v1215, %v1211
        %v1300 = vpack.c.b16 %v1216, %v1212
        %v1301 = vpack.c.b16 %v1217, %v1213
        %v1302 = vpack.c.b16 %v1218, %v1214
        %v1303 = vpack.c.b16 %v1223, %v1219
        %v1304 = vpack.c.b16 %v1224, %v1220
        %v1305 = vpack.c.b16 %v1225, %v1221
        %v1306 = vpack.c.b16 %v1226, %v1222
        %v1307 = vpack.c.b16 %v1231, %v1227
        %v1308 = vpack.c.b16 %v1232, %v1228
        %v1309 = vpack.c.b16 %v1233, %v1229
        %v1310 = vpack.c.b16 %v1234, %v1230
        %v1311 = vpack.c.b16 %v1239, %v1235
        %v1312 = vpack.c.b16 %v1240, %v1236
        %v1313 = vpack.c.b16 %v1241, %v1237
        %v1314 = vpack.c.b16 %v1242, %v1238
        %v1315 = vpack.c.b16 %v1247, %v1243
        %v1316 = vpack.c.b16 %v1248, %v1244
        %v1317 = vpack.c.b16 %v1249, %v1245
        %v1318 = vpack.c.b16 %v1250, %v1246
        %v1319 = vpack.c.b16 %v1255, %v1251
        %v1320 = vpack.c.b16 %v1256, %v1252
        %v1321 = vpack.c.b16 %v1257, %v1253
        %v1322 = vpack.c.b16 %v1258, %v1254
        %1387 = vmatpush.bf16.msra.mxu0 %v1287
        %1388 = vmatpush.bf16.msra.mxu0 %v1283
        %1389 = vmatpush.bf16.msra.mxu0 %v1279
        %1390 = vmatpush.bf16.msra.mxu0 %v1275
        %1391 = vmatpush.bf16.msra.mxu0 %v1271
        %1392 = vmatpush.bf16.msra.mxu0 %v1267
        %1393 = vmatpush.bf16.msra.mxu0 %v1263
        %1394 = vmatpush.bf16.msra.mxu0 %v1259
        %1395 = vmatmul.bf16.gmra.mxu0 %v1063
        %v1396 = vpop.f32.mrf.mxu0
        %v1397 = vadd.f32 %v1052, %v1396
        %v1398 = vpop.f32.mrf.mxu0
        %1399 = vdwg.mxu0
        %1400 = vmatpush.bf16.msra.mxu0 %v1319
        %1401 = vmatpush.bf16.msra.mxu0 %v1315
        %1402 = vmatpush.bf16.msra.mxu0 %v1311
        %1403 = vmatpush.bf16.msra.mxu0 %v1307
        %1404 = vmatpush.bf16.msra.mxu0 %v1303
        %1405 = vmatpush.bf16.msra.mxu0 %v1299
        %1406 = vmatpush.bf16.msra.mxu0 %v1295
        %1407 = vmatpush.bf16.msra.mxu0 %v1291
        %1408 = vmatmul.bf16.gmra.mxu0 %v1064
        %v1409 = vpop.f32.mrf.mxu0
        %v1410 = vadd.f32 %v1397, %v1409
        %v1411 = vpop.f32.mrf.mxu0
        %1412 = vdwg.mxu0
        %1413 = vmatpush.bf16.msra.mxu0 %v1288
        %1414 = vmatpush.bf16.msra.mxu0 %v1284
        %1415 = vmatpush.bf16.msra.mxu0 %v1280
        %1416 = vmatpush.bf16.msra.mxu0 %v1276
        %1417 = vmatpush.bf16.msra.mxu0 %v1272
        %1418 = vmatpush.bf16.msra.mxu0 %v1268
        %1419 = vmatpush.bf16.msra.mxu0 %v1264
        %1420 = vmatpush.bf16.msra.mxu0 %v1260
        %1421 = vmatmul.bf16.gmra.mxu0 %v1063
        %v1422 = vpop.f32.mrf.mxu0
        %v1423 = vadd.f32 %v1053, %v1422
        %v1424 = vpop.f32.mrf.mxu0
        %1425 = vdwg.mxu0
        %1426 = vmatpush.bf16.msra.mxu0 %v1320
        %1427 = vmatpush.bf16.msra.mxu0 %v1316
        %1428 = vmatpush.bf16.msra.mxu0 %v1312
        %1429 = vmatpush.bf16.msra.mxu0 %v1308
        %1430 = vmatpush.bf16.msra.mxu0 %v1304
        %1431 = vmatpush.bf16.msra.mxu0 %v1300
        %1432 = vmatpush.bf16.msra.mxu0 %v1296
        %1433 = vmatpush.bf16.msra.mxu0 %v1292
        %1434 = vmatmul.bf16.gmra.mxu0 %v1064
        %v1435 = vpop.f32.mrf.mxu0
        %v1436 = vadd.f32 %v1423, %v1435
        %v1437 = vpop.f32.mrf.mxu0
        %1438 = vdwg.mxu0
        %1439 = vmatpush.bf16.msra.mxu0 %v1289
        %1440 = vmatpush.bf16.msra.mxu0 %v1285
        %1441 = vmatpush.bf16.msra.mxu0 %v1281
        %1442 = vmatpush.bf16.msra.mxu0 %v1277
        %1443 = vmatpush.bf16.msra.mxu0 %v1273
        %1444 = vmatpush.bf16.msra.mxu0 %v1269
        %1445 = vmatpush.bf16.msra.mxu0 %v1265
        %1446 = vmatpush.bf16.msra.mxu0 %v1261
        %1447 = vmatmul.bf16.gmra.mxu0 %v1063
        %v1448 = vpop.f32.mrf.mxu0
        %v1449 = vadd.f32 %v1054, %v1448
        %v1450 = vpop.f32.mrf.mxu0
        %1451 = vdwg.mxu0
        %1452 = vmatpush.bf16.msra.mxu0 %v1321
        %1453 = vmatpush.bf16.msra.mxu0 %v1317
        %1454 = vmatpush.bf16.msra.mxu0 %v1313
        %1455 = vmatpush.bf16.msra.mxu0 %v1309
        %1456 = vmatpush.bf16.msra.mxu0 %v1305
        %1457 = vmatpush.bf16.msra.mxu0 %v1301
        %1458 = vmatpush.bf16.msra.mxu0 %v1297
        %1459 = vmatpush.bf16.msra.mxu0 %v1293
        %1460 = vmatmul.bf16.gmra.mxu0 %v1064
        %v1461 = vpop.f32.mrf.mxu0
        %v1462 = vadd.f32 %v1449, %v1461
        %v1463 = vpop.f32.mrf.mxu0
        %1464 = vdwg.mxu0
        %1465 = vmatpush.bf16.msra.mxu0 %v1290
        %1466 = vmatpush.bf16.msra.mxu0 %v1286
        %1467 = vmatpush.bf16.msra.mxu0 %v1282
        %1468 = vmatpush.bf16.msra.mxu0 %v1278
        %1469 = vmatpush.bf16.msra.mxu0 %v1274
        %1470 = vmatpush.bf16.msra.mxu0 %v1270
        %1471 = vmatpush.bf16.msra.mxu0 %v1266
        %1472 = vmatpush.bf16.msra.mxu0 %v1262
        %1473 = vmatmul.bf16.gmra.mxu0 %v1063
        %v1474 = vpop.f32.mrf.mxu0
        %v1475 = vadd.f32 %v1055, %v1474
        %v1476 = vpop.f32.mrf.mxu0
        %1477 = vdwg.mxu0
        %1478 = vmatpush.bf16.msra.mxu0 %v1322
        %1479 = vmatpush.bf16.msra.mxu0 %v1318
        %1480 = vmatpush.bf16.msra.mxu0 %v1314
        %1481 = vmatpush.bf16.msra.mxu0 %v1310
        %1482 = vmatpush.bf16.msra.mxu0 %v1306
        %1483 = vmatpush.bf16.msra.mxu0 %v1302
        %1484 = vmatpush.bf16.msra.mxu0 %v1298
        %1485 = vmatpush.bf16.msra.mxu0 %v1294
        %1486 = vmatmul.bf16.gmra.mxu0 %v1064
        %v1487 = vpop.f32.mrf.mxu0
        %v1488 = vadd.f32 %v1475, %v1487
        %v1489 = vpop.f32.mrf.mxu0
        %1490 = vdwg.mxu0
        %v1491 = vld [vmem:[#allocation4] sm:$0xff]
        %v1492 = vxor.u32 %v1410, 2147483648
        %v1493 = vmul.f32 %v1492, 1.442695
        %v1494 = vpow.pop %v1493
        %v1495 = vadd.f32 %v1494, 1.0
        %v1496 = vrcp.pop %v1495
        %v1497 = vmul.f32 %v1495, %v1496
        %v1498 = vsub.f32 1.0, %v1497
        %v1499 = vmul.f32 %v1496, %v1498
        %v1500 = vadd.f32 %v1496, %v1499
        %vm1501 = vweird.f32 %v1495
        %vm1502 = vweird.f32 %v1496
        %vm1503 = vmor %vm1501, %vm1502
        %v1504 = vsel %vm1503, %v1496, %v1500
        %v1505 = vand.u32 2147483647, %v1495
        %vm1506 = vcmp.eq.f32.partialorder %v1505, 8.507059e+37
        %v1507 = vand.u32 %v1495, 2147483648
        %v1508 = vor.u32 1.1754944e-38, %v1507
        %v1509 = vsel %vm1506, %v1508, %v1504
        %v1510 = vmul.f32 1.0, %v1509
        %v1511 = vxor.u32 %v1436, 2147483648
        %v1512 = vmul.f32 %v1511, 1.442695
        %v1513 = vpow.pop %v1512
        %v1514 = vadd.f32 %v1513, 1.0
        %v1515 = vrcp.pop %v1514
        %v1516 = vmul.f32 %v1514, %v1515
        %v1517 = vsub.f32 1.0, %v1516
        %v1518 = vmul.f32 %v1515, %v1517
        %v1519 = vadd.f32 %v1515, %v1518
        %vm1520 = vweird.f32 %v1514
        %vm1521 = vweird.f32 %v1515
        %vm1522 = vmor %vm1520, %vm1521
        %v1523 = vsel %vm1522, %v1515, %v1519
        %v1524 = vand.u32 2147483647, %v1514
        %vm1525 = vcmp.eq.f32.partialorder %v1524, 8.507059e+37
        %v1526 = vand.u32 %v1514, 2147483648
        %v1527 = vor.u32 1.1754944e-38, %v1526
        %v1528 = vsel %vm1525, %v1527, %v1523
        %v1529 = vmul.f32 1.0, %v1528
        %v1530 = vtanh.pop %v1462
        %v1531 = vxor.u32 %v1488, 2147483648
        %v1532 = vmul.f32 %v1531, 1.442695
        %v1533 = vpow.pop %v1532
        %v1534 = vadd.f32 %v1533, 1.0
        %v1535 = vrcp.pop %v1534
        %v1536 = vmul.f32 %v1534, %v1535
        %v1537 = vsub.f32 1.0, %v1536
        %v1538 = vmul.f32 %v1535, %v1537
        %v1539 = vadd.f32 %v1535, %v1538
        %vm1540 = vweird.f32 %v1534
        %vm1541 = vweird.f32 %v1535
        %vm1542 = vmor %vm1540, %vm1541
        %v1543 = vsel %vm1542, %v1535, %v1539
        %v1544 = vand.u32 2147483647, %v1534
        %vm1545 = vcmp.eq.f32.partialorder %v1544, 8.507059e+37
        %v1546 = vand.u32 %v1534, 2147483648
        %v1547 = vor.u32 1.1754944e-38, %v1546
        %v1548 = vsel %vm1545, %v1547, %v1543
        %v1549 = vmul.f32 1.0, %v1548
        %v1550 = vmul.f32 %v1529, %v1491
        %v1551 = vmul.f32 %v1510, %v1530
        %v1552 = vadd.f32 %v1550, %v1551
        %v1553 = vtanh.pop %v1552
        %v1554 = vmul.f32 %v1549, %v1553
        %1555 = vst [vmem:[#allocation4] sm:$0xff] %v1552
        %v1556 = vpack.c.bf16 %v1554, %v1554
        %1557 = vst [vmem:[#allocation2 + $0x4] sm:$0xf] %v1556
        %s1558 = smul.u32 1, 4
        %s1559 = smul.addr %s1558, 8
        %s1560 = scalar_lea.vmem [#allocation5], %s1559
        %v1561 = vld [vmem:[%s1560] sm:$0xff]
        %v1562 = vld [vmem:[%s1560 + $0x8] sm:$0xff]
        %v1563 = vld [vmem:[%s1560 + $0x10] sm:$0xff]
        %v1564 = vld [vmem:[%s1560 + $0x18] sm:$0xff]
        %v1565 = vld [vmem:[#allocation2] sm:$0xf]
        %1566 = vmatpush.bf16.msra.mxu0 %v891
        %1567 = vmatpush.bf16.msra.mxu0 %v887
        %1568 = vmatpush.bf16.msra.mxu0 %v883
        %1569 = vmatpush.bf16.msra.mxu0 %v879
        %1570 = vmatpush.bf16.msra.mxu0 %v875
        %1571 = vmatpush.bf16.msra.mxu0 %v871
        %1572 = vmatpush.bf16.msra.mxu0 %v867
        %1573 = vmatpush.bf16.msra.mxu0 %v863
        %1574 = vmatmul.bf16.gmra.mxu0 %v1565
        %v1575 = vpop.f32.mrf.mxu0
        %v1576 = vadd.f32 0.0, %v1575
        %v1577 = vpop.f32.mrf.mxu0
        %1578 = vdwg.mxu0
        %1579 = vmatpush.bf16.msra.mxu0 %v892
        %1580 = vmatpush.bf16.msra.mxu0 %v888
        %1581 = vmatpush.bf16.msra.mxu0 %v884
        %1582 = vmatpush.bf16.msra.mxu0 %v880
        %1583 = vmatpush.bf16.msra.mxu0 %v876
        %1584 = vmatpush.bf16.msra.mxu0 %v872
        %1585 = vmatpush.bf16.msra.mxu0 %v868
        %1586 = vmatpush.bf16.msra.mxu0 %v864
        %1587 = vmatmul.bf16.gmra.mxu0 %v1565
        %v1588 = vpop.f32.mrf.mxu0
        %v1589 = vadd.f32 0.0, %v1588
        %v1590 = vpop.f32.mrf.mxu0
        %1591 = vdwg.mxu0
        %1592 = vmatpush.bf16.msra.mxu0 %v893
        %1593 = vmatpush.bf16.msra.mxu0 %v889
        %1594 = vmatpush.bf16.msra.mxu0 %v885
        %1595 = vmatpush.bf16.msra.mxu0 %v881
        %1596 = vmatpush.bf16.msra.mxu0 %v877
        %1597 = vmatpush.bf16.msra.mxu0 %v873
        %1598 = vmatpush.bf16.msra.mxu0 %v869
        %1599 = vmatpush.bf16.msra.mxu0 %v865
        %1600 = vmatmul.bf16.gmra.mxu0 %v1565
        %v1601 = vpop.f32.mrf.mxu0
        %v1602 = vadd.f32 0.0, %v1601
        %v1603 = vpop.f32.mrf.mxu0
        %1604 = vdwg.mxu0
        %1605 = vmatpush.bf16.msra.mxu0 %v894
        %1606 = vmatpush.bf16.msra.mxu0 %v890
        %1607 = vmatpush.bf16.msra.mxu0 %v886
        %1608 = vmatpush.bf16.msra.mxu0 %v882
        %1609 = vmatpush.bf16.msra.mxu0 %v878
        %1610 = vmatpush.bf16.msra.mxu0 %v874
        %1611 = vmatpush.bf16.msra.mxu0 %v870
        %1612 = vmatpush.bf16.msra.mxu0 %v866
        %1613 = vmatmul.bf16.gmra.mxu0 %v1565
        %v1614 = vpop.f32.mrf.mxu0
        %v1615 = vadd.f32 0.0, %v1614
        %v1616 = vpop.f32.mrf.mxu0
        %1617 = vdwg.mxu0
        %v1618 = vadd.f32 %v1561, %v1576
        %v1619 = vadd.f32 %v1562, %v1589
        %v1620 = vadd.f32 %v1563, %v1602
        %v1621 = vadd.f32 %v1564, %v1615
        %v1622 = vld [vmem:[#allocation3] sm:$0xff]
        %v1623 = vxor.u32 %v1618, 2147483648
        %v1624 = vmul.f32 %v1623, 1.442695
        %v1625 = vpow.pop %v1624
        %v1626 = vadd.f32 %v1625, 1.0
        %v1627 = vrcp.pop %v1626
        %v1628 = vmul.f32 %v1626, %v1627
        %v1629 = vsub.f32 1.0, %v1628
        %v1630 = vmul.f32 %v1627, %v1629
        %v1631 = vadd.f32 %v1627, %v1630
        %vm1632 = vweird.f32 %v1626
        %vm1633 = vweird.f32 %v1627
        %vm1634 = vmor %vm1632, %vm1633
        %v1635 = vsel %vm1634, %v1627, %v1631
        %v1636 = vand.u32 2147483647, %v1626
        %vm1637 = vcmp.eq.f32.partialorder %v1636, 8.507059e+37
        %v1638 = vand.u32 %v1626, 2147483648
        %v1639 = vor.u32 1.1754944e-38, %v1638
        %v1640 = vsel %vm1637, %v1639, %v1635
        %v1641 = vmul.f32 1.0, %v1640
        %v1642 = vxor.u32 %v1619, 2147483648
        %v1643 = vmul.f32 %v1642, 1.442695
        %v1644 = vpow.pop %v1643
        %v1645 = vadd.f32 %v1644, 1.0
        %v1646 = vrcp.pop %v1645
        %v1647 = vmul.f32 %v1645, %v1646
        %v1648 = vsub.f32 1.0, %v1647
        %v1649 = vmul.f32 %v1646, %v1648
        %v1650 = vadd.f32 %v1646, %v1649
        %vm1651 = vweird.f32 %v1645
        %vm1652 = vweird.f32 %v1646
        %vm1653 = vmor %vm1651, %vm1652
        %v1654 = vsel %vm1653, %v1646, %v1650
        %v1655 = vand.u32 2147483647, %v1645
        %vm1656 = vcmp.eq.f32.partialorder %v1655, 8.507059e+37
        %v1657 = vand.u32 %v1645, 2147483648
        %v1658 = vor.u32 1.1754944e-38, %v1657
        %v1659 = vsel %vm1656, %v1658, %v1654
        %v1660 = vmul.f32 1.0, %v1659
        %v1661 = vtanh.pop %v1620
        %v1662 = vxor.u32 %v1621, 2147483648
        %v1663 = vmul.f32 %v1662, 1.442695
        %v1664 = vpow.pop %v1663
        %v1665 = vadd.f32 %v1664, 1.0
        %v1666 = vrcp.pop %v1665
        %v1667 = vmul.f32 %v1665, %v1666
        %v1668 = vsub.f32 1.0, %v1667
        %v1669 = vmul.f32 %v1666, %v1668
        %v1670 = vadd.f32 %v1666, %v1669
        %vm1671 = vweird.f32 %v1665
        %vm1672 = vweird.f32 %v1666
        %vm1673 = vmor %vm1671, %vm1672
        %v1674 = vsel %vm1673, %v1666, %v1670
        %v1675 = vand.u32 2147483647, %v1665
        %vm1676 = vcmp.eq.f32.partialorder %v1675, 8.507059e+37
        %v1677 = vand.u32 %v1665, 2147483648
        %v1678 = vor.u32 1.1754944e-38, %v1677
        %v1679 = vsel %vm1676, %v1678, %v1674
        %v1680 = vmul.f32 1.0, %v1679
        %v1681 = vmul.f32 %v1660, %v1622
        %v1682 = vmul.f32 %v1641, %v1661
        %v1683 = vadd.f32 %v1681, %v1682
        %v1684 = vtanh.pop %v1683
        %v1685 = vmul.f32 %v1680, %v1684
        %1686 = vst [vmem:[#allocation3] sm:$0xff] %v1683
        %v1687 = vpack.c.bf16 %v1685, %v1685
        %1688 = vst [vmem:[#allocation2] sm:$0xf] %v1687
        %v1689 = vld [vmem:[#allocation2] sm:$0xff]
        %v1691 = vunpack.c.l.b16 %v1689
        %v1692 = vunpack.c.h.b16 %v1689
        %v1693 = vpack.c.b16 %v1691, %v1691
        %v1694 = vpack.c.b16 %v1692, %v1692
        %1697 = vmatpush.bf16.msra.mxu0 %v1287
        %1698 = vmatpush.bf16.msra.mxu0 %v1283
        %1699 = vmatpush.bf16.msra.mxu0 %v1279
        %1700 = vmatpush.bf16.msra.mxu0 %v1275
        %1701 = vmatpush.bf16.msra.mxu0 %v1271
        %1702 = vmatpush.bf16.msra.mxu0 %v1267
        %1703 = vmatpush.bf16.msra.mxu0 %v1263
        %1704 = vmatpush.bf16.msra.mxu0 %v1259
        %1705 = vmatmul.bf16.gmra.mxu0 %v1693
        %v1706 = vpop.f32.mrf.mxu0
        %v1707 = vadd.f32 %v1052, %v1706
        %v1708 = vpop.f32.mrf.mxu0
        %1709 = vdwg.mxu0
        %1710 = vmatpush.bf16.msra.mxu0 %v1319
        %1711 = vmatpush.bf16.msra.mxu0 %v1315
        %1712 = vmatpush.bf16.msra.mxu0 %v1311
        %1713 = vmatpush.bf16.msra.mxu0 %v1307
        %1714 = vmatpush.bf16.msra.mxu0 %v1303
        %1715 = vmatpush.bf16.msra.mxu0 %v1299
        %1716 = vmatpush.bf16.msra.mxu0 %v1295
        %1717 = vmatpush.bf16.msra.mxu0 %v1291
        %1718 = vmatmul.bf16.gmra.mxu0 %v1694
        %v1719 = vpop.f32.mrf.mxu0
        %v1720 = vadd.f32 %v1707, %v1719
        %v1721 = vpop.f32.mrf.mxu0
        %1722 = vdwg.mxu0
        %1723 = vmatpush.bf16.msra.mxu0 %v1288
        %1724 = vmatpush.bf16.msra.mxu0 %v1284
        %1725 = vmatpush.bf16.msra.mxu0 %v1280
        %1726 = vmatpush.bf16.msra.mxu0 %v1276
        %1727 = vmatpush.bf16.msra.mxu0 %v1272
        %1728 = vmatpush.bf16.msra.mxu0 %v1268
        %1729 = vmatpush.bf16.msra.mxu0 %v1264
        %1730 = vmatpush.bf16.msra.mxu0 %v1260
        %1731 = vmatmul.bf16.gmra.mxu0 %v1693
        %v1732 = vpop.f32.mrf.mxu0
        %v1733 = vadd.f32 %v1053, %v1732
        %v1734 = vpop.f32.mrf.mxu0
        %1735 = vdwg.mxu0
        %1736 = vmatpush.bf16.msra.mxu0 %v1320
        %1737 = vmatpush.bf16.msra.mxu0 %v1316
        %1738 = vmatpush.bf16.msra.mxu0 %v1312
        %1739 = vmatpush.bf16.msra.mxu0 %v1308
        %1740 = vmatpush.bf16.msra.mxu0 %v1304
        %1741 = vmatpush.bf16.msra.mxu0 %v1300
        %1742 = vmatpush.bf16.msra.mxu0 %v1296
        %1743 = vmatpush.bf16.msra.mxu0 %v1292
        %1744 = vmatmul.bf16.gmra.mxu0 %v1694
        %v1745 = vpop.f32.mrf.mxu0
        %v1746 = vadd.f32 %v1733, %v1745
        %v1747 = vpop.f32.mrf.mxu0
        %1748 = vdwg.mxu0
        %1749 = vmatpush.bf16.msra.mxu0 %v1289
        %1750 = vmatpush.bf16.msra.mxu0 %v1285
        %1751 = vmatpush.bf16.msra.mxu0 %v1281
        %1752 = vmatpush.bf16.msra.mxu0 %v1277
        %1753 = vmatpush.bf16.msra.mxu0 %v1273
        %1754 = vmatpush.bf16.msra.mxu0 %v1269
        %1755 = vmatpush.bf16.msra.mxu0 %v1265
        %1756 = vmatpush.bf16.msra.mxu0 %v1261
        %1757 = vmatmul.bf16.gmra.mxu0 %v1693
        %v1758 = vpop.f32.mrf.mxu0
        %v1759 = vadd.f32 %v1054, %v1758
        %v1760 = vpop.f32.mrf.mxu0
        %1761 = vdwg.mxu0
        %1762 = vmatpush.bf16.msra.mxu0 %v1321
        %1763 = vmatpush.bf16.msra.mxu0 %v1317
        %1764 = vmatpush.bf16.msra.mxu0 %v1313
        %1765 = vmatpush.bf16.msra.mxu0 %v1309
        %1766 = vmatpush.bf16.msra.mxu0 %v1305
        %1767 = vmatpush.bf16.msra.mxu0 %v1301
        %1768 = vmatpush.bf16.msra.mxu0 %v1297
        %1769 = vmatpush.bf16.msra.mxu0 %v1293
        %1770 = vmatmul.bf16.gmra.mxu0 %v1694
        %v1771 = vpop.f32.mrf.mxu0
        %v1772 = vadd.f32 %v1759, %v1771
        %v1773 = vpop.f32.mrf.mxu0
        %1774 = vdwg.mxu0
        %1775 = vmatpush.bf16.msra.mxu0 %v1290
        %1776 = vmatpush.bf16.msra.mxu0 %v1286
        %1777 = vmatpush.bf16.msra.mxu0 %v1282
        %1778 = vmatpush.bf16.msra.mxu0 %v1278
        %1779 = vmatpush.bf16.msra.mxu0 %v1274
        %1780 = vmatpush.bf16.msra.mxu0 %v1270
        %1781 = vmatpush.bf16.msra.mxu0 %v1266
        %1782 = vmatpush.bf16.msra.mxu0 %v1262
        %1783 = vmatmul.bf16.gmra.mxu0 %v1693
        %v1784 = vpop.f32.mrf.mxu0
        %v1785 = vadd.f32 %v1055, %v1784
        %v1786 = vpop.f32.mrf.mxu0
        %1787 = vdwg.mxu0
        %1788 = vmatpush.bf16.msra.mxu0 %v1322
        %1789 = vmatpush.bf16.msra.mxu0 %v1318
        %1790 = vmatpush.bf16.msra.mxu0 %v1314
        %1791 = vmatpush.bf16.msra.mxu0 %v1310
        %1792 = vmatpush.bf16.msra.mxu0 %v1306
        %1793 = vmatpush.bf16.msra.mxu0 %v1302
        %1794 = vmatpush.bf16.msra.mxu0 %v1298
        %1795 = vmatpush.bf16.msra.mxu0 %v1294
        %1796 = vmatmul.bf16.gmra.mxu0 %v1694
        %v1797 = vpop.f32.mrf.mxu0
        %v1798 = vadd.f32 %v1785, %v1797
        %v1799 = vpop.f32.mrf.mxu0
        %1800 = vdwg.mxu0
        %v1801 = vld [vmem:[#allocation4] sm:$0xff]
        %v1802 = vxor.u32 %v1720, 2147483648
        %v1803 = vmul.f32 %v1802, 1.442695
        %v1804 = vpow.pop %v1803
        %v1805 = vadd.f32 %v1804, 1.0
        %v1806 = vrcp.pop %v1805
        %v1807 = vmul.f32 %v1805, %v1806
        %v1808 = vsub.f32 1.0, %v1807
        %v1809 = vmul.f32 %v1806, %v1808
        %v1810 = vadd.f32 %v1806, %v1809
        %vm1811 = vweird.f32 %v1805
        %vm1812 = vweird.f32 %v1806
        %vm1813 = vmor %vm1811, %vm1812
        %v1814 = vsel %vm1813, %v1806, %v1810
        %v1815 = vand.u32 2147483647, %v1805
        %vm1816 = vcmp.eq.f32.partialorder %v1815, 8.507059e+37
        %v1817 = vand.u32 %v1805, 2147483648
        %v1818 = vor.u32 1.1754944e-38, %v1817
        %v1819 = vsel %vm1816, %v1818, %v1814
        %v1820 = vmul.f32 1.0, %v1819
        %v1821 = vxor.u32 %v1746, 2147483648
        %v1822 = vmul.f32 %v1821, 1.442695
        %v1823 = vpow.pop %v1822
        %v1824 = vadd.f32 %v1823, 1.0
        %v1825 = vrcp.pop %v1824
        %v1826 = vmul.f32 %v1824, %v1825
        %v1827 = vsub.f32 1.0, %v1826
        %v1828 = vmul.f32 %v1825, %v1827
        %v1829 = vadd.f32 %v1825, %v1828
        %vm1830 = vweird.f32 %v1824
        %vm1831 = vweird.f32 %v1825
        %vm1832 = vmor %vm1830, %vm1831
        %v1833 = vsel %vm1832, %v1825, %v1829
        %v1834 = vand.u32 2147483647, %v1824
        %vm1835 = vcmp.eq.f32.partialorder %v1834, 8.507059e+37
        %v1836 = vand.u32 %v1824, 2147483648
        %v1837 = vor.u32 1.1754944e-38, %v1836
        %v1838 = vsel %vm1835, %v1837, %v1833
        %v1839 = vmul.f32 1.0, %v1838
        %v1840 = vtanh.pop %v1772
        %v1841 = vxor.u32 %v1798, 2147483648
        %v1842 = vmul.f32 %v1841, 1.442695
        %v1843 = vpow.pop %v1842
        %v1844 = vadd.f32 %v1843, 1.0
        %v1845 = vrcp.pop %v1844
        %v1846 = vmul.f32 %v1844, %v1845
        %v1847 = vsub.f32 1.0, %v1846
        %v1848 = vmul.f32 %v1845, %v1847
        %v1849 = vadd.f32 %v1845, %v1848
        %vm1850 = vweird.f32 %v1844
        %vm1851 = vweird.f32 %v1845
        %vm1852 = vmor %vm1850, %vm1851
        %v1853 = vsel %vm1852, %v1845, %v1849
        %v1854 = vand.u32 2147483647, %v1844
        %vm1855 = vcmp.eq.f32.partialorder %v1854, 8.507059e+37
        %v1856 = vand.u32 %v1844, 2147483648
        %v1857 = vor.u32 1.1754944e-38, %v1856
        %v1858 = vsel %vm1855, %v1857, %v1853
        %v1859 = vmul.f32 1.0, %v1858
        %v1860 = vmul.f32 %v1839, %v1801
        %v1861 = vmul.f32 %v1820, %v1840
        %v1862 = vadd.f32 %v1860, %v1861
        %v1863 = vtanh.pop %v1862
        %v1864 = vmul.f32 %v1859, %v1863
        %1865 = vst [vmem:[#allocation4] sm:$0xff] %v1862
        %v1866 = vpack.c.bf16 %v1864, %v1864
        %1867 = vst [vmem:[#allocation2 + $0x4] sm:$0xf] %v1866
        %s1868 = smul.u32 2, 4
        %s1869 = smul.addr %s1868, 8
        %s1870 = scalar_lea.vmem [#allocation5], %s1869
        %v1871 = vld [vmem:[%s1870] sm:$0xff]
        %v1872 = vld [vmem:[%s1870 + $0x8] sm:$0xff]
        %v1873 = vld [vmem:[%s1870 + $0x10] sm:$0xff]
        %v1874 = vld [vmem:[%s1870 + $0x18] sm:$0xff]
        %v1875 = vld [vmem:[#allocation2] sm:$0xf]
        %1876 = vmatpush.bf16.msra.mxu0 %v891
        %1877 = vmatpush.bf16.msra.mxu0 %v887
        %1878 = vmatpush.bf16.msra.mxu0 %v883
        %1879 = vmatpush.bf16.msra.mxu0 %v879
        %1880 = vmatpush.bf16.msra.mxu0 %v875
        %1881 = vmatpush.bf16.msra.mxu0 %v871
        %1882 = vmatpush.bf16.msra.mxu0 %v867
        %1883 = vmatpush.bf16.msra.mxu0 %v863
        %1884 = vmatmul.bf16.gmra.mxu0 %v1875
        %v1885 = vpop.f32.mrf.mxu0
        %v1886 = vadd.f32 0.0, %v1885
        %v1887 = vpop.f32.mrf.mxu0
        %1888 = vdwg.mxu0
        %1889 = vmatpush.bf16.msra.mxu0 %v892
        %1890 = vmatpush.bf16.msra.mxu0 %v888
        %1891 = vmatpush.bf16.msra.mxu0 %v884
        %1892 = vmatpush.bf16.msra.mxu0 %v880
        %1893 = vmatpush.bf16.msra.mxu0 %v876
        %1894 = vmatpush.bf16.msra.mxu0 %v872
        %1895 = vmatpush.bf16.msra.mxu0 %v868
        %1896 = vmatpush.bf16.msra.mxu0 %v864
        %1897 = vmatmul.bf16.gmra.mxu0 %v1875
        %v1898 = vpop.f32.mrf.mxu0
        %v1899 = vadd.f32 0.0, %v1898
        %v1900 = vpop.f32.mrf.mxu0
        %1901 = vdwg.mxu0
        %1902 = vmatpush.bf16.msra.mxu0 %v893
        %1903 = vmatpush.bf16.msra.mxu0 %v889
        %1904 = vmatpush.bf16.msra.mxu0 %v885
        %1905 = vmatpush.bf16.msra.mxu0 %v881
        %1906 = vmatpush.bf16.msra.mxu0 %v877
        %1907 = vmatpush.bf16.msra.mxu0 %v873
        %1908 = vmatpush.bf16.msra.mxu0 %v869
        %1909 = vmatpush.bf16.msra.mxu0 %v865
        %1910 = vmatmul.bf16.gmra.mxu0 %v1875
        %v1911 = vpop.f32.mrf.mxu0
        %v1912 = vadd.f32 0.0, %v1911
        %v1913 = vpop.f32.mrf.mxu0
        %1914 = vdwg.mxu0
        %1915 = vmatpush.bf16.msra.mxu0 %v894
        %1916 = vmatpush.bf16.msra.mxu0 %v890
        %1917 = vmatpush.bf16.msra.mxu0 %v886
        %1918 = vmatpush.bf16.msra.mxu0 %v882
        %1919 = vmatpush.bf16.msra.mxu0 %v878
        %1920 = vmatpush.bf16.msra.mxu0 %v874
        %1921 = vmatpush.bf16.msra.mxu0 %v870
        %1922 = vmatpush.bf16.msra.mxu0 %v866
        %1923 = vmatmul.bf16.gmra.mxu0 %v1875
        %v1924 = vpop.f32.mrf.mxu0
        %v1925 = vadd.f32 0.0, %v1924
        %v1926 = vpop.f32.mrf.mxu0
        %1927 = vdwg.mxu0
        %v1928 = vadd.f32 %v1871, %v1886
        %v1929 = vadd.f32 %v1872, %v1899
        %v1930 = vadd.f32 %v1873, %v1912
        %v1931 = vadd.f32 %v1874, %v1925
        %v1932 = vld [vmem:[#allocation3] sm:$0xff]
        %v1933 = vxor.u32 %v1928, 2147483648
        %v1934 = vmul.f32 %v1933, 1.442695
        %v1935 = vpow.pop %v1934
        %v1936 = vadd.f32 %v1935, 1.0
        %v1937 = vrcp.pop %v1936
        %v1938 = vmul.f32 %v1936, %v1937
        %v1939 = vsub.f32 1.0, %v1938
        %v1940 = vmul.f32 %v1937, %v1939
        %v1941 = vadd.f32 %v1937, %v1940
        %vm1942 = vweird.f32 %v1936
        %vm1943 = vweird.f32 %v1937
        %vm1944 = vmor %vm1942, %vm1943
        %v1945 = vsel %vm1944, %v1937, %v1941
        %v1946 = vand.u32 2147483647, %v1936
        %vm1947 = vcmp.eq.f32.partialorder %v1946, 8.507059e+37
        %v1948 = vand.u32 %v1936, 2147483648
        %v1949 = vor.u32 1.1754944e-38, %v1948
        %v1950 = vsel %vm1947, %v1949, %v1945
        %v1951 = vmul.f32 1.0, %v1950
        %v1952 = vxor.u32 %v1929, 2147483648
        %v1953 = vmul.f32 %v1952, 1.442695
        %v1954 = vpow.pop %v1953
        %v1955 = vadd.f32 %v1954, 1.0
        %v1956 = vrcp.pop %v1955
        %v1957 = vmul.f32 %v1955, %v1956
        %v1958 = vsub.f32 1.0, %v1957
        %v1959 = vmul.f32 %v1956, %v1958
        %v1960 = vadd.f32 %v1956, %v1959
        %vm1961 = vweird.f32 %v1955
        %vm1962 = vweird.f32 %v1956
        %vm1963 = vmor %vm1961, %vm1962
        %v1964 = vsel %vm1963, %v1956, %v1960
        %v1965 = vand.u32 2147483647, %v1955
        %vm1966 = vcmp.eq.f32.partialorder %v1965, 8.507059e+37
        %v1967 = vand.u32 %v1955, 2147483648
        %v1968 = vor.u32 1.1754944e-38, %v1967
        %v1969 = vsel %vm1966, %v1968, %v1964
        %v1970 = vmul.f32 1.0, %v1969
        %v1971 = vtanh.pop %v1930
        %v1972 = vxor.u32 %v1931, 2147483648
        %v1973 = vmul.f32 %v1972, 1.442695
        %v1974 = vpow.pop %v1973
        %v1975 = vadd.f32 %v1974, 1.0
        %v1976 = vrcp.pop %v1975
        %v1977 = vmul.f32 %v1975, %v1976
        %v1978 = vsub.f32 1.0, %v1977
        %v1979 = vmul.f32 %v1976, %v1978
        %v1980 = vadd.f32 %v1976, %v1979
        %vm1981 = vweird.f32 %v1975
        %vm1982 = vweird.f32 %v1976
        %vm1983 = vmor %vm1981, %vm1982
        %v1984 = vsel %vm1983, %v1976, %v1980
        %v1985 = vand.u32 2147483647, %v1975
        %vm1986 = vcmp.eq.f32.partialorder %v1985, 8.507059e+37
        %v1987 = vand.u32 %v1975, 2147483648
        %v1988 = vor.u32 1.1754944e-38, %v1987
        %v1989 = vsel %vm1986, %v1988, %v1984
        %v1990 = vmul.f32 1.0, %v1989
        %v1991 = vmul.f32 %v1970, %v1932
        %v1992 = vmul.f32 %v1951, %v1971
        %v1993 = vadd.f32 %v1991, %v1992
        %v1994 = vtanh.pop %v1993
        %v1995 = vmul.f32 %v1990, %v1994
        %1996 = vst [vmem:[#allocation3] sm:$0xff] %v1993
        %v1997 = vpack.c.bf16 %v1995, %v1995
        %1998 = vst [vmem:[#allocation2] sm:$0xf] %v1997
        %v1999 = vld [vmem:[#allocation2] sm:$0xff]
        %v2001 = vunpack.c.l.b16 %v1999
        %v2002 = vunpack.c.h.b16 %v1999
        %v2003 = vpack.c.b16 %v2001, %v2001
        %v2004 = vpack.c.b16 %v2002, %v2002
        %2007 = vmatpush.bf16.msra.mxu0 %v1287
        %2008 = vmatpush.bf16.msra.mxu0 %v1283
        %2009 = vmatpush.bf16.msra.mxu0 %v1279
        %2010 = vmatpush.bf16.msra.mxu0 %v1275
        %2011 = vmatpush.bf16.msra.mxu0 %v1271
        %2012 = vmatpush.bf16.msra.mxu0 %v1267
        %2013 = vmatpush.bf16.msra.mxu0 %v1263
        %2014 = vmatpush.bf16.msra.mxu0 %v1259
        %2015 = vmatmul.bf16.gmra.mxu0 %v2003
        %v2016 = vpop.f32.mrf.mxu0
        %v2017 = vadd.f32 %v1052, %v2016
        %v2018 = vpop.f32.mrf.mxu0
        %2019 = vdwg.mxu0
        %2020 = vmatpush.bf16.msra.mxu0 %v1319
        %2021 = vmatpush.bf16.msra.mxu0 %v1315
        %2022 = vmatpush.bf16.msra.mxu0 %v1311
        %2023 = vmatpush.bf16.msra.mxu0 %v1307
        %2024 = vmatpush.bf16.msra.mxu0 %v1303
        %2025 = vmatpush.bf16.msra.mxu0 %v1299
        %2026 = vmatpush.bf16.msra.mxu0 %v1295
        %2027 = vmatpush.bf16.msra.mxu0 %v1291
        %2028 = vmatmul.bf16.gmra.mxu0 %v2004
        %v2029 = vpop.f32.mrf.mxu0
        %v2030 = vadd.f32 %v2017, %v2029
        %v2031 = vpop.f32.mrf.mxu0
        %2032 = vdwg.mxu0
        %2033 = vmatpush.bf16.msra.mxu0 %v1288
        %2034 = vmatpush.bf16.msra.mxu0 %v1284
        %2035 = vmatpush.bf16.msra.mxu0 %v1280
        %2036 = vmatpush.bf16.msra.mxu0 %v1276
        %2037 = vmatpush.bf16.msra.mxu0 %v1272
        %2038 = vmatpush.bf16.msra.mxu0 %v1268
        %2039 = vmatpush.bf16.msra.mxu0 %v1264
        %2040 = vmatpush.bf16.msra.mxu0 %v1260
        %2041 = vmatmul.bf16.gmra.mxu0 %v2003
        %v2042 = vpop.f32.mrf.mxu0
        %v2043 = vadd.f32 %v1053, %v2042
        %v2044 = vpop.f32.mrf.mxu0
        %2045 = vdwg.mxu0
        %2046 = vmatpush.bf16.msra.mxu0 %v1320
        %2047 = vmatpush.bf16.msra.mxu0 %v1316
        %2048 = vmatpush.bf16.msra.mxu0 %v1312
        %2049 = vmatpush.bf16.msra.mxu0 %v1308
        %2050 = vmatpush.bf16.msra.mxu0 %v1304
        %2051 = vmatpush.bf16.msra.mxu0 %v1300
        %2052 = vmatpush.bf16.msra.mxu0 %v1296
        %2053 = vmatpush.bf16.msra.mxu0 %v1292
        %2054 = vmatmul.bf16.gmra.mxu0 %v2004
        %v2055 = vpop.f32.mrf.mxu0
        %v2056 = vadd.f32 %v2043, %v2055
        %v2057 = vpop.f32.mrf.mxu0
        %2058 = vdwg.mxu0
        %2059 = vmatpush.bf16.msra.mxu0 %v1289
        %2060 = vmatpush.bf16.msra.mxu0 %v1285
        %2061 = vmatpush.bf16.msra.mxu0 %v1281
        %2062 = vmatpush.bf16.msra.mxu0 %v1277
        %2063 = vmatpush.bf16.msra.mxu0 %v1273
        %2064 = vmatpush.bf16.msra.mxu0 %v1269
        %2065 = vmatpush.bf16.msra.mxu0 %v1265
        %2066 = vmatpush.bf16.msra.mxu0 %v1261
        %2067 = vmatmul.bf16.gmra.mxu0 %v2003
        %v2068 = vpop.f32.mrf.mxu0
        %v2069 = vadd.f32 %v1054, %v2068
        %v2070 = vpop.f32.mrf.mxu0
        %2071 = vdwg.mxu0
        %2072 = vmatpush.bf16.msra.mxu0 %v1321
        %2073 = vmatpush.bf16.msra.mxu0 %v1317
        %2074 = vmatpush.bf16.msra.mxu0 %v1313
        %2075 = vmatpush.bf16.msra.mxu0 %v1309
        %2076 = vmatpush.bf16.msra.mxu0 %v1305
        %2077 = vmatpush.bf16.msra.mxu0 %v1301
        %2078 = vmatpush.bf16.msra.mxu0 %v1297
        %2079 = vmatpush.bf16.msra.mxu0 %v1293
        %2080 = vmatmul.bf16.gmra.mxu0 %v2004
        %v2081 = vpop.f32.mrf.mxu0
        %v2082 = vadd.f32 %v2069, %v2081
        %v2083 = vpop.f32.mrf.mxu0
        %2084 = vdwg.mxu0
        %2085 = vmatpush.bf16.msra.mxu0 %v1290
        %2086 = vmatpush.bf16.msra.mxu0 %v1286
        %2087 = vmatpush.bf16.msra.mxu0 %v1282
        %2088 = vmatpush.bf16.msra.mxu0 %v1278
        %2089 = vmatpush.bf16.msra.mxu0 %v1274
        %2090 = vmatpush.bf16.msra.mxu0 %v1270
        %2091 = vmatpush.bf16.msra.mxu0 %v1266
        %2092 = vmatpush.bf16.msra.mxu0 %v1262
        %2093 = vmatmul.bf16.gmra.mxu0 %v2003
        %v2094 = vpop.f32.mrf.mxu0
        %v2095 = vadd.f32 %v1055, %v2094
        %v2096 = vpop.f32.mrf.mxu0
        %2097 = vdwg.mxu0
        %2098 = vmatpush.bf16.msra.mxu0 %v1322
        %2099 = vmatpush.bf16.msra.mxu0 %v1318
        %2100 = vmatpush.bf16.msra.mxu0 %v1314
        %2101 = vmatpush.bf16.msra.mxu0 %v1310
        %2102 = vmatpush.bf16.msra.mxu0 %v1306
        %2103 = vmatpush.bf16.msra.mxu0 %v1302
        %2104 = vmatpush.bf16.msra.mxu0 %v1298
        %2105 = vmatpush.bf16.msra.mxu0 %v1294
        %2106 = vmatmul.bf16.gmra.mxu0 %v2004
        %v2107 = vpop.f32.mrf.mxu0
        %v2108 = vadd.f32 %v2095, %v2107
        %v2109 = vpop.f32.mrf.mxu0
        %2110 = vdwg.mxu0
        %v2111 = vld [vmem:[#allocation4] sm:$0xff]
        %v2112 = vxor.u32 %v2030, 2147483648
        %v2113 = vmul.f32 %v2112, 1.442695
        %v2114 = vpow.pop %v2113
        %v2115 = vadd.f32 %v2114, 1.0
        %v2116 = vrcp.pop %v2115
        %v2117 = vmul.f32 %v2115, %v2116
        %v2118 = vsub.f32 1.0, %v2117
        %v2119 = vmul.f32 %v2116, %v2118
        %v2120 = vadd.f32 %v2116, %v2119
        %vm2121 = vweird.f32 %v2115
        %vm2122 = vweird.f32 %v2116
        %vm2123 = vmor %vm2121, %vm2122
        %v2124 = vsel %vm2123, %v2116, %v2120
        %v2125 = vand.u32 2147483647, %v2115
        %vm2126 = vcmp.eq.f32.partialorder %v2125, 8.507059e+37
        %v2127 = vand.u32 %v2115, 2147483648
        %v2128 = vor.u32 1.1754944e-38, %v2127
        %v2129 = vsel %vm2126, %v2128, %v2124
        %v2130 = vmul.f32 1.0, %v2129
        %v2131 = vxor.u32 %v2056, 2147483648
        %v2132 = vmul.f32 %v2131, 1.442695
        %v2133 = vpow.pop %v2132
        %v2134 = vadd.f32 %v2133, 1.0
        %v2135 = vrcp.pop %v2134
        %v2136 = vmul.f32 %v2134, %v2135
        %v2137 = vsub.f32 1.0, %v2136
        %v2138 = vmul.f32 %v2135, %v2137
        %v2139 = vadd.f32 %v2135, %v2138
        %vm2140 = vweird.f32 %v2134
        %vm2141 = vweird.f32 %v2135
        %vm2142 = vmor %vm2140, %vm2141
        %v2143 = vsel %vm2142, %v2135, %v2139
        %v2144 = vand.u32 2147483647, %v2134
        %vm2145 = vcmp.eq.f32.partialorder %v2144, 8.507059e+37
        %v2146 = vand.u32 %v2134, 2147483648
        %v2147 = vor.u32 1.1754944e-38, %v2146
        %v2148 = vsel %vm2145, %v2147, %v2143
        %v2149 = vmul.f32 1.0, %v2148
        %v2150 = vtanh.pop %v2082
        %v2151 = vxor.u32 %v2108, 2147483648
        %v2152 = vmul.f32 %v2151, 1.442695
        %v2153 = vpow.pop %v2152
        %v2154 = vadd.f32 %v2153, 1.0
        %v2155 = vrcp.pop %v2154
        %v2156 = vmul.f32 %v2154, %v2155
        %v2157 = vsub.f32 1.0, %v2156
        %v2158 = vmul.f32 %v2155, %v2157
        %v2159 = vadd.f32 %v2155, %v2158
        %vm2160 = vweird.f32 %v2154
        %vm2161 = vweird.f32 %v2155
        %vm2162 = vmor %vm2160, %vm2161
        %v2163 = vsel %vm2162, %v2155, %v2159
        %v2164 = vand.u32 2147483647, %v2154
        %vm2165 = vcmp.eq.f32.partialorder %v2164, 8.507059e+37
        %v2166 = vand.u32 %v2154, 2147483648
        %v2167 = vor.u32 1.1754944e-38, %v2166
        %v2168 = vsel %vm2165, %v2167, %v2163
        %v2169 = vmul.f32 1.0, %v2168
        %v2170 = vmul.f32 %v2149, %v2111
        %v2171 = vmul.f32 %v2130, %v2150
        %v2172 = vadd.f32 %v2170, %v2171
        %v2173 = vtanh.pop %v2172
        %v2174 = vmul.f32 %v2169, %v2173
        %2175 = vst [vmem:[#allocation4] sm:$0xff] %v2172
        %v2176 = vpack.c.bf16 %v2174, %v2174
        %2177 = vst [vmem:[#allocation2 + $0x4] sm:$0xf] %v2176
        %s2178 = smul.u32 3, 4
        %s2179 = smul.addr %s2178, 8
        %s2180 = scalar_lea.vmem [#allocation5], %s2179
        %v2181 = vld [vmem:[%s2180] sm:$0xff]
        %v2182 = vld [vmem:[%s2180 + $0x8] sm:$0xff]
        %v2183 = vld [vmem:[%s2180 + $0x10] sm:$0xff]
        %v2184 = vld [vmem:[%s2180 + $0x18] sm:$0xff]
        %v2185 = vld [vmem:[#allocation2] sm:$0xf]
        %2186 = vmatpush.bf16.msra.mxu0 %v891
        %2187 = vmatpush.bf16.msra.mxu0 %v887
        %2188 = vmatpush.bf16.msra.mxu0 %v883
        %2189 = vmatpush.bf16.msra.mxu0 %v879
        %2190 = vmatpush.bf16.msra.mxu0 %v875
        %2191 = vmatpush.bf16.msra.mxu0 %v871
        %2192 = vmatpush.bf16.msra.mxu0 %v867
        %2193 = vmatpush.bf16.msra.mxu0 %v863
        %2194 = vmatmul.bf16.gmra.mxu0 %v2185
        %v2195 = vpop.f32.mrf.mxu0
        %v2196 = vadd.f32 0.0, %v2195
        %v2197 = vpop.f32.mrf.mxu0
        %2198 = vdwg.mxu0
        %2199 = vmatpush.bf16.msra.mxu0 %v892
        %2200 = vmatpush.bf16.msra.mxu0 %v888
        %2201 = vmatpush.bf16.msra.mxu0 %v884
        %2202 = vmatpush.bf16.msra.mxu0 %v880
        %2203 = vmatpush.bf16.msra.mxu0 %v876
        %2204 = vmatpush.bf16.msra.mxu0 %v872
        %2205 = vmatpush.bf16.msra.mxu0 %v868
        %2206 = vmatpush.bf16.msra.mxu0 %v864
        %2207 = vmatmul.bf16.gmra.mxu0 %v2185
        %v2208 = vpop.f32.mrf.mxu0
        %v2209 = vadd.f32 0.0, %v2208
        %v2210 = vpop.f32.mrf.mxu0
        %2211 = vdwg.mxu0
        %2212 = vmatpush.bf16.msra.mxu0 %v893
        %2213 = vmatpush.bf16.msra.mxu0 %v889
        %2214 = vmatpush.bf16.msra.mxu0 %v885
        %2215 = vmatpush.bf16.msra.mxu0 %v881
        %2216 = vmatpush.bf16.msra.mxu0 %v877
        %2217 = vmatpush.bf16.msra.mxu0 %v873
        %2218 = vmatpush.bf16.msra.mxu0 %v869
        %2219 = vmatpush.bf16.msra.mxu0 %v865
        %2220 = vmatmul.bf16.gmra.mxu0 %v2185
        %v2221 = vpop.f32.mrf.mxu0
        %v2222 = vadd.f32 0.0, %v2221
        %v2223 = vpop.f32.mrf.mxu0
        %2224 = vdwg.mxu0
        %2225 = vmatpush.bf16.msra.mxu0 %v894
        %2226 = vmatpush.bf16.msra.mxu0 %v890
        %2227 = vmatpush.bf16.msra.mxu0 %v886
        %2228 = vmatpush.bf16.msra.mxu0 %v882
        %2229 = vmatpush.bf16.msra.mxu0 %v878
        %2230 = vmatpush.bf16.msra.mxu0 %v874
        %2231 = vmatpush.bf16.msra.mxu0 %v870
        %2232 = vmatpush.bf16.msra.mxu0 %v866
        %2233 = vmatmul.bf16.gmra.mxu0 %v2185
        %v2234 = vpop.f32.mrf.mxu0
        %v2235 = vadd.f32 0.0, %v2234
        %v2236 = vpop.f32.mrf.mxu0
        %2237 = vdwg.mxu0
        %v2238 = vadd.f32 %v2181, %v2196
        %v2239 = vadd.f32 %v2182, %v2209
        %v2240 = vadd.f32 %v2183, %v2222
        %v2241 = vadd.f32 %v2184, %v2235
        %v2242 = vld [vmem:[#allocation3] sm:$0xff]
        %v2243 = vxor.u32 %v2238, 2147483648
        %v2244 = vmul.f32 %v2243, 1.442695
        %v2245 = vpow.pop %v2244
        %v2246 = vadd.f32 %v2245, 1.0
        %v2247 = vrcp.pop %v2246
        %v2248 = vmul.f32 %v2246, %v2247
        %v2249 = vsub.f32 1.0, %v2248
        %v2250 = vmul.f32 %v2247, %v2249
        %v2251 = vadd.f32 %v2247, %v2250
        %vm2252 = vweird.f32 %v2246
        %vm2253 = vweird.f32 %v2247
        %vm2254 = vmor %vm2252, %vm2253
        %v2255 = vsel %vm2254, %v2247, %v2251
        %v2256 = vand.u32 2147483647, %v2246
        %vm2257 = vcmp.eq.f32.partialorder %v2256, 8.507059e+37
        %v2258 = vand.u32 %v2246, 2147483648
        %v2259 = vor.u32 1.1754944e-38, %v2258
        %v2260 = vsel %vm2257, %v2259, %v2255
        %v2261 = vmul.f32 1.0, %v2260
        %v2262 = vxor.u32 %v2239, 2147483648
        %v2263 = vmul.f32 %v2262, 1.442695
        %v2264 = vpow.pop %v2263
        %v2265 = vadd.f32 %v2264, 1.0
        %v2266 = vrcp.pop %v2265
        %v2267 = vmul.f32 %v2265, %v2266
        %v2268 = vsub.f32 1.0, %v2267
        %v2269 = vmul.f32 %v2266, %v2268
        %v2270 = vadd.f32 %v2266, %v2269
        %vm2271 = vweird.f32 %v2265
        %vm2272 = vweird.f32 %v2266
        %vm2273 = vmor %vm2271, %vm2272
        %v2274 = vsel %vm2273, %v2266, %v2270
        %v2275 = vand.u32 2147483647, %v2265
        %vm2276 = vcmp.eq.f32.partialorder %v2275, 8.507059e+37
        %v2277 = vand.u32 %v2265, 2147483648
        %v2278 = vor.u32 1.1754944e-38, %v2277
        %v2279 = vsel %vm2276, %v2278, %v2274
        %v2280 = vmul.f32 1.0, %v2279
        %v2281 = vtanh.pop %v2240
        %v2282 = vxor.u32 %v2241, 2147483648
        %v2283 = vmul.f32 %v2282, 1.442695
        %v2284 = vpow.pop %v2283
        %v2285 = vadd.f32 %v2284, 1.0
        %v2286 = vrcp.pop %v2285
        %v2287 = vmul.f32 %v2285, %v2286
        %v2288 = vsub.f32 1.0, %v2287
        %v2289 = vmul.f32 %v2286, %v2288
        %v2290 = vadd.f32 %v2286, %v2289
        %vm2291 = vweird.f32 %v2285
        %vm2292 = vweird.f32 %v2286
        %vm2293 = vmor %vm2291, %vm2292
        %v2294 = vsel %vm2293, %v2286, %v2290
        %v2295 = vand.u32 2147483647, %v2285
        %vm2296 = vcmp.eq.f32.partialorder %v2295, 8.507059e+37
        %v2297 = vand.u32 %v2285, 2147483648
        %v2298 = vor.u32 1.1754944e-38, %v2297
        %v2299 = vsel %vm2296, %v2298, %v2294
        %v2300 = vmul.f32 1.0, %v2299
        %v2301 = vmul.f32 %v2280, %v2242
        %v2302 = vmul.f32 %v2261, %v2281
        %v2303 = vadd.f32 %v2301, %v2302
        %v2304 = vtanh.pop %v2303
        %v2305 = vmul.f32 %v2300, %v2304
        %2306 = vst [vmem:[#allocation3] sm:$0xff] %v2303
        %v2307 = vpack.c.bf16 %v2305, %v2305
        %2308 = vst [vmem:[#allocation2] sm:$0xf] %v2307
        %v2309 = vld [vmem:[#allocation2] sm:$0xff]
        %v2311 = vunpack.c.l.b16 %v2309
        %v2312 = vunpack.c.h.b16 %v2309
        %v2313 = vpack.c.b16 %v2311, %v2311
        %v2314 = vpack.c.b16 %v2312, %v2312
        %2317 = vmatpush.bf16.msra.mxu0 %v1287
        %2318 = vmatpush.bf16.msra.mxu0 %v1283
        %2319 = vmatpush.bf16.msra.mxu0 %v1279
        %2320 = vmatpush.bf16.msra.mxu0 %v1275
        %2321 = vmatpush.bf16.msra.mxu0 %v1271
        %2322 = vmatpush.bf16.msra.mxu0 %v1267
        %2323 = vmatpush.bf16.msra.mxu0 %v1263
        %2324 = vmatpush.bf16.msra.mxu0 %v1259
        %2325 = vmatmul.bf16.gmra.mxu0 %v2313
        %v2326 = vpop.f32.mrf.mxu0
        %v2327 = vadd.f32 %v1052, %v2326
        %v2328 = vpop.f32.mrf.mxu0
        %2329 = vdwg.mxu0
        %2330 = vmatpush.bf16.msra.mxu0 %v1319
        %2331 = vmatpush.bf16.msra.mxu0 %v1315
        %2332 = vmatpush.bf16.msra.mxu0 %v1311
        %2333 = vmatpush.bf16.msra.mxu0 %v1307
        %2334 = vmatpush.bf16.msra.mxu0 %v1303
        %2335 = vmatpush.bf16.msra.mxu0 %v1299
        %2336 = vmatpush.bf16.msra.mxu0 %v1295
        %2337 = vmatpush.bf16.msra.mxu0 %v1291
        %2338 = vmatmul.bf16.gmra.mxu0 %v2314
        %v2339 = vpop.f32.mrf.mxu0
        %v2340 = vadd.f32 %v2327, %v2339
        %v2341 = vpop.f32.mrf.mxu0
        %2342 = vdwg.mxu0
        %2343 = vmatpush.bf16.msra.mxu0 %v1288
        %2344 = vmatpush.bf16.msra.mxu0 %v1284
        %2345 = vmatpush.bf16.msra.mxu0 %v1280
        %2346 = vmatpush.bf16.msra.mxu0 %v1276
        %2347 = vmatpush.bf16.msra.mxu0 %v1272
        %2348 = vmatpush.bf16.msra.mxu0 %v1268
        %2349 = vmatpush.bf16.msra.mxu0 %v1264
        %2350 = vmatpush.bf16.msra.mxu0 %v1260
        %2351 = vmatmul.bf16.gmra.mxu0 %v2313
        %v2352 = vpop.f32.mrf.mxu0
        %v2353 = vadd.f32 %v1053, %v2352
        %v2354 = vpop.f32.mrf.mxu0
        %2355 = vdwg.mxu0
        %2356 = vmatpush.bf16.msra.mxu0 %v1320
        %2357 = vmatpush.bf16.msra.mxu0 %v1316
        %2358 = vmatpush.bf16.msra.mxu0 %v1312
        %2359 = vmatpush.bf16.msra.mxu0 %v1308
        %2360 = vmatpush.bf16.msra.mxu0 %v1304
        %2361 = vmatpush.bf16.msra.mxu0 %v1300
        %2362 = vmatpush.bf16.msra.mxu0 %v1296
        %2363 = vmatpush.bf16.msra.mxu0 %v1292
        %2364 = vmatmul.bf16.gmra.mxu0 %v2314
        %v2365 = vpop.f32.mrf.mxu0
        %v2366 = vadd.f32 %v2353, %v2365
        %v2367 = vpop.f32.mrf.mxu0
        %2368 = vdwg.mxu0
        %2369 = vmatpush.bf16.msra.mxu0 %v1289
        %2370 = vmatpush.bf16.msra.mxu0 %v1285
        %2371 = vmatpush.bf16.msra.mxu0 %v1281
        %2372 = vmatpush.bf16.msra.mxu0 %v1277
        %2373 = vmatpush.bf16.msra.mxu0 %v1273
        %2374 = vmatpush.bf16.msra.mxu0 %v1269
        %2375 = vmatpush.bf16.msra.mxu0 %v1265
        %2376 = vmatpush.bf16.msra.mxu0 %v1261
        %2377 = vmatmul.bf16.gmra.mxu0 %v2313
        %v2378 = vpop.f32.mrf.mxu0
        %v2379 = vadd.f32 %v1054, %v2378
        %v2380 = vpop.f32.mrf.mxu0
        %2381 = vdwg.mxu0
        %2382 = vmatpush.bf16.msra.mxu0 %v1321
        %2383 = vmatpush.bf16.msra.mxu0 %v1317
        %2384 = vmatpush.bf16.msra.mxu0 %v1313
        %2385 = vmatpush.bf16.msra.mxu0 %v1309
        %2386 = vmatpush.bf16.msra.mxu0 %v1305
        %2387 = vmatpush.bf16.msra.mxu0 %v1301
        %2388 = vmatpush.bf16.msra.mxu0 %v1297
        %2389 = vmatpush.bf16.msra.mxu0 %v1293
        %2390 = vmatmul.bf16.gmra.mxu0 %v2314
        %v2391 = vpop.f32.mrf.mxu0
        %v2392 = vadd.f32 %v2379, %v2391
        %v2393 = vpop.f32.mrf.mxu0
        %2394 = vdwg.mxu0
        %2395 = vmatpush.bf16.msra.mxu0 %v1290
        %2396 = vmatpush.bf16.msra.mxu0 %v1286
        %2397 = vmatpush.bf16.msra.mxu0 %v1282
        %2398 = vmatpush.bf16.msra.mxu0 %v1278
        %2399 = vmatpush.bf16.msra.mxu0 %v1274
        %2400 = vmatpush.bf16.msra.mxu0 %v1270
        %2401 = vmatpush.bf16.msra.mxu0 %v1266
        %2402 = vmatpush.bf16.msra.mxu0 %v1262
        %2403 = vmatmul.bf16.gmra.mxu0 %v2313
        %v2404 = vpop.f32.mrf.mxu0
        %v2405 = vadd.f32 %v1055, %v2404
        %v2406 = vpop.f32.mrf.mxu0
        %2407 = vdwg.mxu0
        %2408 = vmatpush.bf16.msra.mxu0 %v1322
        %2409 = vmatpush.bf16.msra.mxu0 %v1318
        %2410 = vmatpush.bf16.msra.mxu0 %v1314
        %2411 = vmatpush.bf16.msra.mxu0 %v1310
        %2412 = vmatpush.bf16.msra.mxu0 %v1306
        %2413 = vmatpush.bf16.msra.mxu0 %v1302
        %2414 = vmatpush.bf16.msra.mxu0 %v1298
        %2415 = vmatpush.bf16.msra.mxu0 %v1294
        %2416 = vmatmul.bf16.gmra.mxu0 %v2314
        %v2417 = vpop.f32.mrf.mxu0
        %v2418 = vadd.f32 %v2405, %v2417
        %v2419 = vpop.f32.mrf.mxu0
        %2420 = vdwg.mxu0
        %v2421 = vld [vmem:[#allocation4] sm:$0xff]
        %v2422 = vxor.u32 %v2340, 2147483648
        %v2423 = vmul.f32 %v2422, 1.442695
        %v2424 = vpow.pop %v2423
        %v2425 = vadd.f32 %v2424, 1.0
        %v2426 = vrcp.pop %v2425
        %v2427 = vmul.f32 %v2425, %v2426
        %v2428 = vsub.f32 1.0, %v2427
        %v2429 = vmul.f32 %v2426, %v2428
        %v2430 = vadd.f32 %v2426, %v2429
        %vm2431 = vweird.f32 %v2425
        %vm2432 = vweird.f32 %v2426
        %vm2433 = vmor %vm2431, %vm2432
        %v2434 = vsel %vm2433, %v2426, %v2430
        %v2435 = vand.u32 2147483647, %v2425
        %vm2436 = vcmp.eq.f32.partialorder %v2435, 8.507059e+37
        %v2437 = vand.u32 %v2425, 2147483648
        %v2438 = vor.u32 1.1754944e-38, %v2437
        %v2439 = vsel %vm2436, %v2438, %v2434
        %v2440 = vmul.f32 1.0, %v2439
        %v2441 = vxor.u32 %v2366, 2147483648
        %v2442 = vmul.f32 %v2441, 1.442695
        %v2443 = vpow.pop %v2442
        %v2444 = vadd.f32 %v2443, 1.0
        %v2445 = vrcp.pop %v2444
        %v2446 = vmul.f32 %v2444, %v2445
        %v2447 = vsub.f32 1.0, %v2446
        %v2448 = vmul.f32 %v2445, %v2447
        %v2449 = vadd.f32 %v2445, %v2448
        %vm2450 = vweird.f32 %v2444
        %vm2451 = vweird.f32 %v2445
        %vm2452 = vmor %vm2450, %vm2451
        %v2453 = vsel %vm2452, %v2445, %v2449
        %v2454 = vand.u32 2147483647, %v2444
        %vm2455 = vcmp.eq.f32.partialorder %v2454, 8.507059e+37
        %v2456 = vand.u32 %v2444, 2147483648
        %v2457 = vor.u32 1.1754944e-38, %v2456
        %v2458 = vsel %vm2455, %v2457, %v2453
        %v2459 = vmul.f32 1.0, %v2458
        %v2460 = vtanh.pop %v2392
        %v2461 = vxor.u32 %v2418, 2147483648
        %v2462 = vmul.f32 %v2461, 1.442695
        %v2463 = vpow.pop %v2462
        %v2464 = vadd.f32 %v2463, 1.0
        %v2465 = vrcp.pop %v2464
        %v2466 = vmul.f32 %v2464, %v2465
        %v2467 = vsub.f32 1.0, %v2466
        %v2468 = vmul.f32 %v2465, %v2467
        %v2469 = vadd.f32 %v2465, %v2468
        %vm2470 = vweird.f32 %v2464
        %vm2471 = vweird.f32 %v2465
        %vm2472 = vmor %vm2470, %vm2471
        %v2473 = vsel %vm2472, %v2465, %v2469
        %v2474 = vand.u32 2147483647, %v2464
        %vm2475 = vcmp.eq.f32.partialorder %v2474, 8.507059e+37
        %v2476 = vand.u32 %v2464, 2147483648
        %v2477 = vor.u32 1.1754944e-38, %v2476
        %v2478 = vsel %vm2475, %v2477, %v2473
        %v2479 = vmul.f32 1.0, %v2478
        %v2480 = vmul.f32 %v2459, %v2421
        %v2481 = vmul.f32 %v2440, %v2460
        %v2482 = vadd.f32 %v2480, %v2481
        %v2483 = vtanh.pop %v2482
        %v2484 = vmul.f32 %v2479, %v2483
        %2485 = vst [vmem:[#allocation4] sm:$0xff] %v2482
        %v2486 = vpack.c.bf16 %v2484, %v2484
        %2487 = vst [vmem:[#allocation2 + $0x4] sm:$0xf] %v2486
        %p2488 = scmp.eq.s32.totalorder %s22, 1
        // Predicated region
        $region69: #{tpu_custom_call.1} parent=51 // pred_check
          %p2489 = pneg %p2488
        $region70: #{tpu_custom_call.1} parent=51 // pred_check_branch
          %2491 = sbr.rel (%p2489) target = $region72
        $region71: #{tpu_custom_call.1} parent=51 // pred_region
          %v2492 = vld [vmem:[#allocation2 + $0x4] sm:$0xf]
          %v2493 = vld [vmem:[%s6] sm:$0xf]
          %v2494 = vld [vmem:[%s6 + $0x4] sm:$0xf]
          %v2495 = vld [vmem:[%s6 + $0x8] sm:$0xf]
          %v2496 = vld [vmem:[%s6 + $0xc] sm:$0xf]
          %v2497 = vld [vmem:[%s6 + $0x10] sm:$0xf]
          %v2498 = vld [vmem:[%s6 + $0x14] sm:$0xf]
          %v2499 = vld [vmem:[%s6 + $0x18] sm:$0xf]
          %v2500 = vld [vmem:[%s6 + $0x1c] sm:$0xf]
          %v2501 = vld [vmem:[%s6 + $0x20] sm:$0xf]
          %v2502 = vld [vmem:[%s6 + $0x24] sm:$0xf]
          %v2503 = vld [vmem:[%s6 + $0x28] sm:$0xf]
          %v2504 = vld [vmem:[%s6 + $0x2c] sm:$0xf]
          %v2505 = vld [vmem:[%s6 + $0x30] sm:$0xf]
          %v2506 = vld [vmem:[%s6 + $0x34] sm:$0xf]
          %v2507 = vld [vmem:[%s6 + $0x38] sm:$0xf]
          %v2508 = vld [vmem:[%s6 + $0x3c] sm:$0xf]
          %v2509 = vld [vmem:[%s7] sm:$0x1]
          %v2511 = vperm.slane %v2509, 0
          %v2529 = vunpack.c.l.b16 %v2493
          %v2530 = vunpack.c.l.b16 %v2494
          %v2531 = vunpack.c.l.b16 %v2495
          %v2532 = vunpack.c.l.b16 %v2496
          %v2533 = vunpack.c.l.b16 %v2497
          %v2534 = vunpack.c.l.b16 %v2498
          %v2535 = vunpack.c.l.b16 %v2499
          %v2536 = vunpack.c.l.b16 %v2500
          %v2537 = vunpack.c.l.b16 %v2501
          %v2538 = vunpack.c.l.b16 %v2502
          %v2539 = vunpack.c.l.b16 %v2503
          %v2540 = vunpack.c.l.b16 %v2504
          %v2541 = vunpack.c.l.b16 %v2505
          %v2542 = vunpack.c.l.b16 %v2506
          %v2543 = vunpack.c.l.b16 %v2507
          %v2544 = vunpack.c.l.b16 %v2508
          %v2545 = vpack.c.b16 %v2530, %v2529
          %v2546 = vpack.c.b16 %v2532, %v2531
          %v2547 = vpack.c.b16 %v2534, %v2533
          %v2548 = vpack.c.b16 %v2536, %v2535
          %v2549 = vpack.c.b16 %v2538, %v2537
          %v2550 = vpack.c.b16 %v2540, %v2539
          %v2551 = vpack.c.b16 %v2542, %v2541
          %v2552 = vpack.c.b16 %v2544, %v2543
          %2561 = vmatpush.bf16.msra.mxu0 %v2552
          %2562 = vmatpush.bf16.msra.mxu0 %v2551
          %2563 = vmatpush.bf16.msra.mxu0 %v2550
          %2564 = vmatpush.bf16.msra.mxu0 %v2549
          %2565 = vmatpush.bf16.msra.mxu0 %v2548
          %2566 = vmatpush.bf16.msra.mxu0 %v2547
          %2567 = vmatpush.bf16.msra.mxu0 %v2546
          %2568 = vmatpush.bf16.msra.mxu0 %v2545
          %2569 = vmatmul.bf16.gmra.mxu0 %v2492
          %v2570 = vpop.f32.mrf.mxu0
          %v2571 = vadd.f32 %v2511, %v2570
          %v2572 = vpop.f32.mrf.mxu0
          %2573 = vdwg.mxu0
          %vm2574 = vcmask 39936
          %2575 = vst.msk [vmem:[#allocation12] sm:$0xff] %vm2574, %v2571
        $region72: #{tpu_custom_call.1} parent=51 // pred_fallthru
          _
        // Predicated region
        $region73: #{tpu_custom_call.1} parent=51 // pred_check
          %p2576 = pneg %p208
        $region74: #{tpu_custom_call.1} parent=51 // pred_check_branch
          %2578 = sbr.rel (%p2576) target = $region76
        $region75: #{tpu_custom_call.1} parent=51 // pred_region
          %2580 = vsyncadd [#allocation8], 0
          %s2582 = sshll.u32 [#allocation12], 4
          %s2583 = int_to_ptr.vmem [resolvable:$true] %s2582
          %s2584 = sshll.u32 %s8, 4
          %s2585 = int_to_ptr.hbm [resolvable:$true] %s2584
          %2587 = dma.vmem_to_hbm [thread:$0]  %s2583, 128, %s2585, [#allocation8]
        $region76: #{tpu_custom_call.1} parent=51 // pred_fallthru
          _
        // Predicated region
        $region77: #{tpu_custom_call.1} parent=51 // pred_check
          %p2588 = pneg %p208
        $region78: #{tpu_custom_call.1} parent=51 // pred_check_branch
          %2590 = sbr.rel (%p2588) target = $region80
        $region79: #{tpu_custom_call.1} parent=51 // pred_region
          %2592 = dma.done [#allocation8], 128
        $region80: #{tpu_custom_call.1} parent=51 // pred_fallthru
          _
      $region52: #{tpu_custom_call.1} parent=5 // pred_fallthru
        _
      %p2593 = scmp.le.s32.totalorder 2, %s17
      // Predicated region
      $region81: #{tpu_custom_call.1} parent=5 // pred_check
        %p2594 = pneg %p2593
      $region82: #{tpu_custom_call.1} parent=5 // pred_check_branch
        %2596 = sbr.rel (%p2594) target = $region84
      $region83: #{tpu_custom_call.1} parent=5 // pred_region
        %s2597 = ssub.s32 %s17, 2
      $region84: #{tpu_custom_call.1} parent=5 // pred_fallthru
        _
    $region6: #{tpu_custom_call.1} parent=1 // loop_footer
      %s21 = sadd.s32 1, %s17
    $region7: #{tpu_custom_call.1} parent=1 // loop_footer_branch
      %16 = sbr.rel target = $region3
    $region8: #{tpu_custom_call.1} parent=1 // loop_exit
      _
    %2598 = vsyncpa [#allocation7], 1
    %s2599 = scalar_lea.sflag [#allocation7], 1
    %2600 = vsyncpa %s2599, 1
    %2601 = vsyncpa [#allocation10], 1
    %2602 = vsyncpa [#allocation8], 1
    %s2603 = scalar_lea.sflag [#allocation8], 1
    %2604 = vsyncpa %s2603, 1

</llo_original>
